<compile_context>
chip_gen: v7x
topology: tpu7x:2x2x1
jax: 0.10.0
libtpu: 0.0.40
codegen_flags: <defaults>
</compile_context>

<pallas_src>
import math
import numpy as np
import jax
import jax.numpy as jnp
from jax import lax
from jax.experimental import pallas as pl
from jax.experimental.pallas import tpu as pltpu


def _get_kernel_num(C, gamma=2, b=1):
    t = math.log2(C) / gamma + b / gamma
    floor = math.floor(t)
    return floor + (1 - floor % 2)


def _get_important_channel_num(C, lam=0.6):
    floor = math.floor(lam * C)
    return floor + floor % 2


def _lane_roll(v, shift, size):
    """out[..., i] = v[..., (i - shift) % size] (jnp.roll semantics along the
    last/lane axis).  Static-shift rotation via slice+concat, which lowers to
    cheap lane shifts (equivalent to the native pltpu.roll rotation)."""
    shift = shift % size
    if shift == 0:
        return v
    return jnp.concatenate([v[..., size - shift:], v[..., :size - shift]],
                           axis=-1)


def _build_weighted_tap_masks(wconv, H, W, KS=7):
    """Host-side prefold: for every 7x7 tap, the zero-padding validity mask on
    the flattened (H*W) map multiplied by that tap's conv weight.
    Returns (2*KS*KS, 1, H*W): rows [0,49) = avg channel, [49,98) = max."""
    P = KS // 2
    HW = H * W
    h = np.arange(H)[:, None]
    w = np.arange(W)[None, :]
    wconv = np.asarray(wconv).reshape(2, KS, KS)
    out = np.zeros((2 * KS * KS, 1, HW), np.float32)
    for dh in range(KS):
        for dw in range(KS):
            valid = ((h + dh - P >= 0) & (h + dh - P < H) &
                     (w + dw - P >= 0) & (w + dw - P < W))
            flat = valid.astype(np.float32).reshape(1, HW)
            t = dh * KS + dw
            out[t] = wconv[0, dh, dw] * flat
            out[KS * KS + t] = wconv[1, dh, dw] * flat
    return jnp.asarray(out)


def make_resblock_ham(B, C, H, W):
    k1d = _get_kernel_num(C)          # 1D conv kernel size over channels
    pad1d = k1d // 2
    C_im = _get_important_channel_num(C)
    C_sub = C - C_im
    # The PyTorch module divides by C_subim; guard the degenerate case.
    assert C_sub > 0, "C - C_im must be > 0 (module divides by C_subim)"
    KS = 7                            # spatial conv kernel size
    P = KS // 2
    HW = H * W

    # Batch blocking: at most 2 grid steps (one per TensorCore on v7x);
    # each step owns a lane-dense (Bblk, C, H*W) slab.
    n_blocks = 2 if (B % 2 == 0 and B >= 2) else 1
    Bblk = B // n_blocks

    def kernel(scal_ref, w1d_ref, wmask_ref, x_ref, o_ref):
        x = x_ref[...]                                    # (Bblk, C, HW) f32
        alpha = scal_ref[0]
        beta = scal_ref[1]
        b1d = scal_ref[2]
        bn_scale = scal_ref[3]
        bn_shift = scal_ref[4]

        # ---------------- Channel attention (C on lanes) ----------------
        f_avg = jnp.mean(x, axis=2)                       # (Bblk, C)
        f_max = jnp.max(x, axis=2)
        f_add = 0.5 * (f_avg + f_max) + alpha * f_avg + beta * f_max

        # 1D conv over the channel axis (kernel k1d, zero pad k1d//2, + bias)
        if pad1d > 0:
            zpad = jnp.zeros((Bblk, pad1d), jnp.float32)
            f_p = jnp.concatenate([zpad, f_add, zpad], axis=1)
        else:
            f_p = f_add
        conv1 = jnp.zeros((Bblk, C), jnp.float32) + b1d
        for j in range(k1d):
            conv1 = conv1 + w1d_ref[j] * f_p[:, j:j + C]
        att = jax.nn.sigmoid(conv1)                       # channel attention M

        crf = att[:, :, None] * x                         # channel refined

        # ---------- Top-C_im channel split (vectorized rank) ------------
        # rank[c] = #{j : M[j] > M[c] or (M[j] == M[c] and j < c)}
        idx_c = lax.broadcasted_iota(jnp.int32, (C, C), 0)   # ranked channel
        idx_j = lax.broadcasted_iota(jnp.int32, (C, C), 1)   # competitor
        a_c = att[:, :, None]                             # (Bblk, C, 1)
        a_j = att[:, None, :]                             # (Bblk, 1, C)
        beats = jnp.logical_or(a_j > a_c,
                               jnp.logical_and(a_j == a_c, idx_j < idx_c))
        rank = jnp.sum(beats.astype(jnp.int32), axis=2)   # (Bblk, C)
        mask_im = (rank < C_im).astype(jnp.float32)
        mask_sub = 1.0 - mask_im

        im_feat = mask_im[:, :, None] * crf               # (Bblk, C, HW)
        sub_feat = mask_sub[:, :, None] * crf

        im_avg = jnp.mean(im_feat, axis=1) * (C / C_im)   # (Bblk, HW)
        im_max = jnp.max(im_feat, axis=1)
        sub_avg = jnp.mean(sub_feat, axis=1) * (C / C_sub)
        sub_max = jnp.max(sub_feat, axis=1)

        # -------- Spatial attention: 7x7 conv as lane-roll + FMA --------
        # Rows: [im (Bblk) | sub (Bblk)]; both convs share weights so they
        # run batched on one (2*Bblk, HW) slab per pooled map.
        avg_slab = jnp.concatenate([im_avg, sub_avg], axis=0)
        max_slab = jnp.concatenate([im_max, sub_max], axis=0)

        acc = jnp.zeros((2 * Bblk, HW), jnp.float32)
        for dh in range(KS):
            for dw in range(KS):
                t = dh * KS + dw
                off = (dh - P) * W + (dw - P)
                sh = (-off) % HW                          # out[i] = in[i+off]
                acc = acc + (_lane_roll(avg_slab, sh, HW) * wmask_ref[t]
                             + _lane_roll(max_slab, sh, HW)
                             * wmask_ref[KS * KS + t])

        # eval-mode BatchNorm2d(1) folded -> ReLU -> Sigmoid
        a = jax.nn.sigmoid(jnp.maximum(acc * bn_scale + bn_shift, 0.0))
        a_im = a[:Bblk, None, :]                          # (Bblk, 1, HW)
        a_sub = a[Bblk:, None, :]

        refined = im_feat * a_im + sub_feat * a_sub       # (Bblk, C, HW)
        o_ref[...] = jnp.maximum(refined + x, 0.0)        # residual + ReLU

    smem_spec = pl.BlockSpec(memory_space=pltpu.MemorySpace.SMEM)
    wmask_spec = pl.BlockSpec((2 * KS * KS, 1, HW), lambda b: (0, 0, 0))
    x_spec = pl.BlockSpec((Bblk, C, HW), lambda b: (b, 0, 0))
    out_spec = pl.BlockSpec((Bblk, C, HW), lambda b: (b, 0, 0))

    call = pl.pallas_call(
        kernel,
        out_shape=jax.ShapeDtypeStruct((B, C, HW), jnp.float32),
        grid=(n_blocks,),
        in_specs=[smem_spec, smem_spec, wmask_spec, x_spec],
        out_specs=out_spec,
        compiler_params=pltpu.CompilerParams(
            dimension_semantics=("parallel",)),
    )

    def fwd(scal, w1d, wmask, x):
        y = call(scal, w1d, wmask, x.reshape(B, C, HW))
        return y.reshape(B, C, H, W)

    return jax.jit(fwd)


# ------------------------- pure-JAX reference -------------------------------
def resblock_ham_reference(x, params, k1d, C_im):
    alpha, beta = params["alpha"], params["beta"]
    w1d, b1d = params["w1d"], params["b1d"]
    wconv = params["wconv"]
    bn_w, bn_b = params["bn_w"], params["bn_b"]
    bn_mean, bn_var = params["bn_mean"], params["bn_var"]
    B, C, H, W = x.shape
    C_sub = C - C_im
    pad = k1d // 2

    f_avg = jnp.mean(x, axis=(2, 3), keepdims=True)
    f_max = jnp.max(x, axis=(2, 3), keepdims=True)
    f_add = 0.5 * (f_avg + f_max) + alpha * f_avg + beta * f_max
    v = f_add[:, :, 0, 0]                                       # (B, C)
    vp = jnp.pad(v, ((0, 0), (pad, pad)))
    conv1 = b1d + sum(w1d[j] * vp[:, j:j + C] for j in range(k1d))
    att = jax.nn.sigmoid(conv1)[:, :, None, None]               # (B,C,1,1)
    crf = att * x

    M = att[:, :, 0, 0]
    _, topk = lax.top_k(M, C_im)
    mask_im = jnp.zeros_like(M).at[jnp.arange(B)[:, None], topk].set(1.0)
    mask_sub = 1.0 - mask_im
    mask_im = mask_im[:, :, None, None]
    mask_sub = mask_sub[:, :, None, None]

    im_feat = mask_im * crf
    sub_feat = mask_sub * crf
    im_avg = jnp.mean(im_feat, axis=1, keepdims=True) * (C / C_im)
    im_max = jnp.max(im_feat, axis=1, keepdims=True)
    sub_avg = jnp.mean(sub_feat, axis=1, keepdims=True) * (C / C_sub)
    sub_max = jnp.max(sub_feat, axis=1, keepdims=True)
    im_x = jnp.concatenate([im_avg, im_max], axis=1)
    sub_x = jnp.concatenate([sub_avg, sub_max], axis=1)

    def conv2d(inp):
        return lax.conv_general_dilated(
            inp, wconv, window_strides=(1, 1), padding=((3, 3), (3, 3)),
            dimension_numbers=("NCHW", "OIHW", "NCHW"))

    def norm_act(z):
        z = (z - bn_mean) / jnp.sqrt(bn_var + 1e-5) * bn_w + bn_b
        return jax.nn.sigmoid(jax.nn.relu(z))

    a1 = norm_act(conv2d(im_x))
    a2 = norm_act(conv2d(sub_x))
    refined = im_feat * a1 + sub_feat * a2
    return jax.nn.relu(refined + x)


if __name__ == "__main__":
    B, C, H, W = 2, 8, 16, 16
    key = jax.random.PRNGKey(0)
    kx, kw1, kb1, kw2 = jax.random.split(key, 4)
    x = jax.random.normal(kx, (B, C, H, W), jnp.float32)

    k1d = _get_kernel_num(C)              # = 3 for C=8
    C_im = _get_important_channel_num(C)  # = 4 for C=8

    # Deterministic parameter init (PyTorch shapes): alpha/beta = 0.5,
    # Conv1d(1,1,k) weight+bias, Conv2d(2,1,7,7,no bias), BatchNorm2d(1) defaults.
    alpha = jnp.float32(0.5)
    beta = jnp.float32(0.5)
    bnd1 = 1.0 / math.sqrt(1 * k1d)
    w1d = jax.random.uniform(kw1, (k1d,), jnp.float32, -bnd1, bnd1)
    b1d = jax.random.uniform(kb1, (), jnp.float32, -bnd1, bnd1)
    bnd2 = 1.0 / math.sqrt(2 * 7 * 7)
    wconv = jax.random.uniform(kw2, (1, 2, 7, 7), jnp.float32, -bnd2, bnd2)
    bn_w, bn_b = jnp.float32(1.0), jnp.float32(0.0)
    bn_mean, bn_var = jnp.float32(0.0), jnp.float32(1.0)

    # fold eval-mode BN into scale/shift for the kernel
    bn_scale = bn_w / jnp.sqrt(bn_var + 1e-5)
    bn_shift = bn_b - bn_mean * bn_scale

    scal = jnp.stack([jnp.asarray(alpha), jnp.asarray(beta), b1d,
                      jnp.asarray(bn_scale), jnp.asarray(bn_shift)]
                     ).astype(jnp.float32)                      # (5,)  -> SMEM
    wmask = _build_weighted_tap_masks(np.asarray(wconv), H, W)  # (98,1,HW) -> VMEM

    fwd = make_resblock_ham(B, C, H, W)
    out = fwd(scal, w1d, wmask, x)
    out = jax.block_until_ready(out)

    params = dict(alpha=alpha, beta=beta, w1d=w1d, b1d=b1d, wconv=wconv,
                  bn_w=bn_w, bn_b=bn_b, bn_mean=bn_mean, bn_var=bn_var)
    ref = resblock_ham_reference(x, params, k1d, C_im)
    assert out.shape == (B, C, H, W)
    np.testing.assert_allclose(np.asarray(out), np.asarray(ref),
                               rtol=1e-4, atol=1e-4)
    print("KERNEL_OK")
</pallas_src>

<mosaic_0001>
module attributes {stable_mosaic.version = 11 : i64} {
  func.func @kernel(%arg0: i32, %arg1: memref<5xf32, #tpu.memory_space<smem>>, %arg2: memref<3xf32, #tpu.memory_space<smem>>, %arg3: memref<98x1x256xf32, #tpu.memory_space<vmem>>, %arg4: memref<1x8x256xf32, #tpu.memory_space<vmem>>, %arg5: memref<1x8x256xf32, #tpu.memory_space<vmem>>) attributes {dimension_semantics = [#tpu.dimension_semantics<parallel>], iteration_bounds = array<i64: 2>, scalar_prefetch = 0 : i64, scratch_operands = 0 : i64, tpu.core_type = #tpu.core_type<tc>, window_params = [{transform_indices = @transform_0, window_bounds = array<i64: 5>}, {transform_indices = @transform_1, window_bounds = array<i64: 3>}, {pipeline_mode = #tpu.pipeline_mode<synchronous>, transform_indices = @transform_2, window_bounds = array<i64: 98, 1, 256>}, {transform_indices = @transform_3, window_bounds = array<i64: 1, 8, 256>}, {transform_indices = @transform_4, window_bounds = array<i64: 1, 8, 256>}]} {
    %c0 = arith.constant 0 : index
    %c0_0 = arith.constant 0 : index
    %c0_1 = arith.constant 0 : index
    %0 = vector.load %arg4[%c0, %c0_0, %c0_1] : memref<1x8x256xf32, #tpu.memory_space<vmem>>, vector<1x8x256xf32>
    %c0_2 = arith.constant 0 : index
    %1 = memref.load %arg1[%c0_2] : memref<5xf32, #tpu.memory_space<smem>>
    %c1 = arith.constant 1 : index
    %2 = memref.load %arg1[%c1] : memref<5xf32, #tpu.memory_space<smem>>
    %c2 = arith.constant 2 : index
    %3 = memref.load %arg1[%c2] : memref<5xf32, #tpu.memory_space<smem>>
    %c3 = arith.constant 3 : index
    %4 = memref.load %arg1[%c3] : memref<5xf32, #tpu.memory_space<smem>>
    %c4 = arith.constant 4 : index
    %5 = memref.load %arg1[%c4] : memref<5xf32, #tpu.memory_space<smem>>
    %cst = arith.constant dense<0.000000e+00> : vector<1x8xf32>
    %6 = vector.multi_reduction <add>, %0, %cst [2] : vector<1x8x256xf32> to vector<1x8xf32>
    %cst_3 = arith.constant 2.560000e+02 : f32
    %7 = vector.broadcast %cst_3 : f32 to vector<1x8xf32>
    %8 = arith.divf %6, %7 : vector<1x8xf32>
    %cst_4 = arith.constant dense<0xFF800000> : vector<1x8xf32>
    %9 = vector.multi_reduction <maximumf>, %0, %cst_4 [2] : vector<1x8x256xf32> to vector<1x8xf32>
    %10 = arith.addf %8, %9 : vector<1x8xf32>
    %cst_5 = arith.constant 5.000000e-01 : f32
    %11 = vector.broadcast %cst_5 : f32 to vector<1x8xf32>
    %12 = arith.mulf %11, %10 : vector<1x8xf32>
    %13 = vector.broadcast %1 : f32 to vector<1x8xf32>
    %14 = arith.mulf %13, %8 : vector<1x8xf32>
    %15 = arith.addf %12, %14 : vector<1x8xf32>
    %16 = vector.broadcast %2 : f32 to vector<1x8xf32>
    %17 = arith.mulf %16, %9 : vector<1x8xf32>
    %18 = arith.addf %15, %17 : vector<1x8xf32>
    %cst_6 = arith.constant 0.000000e+00 : f32
    %19 = vector.broadcast %cst_6 : f32 to vector<1x1xf32>
    %20 = tpu.concatenate %19, %18, %19 in 1 : vector<1x1xf32>, vector<1x8xf32>, vector<1x1xf32> -> vector<1x10xf32>
    %cst_7 = arith.constant 0.000000e+00 : f32
    %21 = vector.broadcast %cst_7 : f32 to vector<1x8xf32>
    %22 = vector.broadcast %3 : f32 to vector<1x8xf32>
    %23 = arith.addf %21, %22 : vector<1x8xf32>
    %c0_8 = arith.constant 0 : index
    %24 = memref.load %arg2[%c0_8] : memref<3xf32, #tpu.memory_space<smem>>
    %25 = vector.extract_strided_slice %20 {offsets = [0, 0], sizes = [1, 8], strides = [1, 1]} : vector<1x10xf32> to vector<1x8xf32>
    %26 = vector.broadcast %24 : f32 to vector<1x8xf32>
    %27 = arith.mulf %26, %25 : vector<1x8xf32>
    %28 = arith.addf %23, %27 : vector<1x8xf32>
    %c1_9 = arith.constant 1 : index
    %29 = memref.load %arg2[%c1_9] : memref<3xf32, #tpu.memory_space<smem>>
    %30 = vector.extract_strided_slice %20 {offsets = [0, 1], sizes = [1, 8], strides = [1, 1]} : vector<1x10xf32> to vector<1x8xf32>
    %31 = vector.broadcast %29 : f32 to vector<1x8xf32>
    %32 = arith.mulf %31, %30 : vector<1x8xf32>
    %33 = arith.addf %28, %32 : vector<1x8xf32>
    %c2_10 = arith.constant 2 : index
    %34 = memref.load %arg2[%c2_10] : memref<3xf32, #tpu.memory_space<smem>>
    %35 = vector.extract_strided_slice %20 {offsets = [0, 2], sizes = [1, 8], strides = [1, 1]} : vector<1x10xf32> to vector<1x8xf32>
    %36 = vector.broadcast %34 : f32 to vector<1x8xf32>
    %37 = arith.mulf %36, %35 : vector<1x8xf32>
    %38 = arith.addf %33, %37 : vector<1x8xf32>
    %39 = arith.negf %38 : vector<1x8xf32>
    %40 = math.exp %39 : vector<1x8xf32>
    %cst_11 = arith.constant 1.000000e+00 : f32
    %41 = vector.broadcast %cst_11 : f32 to vector<1x8xf32>
    %42 = arith.addf %41, %40 : vector<1x8xf32>
    %43 = arith.divf %41, %42 : vector<1x8xf32>
    %44 = vector.shape_cast %43 : vector<1x8xf32> to vector<1x8x1xf32>
    %45 = vector.broadcast %44 : vector<1x8x1xf32> to vector<1x8x256xf32>
    %46 = arith.mulf %45, %0 : vector<1x8x256xf32>
    %47 = tpu.iota {dimensions = array<i32: 0>} : vector<8x8xi32>
    %48 = tpu.iota {dimensions = array<i32: 1>} : vector<8x8xi32>
    %49 = vector.shape_cast %43 : vector<1x8xf32> to vector<1x8x1xf32>
    %50 = vector.shape_cast %43 : vector<1x8xf32> to vector<1x1x8xf32>
    %51 = vector.broadcast %50 : vector<1x1x8xf32> to vector<1x8x8xf32>
    %52 = vector.broadcast %49 : vector<1x8x1xf32> to vector<1x8x8xf32>
    %53 = arith.cmpf ogt, %51, %52 : vector<1x8x8xf32>
    %54 = vector.broadcast %50 : vector<1x1x8xf32> to vector<1x8x8xf32>
    %55 = vector.broadcast %49 : vector<1x8x1xf32> to vector<1x8x8xf32>
    %56 = arith.cmpf oeq, %54, %55 : vector<1x8x8xf32>
    %57 = arith.cmpi slt, %48, %47 : vector<8x8xi32>
    %58 = vector.shape_cast %57 : vector<8x8xi1> to vector<1x8x8xi1>
    %59 = arith.andi %56, %58 : vector<1x8x8xi1>
    %60 = arith.ori %53, %59 : vector<1x8x8xi1>
    %61 = arith.extui %60 : vector<1x8x8xi1> to vector<1x8x8xi32>
    %cst_12 = arith.constant dense<0> : vector<1x8xi32>
    %62 = vector.multi_reduction <add>, %61, %cst_12 [2] : vector<1x8x8xi32> to vector<1x8xi32>
    %c4_i32 = arith.constant 4 : i32
    %63 = vector.broadcast %c4_i32 : i32 to vector<1x8xi32>
    %64 = arith.cmpi slt, %62, %63 : vector<1x8xi32>
    %65 = arith.extui %64 : vector<1x8xi1> to vector<1x8xi32>
    %66 = arith.sitofp %65 : vector<1x8xi32> to vector<1x8xf32>
    %cst_13 = arith.constant 1.000000e+00 : f32
    %67 = vector.broadcast %cst_13 : f32 to vector<1x8xf32>
    %68 = arith.subf %67, %66 : vector<1x8xf32>
    %69 = vector.shape_cast %66 : vector<1x8xf32> to vector<1x8x1xf32>
    %70 = vector.broadcast %69 : vector<1x8x1xf32> to vector<1x8x256xf32>
    %71 = arith.mulf %70, %46 : vector<1x8x256xf32>
    %72 = vector.shape_cast %68 : vector<1x8xf32> to vector<1x8x1xf32>
    %73 = vector.broadcast %72 : vector<1x8x1xf32> to vector<1x8x256xf32>
    %74 = arith.mulf %73, %46 : vector<1x8x256xf32>
    %cst_14 = arith.constant dense<0.000000e+00> : vector<1x256xf32>
    %75 = vector.multi_reduction <add>, %71, %cst_14 [1] : vector<1x8x256xf32> to vector<1x256xf32>
    %cst_15 = arith.constant 8.000000e+00 : f32
    %76 = vector.broadcast %cst_15 : f32 to vector<1x256xf32>
    %77 = arith.divf %75, %76 : vector<1x256xf32>
    %cst_16 = arith.constant 2.000000e+00 : f32
    %78 = vector.broadcast %cst_16 : f32 to vector<1x256xf32>
    %79 = arith.mulf %77, %78 : vector<1x256xf32>
    %cst_17 = arith.constant dense<0xFF800000> : vector<1x256xf32>
    %80 = vector.multi_reduction <maximumf>, %71, %cst_17 [1] : vector<1x8x256xf32> to vector<1x256xf32>
    %cst_18 = arith.constant dense<0.000000e+00> : vector<1x256xf32>
    %81 = vector.multi_reduction <add>, %74, %cst_18 [1] : vector<1x8x256xf32> to vector<1x256xf32>
    %cst_19 = arith.constant 8.000000e+00 : f32
    %82 = vector.broadcast %cst_19 : f32 to vector<1x256xf32>
    %83 = arith.divf %81, %82 : vector<1x256xf32>
    %cst_20 = arith.constant 2.000000e+00 : f32
    %84 = vector.broadcast %cst_20 : f32 to vector<1x256xf32>
    %85 = arith.mulf %83, %84 : vector<1x256xf32>
    %cst_21 = arith.constant dense<0xFF800000> : vector<1x256xf32>
    %86 = vector.multi_reduction <maximumf>, %74, %cst_21 [1] : vector<1x8x256xf32> to vector<1x256xf32>
    %87 = tpu.concatenate %79, %85 in 0 : vector<1x256xf32>, vector<1x256xf32> -> vector<2x256xf32>
    %88 = tpu.concatenate %80, %86 in 0 : vector<1x256xf32>, vector<1x256xf32> -> vector<2x256xf32>
    %cst_22 = arith.constant 0.000000e+00 : f32
    %89 = vector.broadcast %cst_22 : f32 to vector<2x256xf32>
    %90 = vector.extract_strided_slice %87 {offsets = [0, 205], sizes = [2, 51], strides = [1, 1]} : vector<2x256xf32> to vector<2x51xf32>
    %91 = vector.extract_strided_slice %87 {offsets = [0, 0], sizes = [2, 205], strides = [1, 1]} : vector<2x256xf32> to vector<2x205xf32>
    %92 = tpu.concatenate %90, %91 in 1 : vector<2x51xf32>, vector<2x205xf32> -> vector<2x256xf32>
    %c0_23 = arith.constant 0 : index
    %c0_24 = arith.constant 0 : index
    %c0_25 = arith.constant 0 : index
    %93 = vector.load %arg3[%c0_23, %c0_24, %c0_25] : memref<98x1x256xf32, #tpu.memory_space<vmem>>, vector<1x1x256xf32>
    %94 = vector.shape_cast %93 : vector<1x1x256xf32> to vector<1x256xf32>
    %95 = vector.broadcast %94 : vector<1x256xf32> to vector<2x256xf32>
    %96 = arith.mulf %92, %95 : vector<2x256xf32>
    %97 = vector.extract_strided_slice %88 {offsets = [0, 205], sizes = [2, 51], strides = [1, 1]} : vector<2x256xf32> to vector<2x51xf32>
    %98 = vector.extract_strided_slice %88 {offsets = [0, 0], sizes = [2, 205], strides = [1, 1]} : vector<2x256xf32> to vector<2x205xf32>
    %99 = tpu.concatenate %97, %98 in 1 : vector<2x51xf32>, vector<2x205xf32> -> vector<2x256xf32>
    %c49 = arith.constant 49 : index
    %c0_26 = arith.constant 0 : index
    %c0_27 = arith.constant 0 : index
    %100 = vector.load %arg3[%c49, %c0_26, %c0_27] : memref<98x1x256xf32, #tpu.memory_space<vmem>>, vector<1x1x256xf32>
    %101 = vector.shape_cast %100 : vector<1x1x256xf32> to vector<1x256xf32>
    %102 = vector.broadcast %101 : vector<1x256xf32> to vector<2x256xf32>
    %103 = arith.mulf %99, %102 : vector<2x256xf32>
    %104 = arith.addf %96, %103 : vector<2x256xf32>
    %105 = arith.addf %89, %104 : vector<2x256xf32>
    %106 = vector.extract_strided_slice %87 {offsets = [0, 206], sizes = [2, 50], strides = [1, 1]} : vector<2x256xf32> to vector<2x50xf32>
    %107 = vector.extract_strided_slice %87 {offsets = [0, 0], sizes = [2, 206], strides = [1, 1]} : vector<2x256xf32> to vector<2x206xf32>
    %108 = tpu.concatenate %106, %107 in 1 : vector<2x50xf32>, vector<2x206xf32> -> vector<2x256xf32>
    %c1_28 = arith.constant 1 : index
    %c0_29 = arith.constant 0 : index
    %c0_30 = arith.constant 0 : index
    %109 = vector.load %arg3[%c1_28, %c0_29, %c0_30] : memref<98x1x256xf32, #tpu.memory_space<vmem>>, vector<1x1x256xf32>
    %110 = vector.shape_cast %109 : vector<1x1x256xf32> to vector<1x256xf32>
    %111 = vector.broadcast %110 : vector<1x256xf32> to vector<2x256xf32>
    %112 = arith.mulf %108, %111 : vector<2x256xf32>
    %113 = vector.extract_strided_slice %88 {offsets = [0, 206], sizes = [2, 50], strides = [1, 1]} : vector<2x256xf32> to vector<2x50xf32>
    %114 = vector.extract_strided_slice %88 {offsets = [0, 0], sizes = [2, 206], strides = [1, 1]} : vector<2x256xf32> to vector<2x206xf32>
    %115 = tpu.concatenate %113, %114 in 1 : vector<2x50xf32>, vector<2x206xf32> -> vector<2x256xf32>
    %c50 = arith.constant 50 : index
    %c0_31 = arith.constant 0 : index
    %c0_32 = arith.constant 0 : index
    %116 = vector.load %arg3[%c50, %c0_31, %c0_32] : memref<98x1x256xf32, #tpu.memory_space<vmem>>, vector<1x1x256xf32>
    %117 = vector.shape_cast %116 : vector<1x1x256xf32> to vector<1x256xf32>
    %118 = vector.broadcast %117 : vector<1x256xf32> to vector<2x256xf32>
    %119 = arith.mulf %115, %118 : vector<2x256xf32>
    %120 = arith.addf %112, %119 : vector<2x256xf32>
    %121 = arith.addf %105, %120 : vector<2x256xf32>
    %122 = vector.extract_strided_slice %87 {offsets = [0, 207], sizes = [2, 49], strides = [1, 1]} : vector<2x256xf32> to vector<2x49xf32>
    %123 = vector.extract_strided_slice %87 {offsets = [0, 0], sizes = [2, 207], strides = [1, 1]} : vector<2x256xf32> to vector<2x207xf32>
    %124 = tpu.concatenate %122, %123 in 1 : vector<2x49xf32>, vector<2x207xf32> -> vector<2x256xf32>
    %c2_33 = arith.constant 2 : index
    %c0_34 = arith.constant 0 : index
    %c0_35 = arith.constant 0 : index
    %125 = vector.load %arg3[%c2_33, %c0_34, %c0_35] : memref<98x1x256xf32, #tpu.memory_space<vmem>>, vector<1x1x256xf32>
    %126 = vector.shape_cast %125 : vector<1x1x256xf32> to vector<1x256xf32>
    %127 = vector.broadcast %126 : vector<1x256xf32> to vector<2x256xf32>
    %128 = arith.mulf %124, %127 : vector<2x256xf32>
    %129 = vector.extract_strided_slice %88 {offsets = [0, 207], sizes = [2, 49], strides = [1, 1]} : vector<2x256xf32> to vector<2x49xf32>
    %130 = vector.extract_strided_slice %88 {offsets = [0, 0], sizes = [2, 207], strides = [1, 1]} : vector<2x256xf32> to vector<2x207xf32>
    %131 = tpu.concatenate %129, %130 in 1 : vector<2x49xf32>, vector<2x207xf32> -> vector<2x256xf32>
    %c51 = arith.constant 51 : index
    %c0_36 = arith.constant 0 : index
    %c0_37 = arith.constant 0 : index
    %132 = vector.load %arg3[%c51, %c0_36, %c0_37] : memref<98x1x256xf32, #tpu.memory_space<vmem>>, vector<1x1x256xf32>
    %133 = vector.shape_cast %132 : vector<1x1x256xf32> to vector<1x256xf32>
    %134 = vector.broadcast %133 : vector<1x256xf32> to vector<2x256xf32>
    %135 = arith.mulf %131, %134 : vector<2x256xf32>
    %136 = arith.addf %128, %135 : vector<2x256xf32>
    %137 = arith.addf %121, %136 : vector<2x256xf32>
    %138 = vector.extract_strided_slice %87 {offsets = [0, 208], sizes = [2, 48], strides = [1, 1]} : vector<2x256xf32> to vector<2x48xf32>
    %139 = vector.extract_strided_slice %87 {offsets = [0, 0], sizes = [2, 208], strides = [1, 1]} : vector<2x256xf32> to vector<2x208xf32>
    %140 = tpu.concatenate %138, %139 in 1 : vector<2x48xf32>, vector<2x208xf32> -> vector<2x256xf32>
    %c3_38 = arith.constant 3 : index
    %c0_39 = arith.constant 0 : index
    %c0_40 = arith.constant 0 : index
    %141 = vector.load %arg3[%c3_38, %c0_39, %c0_40] : memref<98x1x256xf32, #tpu.memory_space<vmem>>, vector<1x1x256xf32>
    %142 = vector.shape_cast %141 : vector<1x1x256xf32> to vector<1x256xf32>
    %143 = vector.broadcast %142 : vector<1x256xf32> to vector<2x256xf32>
    %144 = arith.mulf %140, %143 : vector<2x256xf32>
    %145 = vector.extract_strided_slice %88 {offsets = [0, 208], sizes = [2, 48], strides = [1, 1]} : vector<2x256xf32> to vector<2x48xf32>
    %146 = vector.extract_strided_slice %88 {offsets = [0, 0], sizes = [2, 208], strides = [1, 1]} : vector<2x256xf32> to vector<2x208xf32>
    %147 = tpu.concatenate %145, %146 in 1 : vector<2x48xf32>, vector<2x208xf32> -> vector<2x256xf32>
    %c52 = arith.constant 52 : index
    %c0_41 = arith.constant 0 : index
    %c0_42 = arith.constant 0 : index
    %148 = vector.load %arg3[%c52, %c0_41, %c0_42] : memref<98x1x256xf32, #tpu.memory_space<vmem>>, vector<1x1x256xf32>
    %149 = vector.shape_cast %148 : vector<1x1x256xf32> to vector<1x256xf32>
    %150 = vector.broadcast %149 : vector<1x256xf32> to vector<2x256xf32>
    %151 = arith.mulf %147, %150 : vector<2x256xf32>
    %152 = arith.addf %144, %151 : vector<2x256xf32>
    %153 = arith.addf %137, %152 : vector<2x256xf32>
    %154 = vector.extract_strided_slice %87 {offsets = [0, 209], sizes = [2, 47], strides = [1, 1]} : vector<2x256xf32> to vector<2x47xf32>
    %155 = vector.extract_strided_slice %87 {offsets = [0, 0], sizes = [2, 209], strides = [1, 1]} : vector<2x256xf32> to vector<2x209xf32>
    %156 = tpu.concatenate %154, %155 in 1 : vector<2x47xf32>, vector<2x209xf32> -> vector<2x256xf32>
    %c4_43 = arith.constant 4 : index
    %c0_44 = arith.constant 0 : index
    %c0_45 = arith.constant 0 : index
    %157 = vector.load %arg3[%c4_43, %c0_44, %c0_45] : memref<98x1x256xf32, #tpu.memory_space<vmem>>, vector<1x1x256xf32>
    %158 = vector.shape_cast %157 : vector<1x1x256xf32> to vector<1x256xf32>
    %159 = vector.broadcast %158 : vector<1x256xf32> to vector<2x256xf32>
    %160 = arith.mulf %156, %159 : vector<2x256xf32>
    %161 = vector.extract_strided_slice %88 {offsets = [0, 209], sizes = [2, 47], strides = [1, 1]} : vector<2x256xf32> to vector<2x47xf32>
    %162 = vector.extract_strided_slice %88 {offsets = [0, 0], sizes = [2, 209], strides = [1, 1]} : vector<2x256xf32> to vector<2x209xf32>
    %163 = tpu.concatenate %161, %162 in 1 : vector<2x47xf32>, vector<2x209xf32> -> vector<2x256xf32>
    %c53 = arith.constant 53 : index
    %c0_46 = arith.constant 0 : index
    %c0_47 = arith.constant 0 : index
    %164 = vector.load %arg3[%c53, %c0_46, %c0_47] : memref<98x1x256xf32, #tpu.memory_space<vmem>>, vector<1x1x256xf32>
    %165 = vector.shape_cast %164 : vector<1x1x256xf32> to vector<1x256xf32>
    %166 = vector.broadcast %165 : vector<1x256xf32> to vector<2x256xf32>
    %167 = arith.mulf %163, %166 : vector<2x256xf32>
    %168 = arith.addf %160, %167 : vector<2x256xf32>
    %169 = arith.addf %153, %168 : vector<2x256xf32>
    %170 = vector.extract_strided_slice %87 {offsets = [0, 210], sizes = [2, 46], strides = [1, 1]} : vector<2x256xf32> to vector<2x46xf32>
    %171 = vector.extract_strided_slice %87 {offsets = [0, 0], sizes = [2, 210], strides = [1, 1]} : vector<2x256xf32> to vector<2x210xf32>
    %172 = tpu.concatenate %170, %171 in 1 : vector<2x46xf32>, vector<2x210xf32> -> vector<2x256xf32>
    %c5 = arith.constant 5 : index
    %c0_48 = arith.constant 0 : index
    %c0_49 = arith.constant 0 : index
    %173 = vector.load %arg3[%c5, %c0_48, %c0_49] : memref<98x1x256xf32, #tpu.memory_space<vmem>>, vector<1x1x256xf32>
    %174 = vector.shape_cast %173 : vector<1x1x256xf32> to vector<1x256xf32>
    %175 = vector.broadcast %174 : vector<1x256xf32> to vector<2x256xf32>
    %176 = arith.mulf %172, %175 : vector<2x256xf32>
    %177 = vector.extract_strided_slice %88 {offsets = [0, 210], sizes = [2, 46], strides = [1, 1]} : vector<2x256xf32> to vector<2x46xf32>
    %178 = vector.extract_strided_slice %88 {offsets = [0, 0], sizes = [2, 210], strides = [1, 1]} : vector<2x256xf32> to vector<2x210xf32>
    %179 = tpu.concatenate %177, %178 in 1 : vector<2x46xf32>, vector<2x210xf32> -> vector<2x256xf32>
    %c54 = arith.constant 54 : index
    %c0_50 = arith.constant 0 : index
    %c0_51 = arith.constant 0 : index
    %180 = vector.load %arg3[%c54, %c0_50, %c0_51] : memref<98x1x256xf32, #tpu.memory_space<vmem>>, vector<1x1x256xf32>
    %181 = vector.shape_cast %180 : vector<1x1x256xf32> to vector<1x256xf32>
    %182 = vector.broadcast %181 : vector<1x256xf32> to vector<2x256xf32>
    %183 = arith.mulf %179, %182 : vector<2x256xf32>
    %184 = arith.addf %176, %183 : vector<2x256xf32>
    %185 = arith.addf %169, %184 : vector<2x256xf32>
    %186 = vector.extract_strided_slice %87 {offsets = [0, 211], sizes = [2, 45], strides = [1, 1]} : vector<2x256xf32> to vector<2x45xf32>
    %187 = vector.extract_strided_slice %87 {offsets = [0, 0], sizes = [2, 211], strides = [1, 1]} : vector<2x256xf32> to vector<2x211xf32>
    %188 = tpu.concatenate %186, %187 in 1 : vector<2x45xf32>, vector<2x211xf32> -> vector<2x256xf32>
    %c6 = arith.constant 6 : index
    %c0_52 = arith.constant 0 : index
    %c0_53 = arith.constant 0 : index
    %189 = vector.load %arg3[%c6, %c0_52, %c0_53] : memref<98x1x256xf32, #tpu.memory_space<vmem>>, vector<1x1x256xf32>
    %190 = vector.shape_cast %189 : vector<1x1x256xf32> to vector<1x256xf32>
    %191 = vector.broadcast %190 : vector<1x256xf32> to vector<2x256xf32>
    %192 = arith.mulf %188, %191 : vector<2x256xf32>
    %193 = vector.extract_strided_slice %88 {offsets = [0, 211], sizes = [2, 45], strides = [1, 1]} : vector<2x256xf32> to vector<2x45xf32>
    %194 = vector.extract_strided_slice %88 {offsets = [0, 0], sizes = [2, 211], strides = [1, 1]} : vector<2x256xf32> to vector<2x211xf32>
    %195 = tpu.concatenate %193, %194 in 1 : vector<2x45xf32>, vector<2x211xf32> -> vector<2x256xf32>
    %c55 = arith.constant 55 : index
    %c0_54 = arith.constant 0 : index
    %c0_55 = arith.constant 0 : index
    %196 = vector.load %arg3[%c55, %c0_54, %c0_55] : memref<98x1x256xf32, #tpu.memory_space<vmem>>, vector<1x1x256xf32>
    %197 = vector.shape_cast %196 : vector<1x1x256xf32> to vector<1x256xf32>
    %198 = vector.broadcast %197 : vector<1x256xf32> to vector<2x256xf32>
    %199 = arith.mulf %195, %198 : vector<2x256xf32>
    %200 = arith.addf %192, %199 : vector<2x256xf32>
    %201 = arith.addf %185, %200 : vector<2x256xf32>
    %202 = vector.extract_strided_slice %87 {offsets = [0, 221], sizes = [2, 35], strides = [1, 1]} : vector<2x256xf32> to vector<2x35xf32>
    %203 = vector.extract_strided_slice %87 {offsets = [0, 0], sizes = [2, 221], strides = [1, 1]} : vector<2x256xf32> to vector<2x221xf32>
    %204 = tpu.concatenate %202, %203 in 1 : vector<2x35xf32>, vector<2x221xf32> -> vector<2x256xf32>
    %c7 = arith.constant 7 : index
    %c0_56 = arith.constant 0 : index
    %c0_57 = arith.constant 0 : index
    %205 = vector.load %arg3[%c7, %c0_56, %c0_57] : memref<98x1x256xf32, #tpu.memory_space<vmem>>, vector<1x1x256xf32>
    %206 = vector.shape_cast %205 : vector<1x1x256xf32> to vector<1x256xf32>
    %207 = vector.broadcast %206 : vector<1x256xf32> to vector<2x256xf32>
    %208 = arith.mulf %204, %207 : vector<2x256xf32>
    %209 = vector.extract_strided_slice %88 {offsets = [0, 221], sizes = [2, 35], strides = [1, 1]} : vector<2x256xf32> to vector<2x35xf32>
    %210 = vector.extract_strided_slice %88 {offsets = [0, 0], sizes = [2, 221], strides = [1, 1]} : vector<2x256xf32> to vector<2x221xf32>
    %211 = tpu.concatenate %209, %210 in 1 : vector<2x35xf32>, vector<2x221xf32> -> vector<2x256xf32>
    %c56 = arith.constant 56 : index
    %c0_58 = arith.constant 0 : index
    %c0_59 = arith.constant 0 : index
    %212 = vector.load %arg3[%c56, %c0_58, %c0_59] : memref<98x1x256xf32, #tpu.memory_space<vmem>>, vector<1x1x256xf32>
    %213 = vector.shape_cast %212 : vector<1x1x256xf32> to vector<1x256xf32>
    %214 = vector.broadcast %213 : vector<1x256xf32> to vector<2x256xf32>
    %215 = arith.mulf %211, %214 : vector<2x256xf32>
    %216 = arith.addf %208, %215 : vector<2x256xf32>
    %217 = arith.addf %201, %216 : vector<2x256xf32>
    %218 = vector.extract_strided_slice %87 {offsets = [0, 222], sizes = [2, 34], strides = [1, 1]} : vector<2x256xf32> to vector<2x34xf32>
    %219 = vector.extract_strided_slice %87 {offsets = [0, 0], sizes = [2, 222], strides = [1, 1]} : vector<2x256xf32> to vector<2x222xf32>
    %220 = tpu.concatenate %218, %219 in 1 : vector<2x34xf32>, vector<2x222xf32> -> vector<2x256xf32>
    %c8 = arith.constant 8 : index
    %c0_60 = arith.constant 0 : index
    %c0_61 = arith.constant 0 : index
    %221 = vector.load %arg3[%c8, %c0_60, %c0_61] : memref<98x1x256xf32, #tpu.memory_space<vmem>>, vector<1x1x256xf32>
    %222 = vector.shape_cast %221 : vector<1x1x256xf32> to vector<1x256xf32>
    %223 = vector.broadcast %222 : vector<1x256xf32> to vector<2x256xf32>
    %224 = arith.mulf %220, %223 : vector<2x256xf32>
    %225 = vector.extract_strided_slice %88 {offsets = [0, 222], sizes = [2, 34], strides = [1, 1]} : vector<2x256xf32> to vector<2x34xf32>
    %226 = vector.extract_strided_slice %88 {offsets = [0, 0], sizes = [2, 222], strides = [1, 1]} : vector<2x256xf32> to vector<2x222xf32>
    %227 = tpu.concatenate %225, %226 in 1 : vector<2x34xf32>, vector<2x222xf32> -> vector<2x256xf32>
    %c57 = arith.constant 57 : index
    %c0_62 = arith.constant 0 : index
    %c0_63 = arith.constant 0 : index
    %228 = vector.load %arg3[%c57, %c0_62, %c0_63] : memref<98x1x256xf32, #tpu.memory_space<vmem>>, vector<1x1x256xf32>
    %229 = vector.shape_cast %228 : vector<1x1x256xf32> to vector<1x256xf32>
    %230 = vector.broadcast %229 : vector<1x256xf32> to vector<2x256xf32>
    %231 = arith.mulf %227, %230 : vector<2x256xf32>
    %232 = arith.addf %224, %231 : vector<2x256xf32>
    %233 = arith.addf %217, %232 : vector<2x256xf32>
    %234 = vector.extract_strided_slice %87 {offsets = [0, 223], sizes = [2, 33], strides = [1, 1]} : vector<2x256xf32> to vector<2x33xf32>
    %235 = vector.extract_strided_slice %87 {offsets = [0, 0], sizes = [2, 223], strides = [1, 1]} : vector<2x256xf32> to vector<2x223xf32>
    %236 = tpu.concatenate %234, %235 in 1 : vector<2x33xf32>, vector<2x223xf32> -> vector<2x256xf32>
    %c9 = arith.constant 9 : index
    %c0_64 = arith.constant 0 : index
    %c0_65 = arith.constant 0 : index
    %237 = vector.load %arg3[%c9, %c0_64, %c0_65] : memref<98x1x256xf32, #tpu.memory_space<vmem>>, vector<1x1x256xf32>
    %238 = vector.shape_cast %237 : vector<1x1x256xf32> to vector<1x256xf32>
    %239 = vector.broadcast %238 : vector<1x256xf32> to vector<2x256xf32>
    %240 = arith.mulf %236, %239 : vector<2x256xf32>
    %241 = vector.extract_strided_slice %88 {offsets = [0, 223], sizes = [2, 33], strides = [1, 1]} : vector<2x256xf32> to vector<2x33xf32>
    %242 = vector.extract_strided_slice %88 {offsets = [0, 0], sizes = [2, 223], strides = [1, 1]} : vector<2x256xf32> to vector<2x223xf32>
    %243 = tpu.concatenate %241, %242 in 1 : vector<2x33xf32>, vector<2x223xf32> -> vector<2x256xf32>
    %c58 = arith.constant 58 : index
    %c0_66 = arith.constant 0 : index
    %c0_67 = arith.constant 0 : index
    %244 = vector.load %arg3[%c58, %c0_66, %c0_67] : memref<98x1x256xf32, #tpu.memory_space<vmem>>, vector<1x1x256xf32>
    %245 = vector.shape_cast %244 : vector<1x1x256xf32> to vector<1x256xf32>
    %246 = vector.broadcast %245 : vector<1x256xf32> to vector<2x256xf32>
    %247 = arith.mulf %243, %246 : vector<2x256xf32>
    %248 = arith.addf %240, %247 : vector<2x256xf32>
    %249 = arith.addf %233, %248 : vector<2x256xf32>
    %250 = vector.extract_strided_slice %87 {offsets = [0, 224], sizes = [2, 32], strides = [1, 1]} : vector<2x256xf32> to vector<2x32xf32>
    %251 = vector.extract_strided_slice %87 {offsets = [0, 0], sizes = [2, 224], strides = [1, 1]} : vector<2x256xf32> to vector<2x224xf32>
    %252 = tpu.concatenate %250, %251 in 1 : vector<2x32xf32>, vector<2x224xf32> -> vector<2x256xf32>
    %c10 = arith.constant 10 : index
    %c0_68 = arith.constant 0 : index
    %c0_69 = arith.constant 0 : index
    %253 = vector.load %arg3[%c10, %c0_68, %c0_69] : memref<98x1x256xf32, #tpu.memory_space<vmem>>, vector<1x1x256xf32>
    %254 = vector.shape_cast %253 : vector<1x1x256xf32> to vector<1x256xf32>
    %255 = vector.broadcast %254 : vector<1x256xf32> to vector<2x256xf32>
    %256 = arith.mulf %252, %255 : vector<2x256xf32>
    %257 = vector.extract_strided_slice %88 {offsets = [0, 224], sizes = [2, 32], strides = [1, 1]} : vector<2x256xf32> to vector<2x32xf32>
    %258 = vector.extract_strided_slice %88 {offsets = [0, 0], sizes = [2, 224], strides = [1, 1]} : vector<2x256xf32> to vector<2x224xf32>
    %259 = tpu.concatenate %257, %258 in 1 : vector<2x32xf32>, vector<2x224xf32> -> vector<2x256xf32>
    %c59 = arith.constant 59 : index
    %c0_70 = arith.constant 0 : index
    %c0_71 = arith.constant 0 : index
    %260 = vector.load %arg3[%c59, %c0_70, %c0_71] : memref<98x1x256xf32, #tpu.memory_space<vmem>>, vector<1x1x256xf32>
    %261 = vector.shape_cast %260 : vector<1x1x256xf32> to vector<1x256xf32>
    %262 = vector.broadcast %261 : vector<1x256xf32> to vector<2x256xf32>
    %263 = arith.mulf %259, %262 : vector<2x256xf32>
    %264 = arith.addf %256, %263 : vector<2x256xf32>
    %265 = arith.addf %249, %264 : vector<2x256xf32>
    %266 = vector.extract_strided_slice %87 {offsets = [0, 225], sizes = [2, 31], strides = [1, 1]} : vector<2x256xf32> to vector<2x31xf32>
    %267 = vector.extract_strided_slice %87 {offsets = [0, 0], sizes = [2, 225], strides = [1, 1]} : vector<2x256xf32> to vector<2x225xf32>
    %268 = tpu.concatenate %266, %267 in 1 : vector<2x31xf32>, vector<2x225xf32> -> vector<2x256xf32>
    %c11 = arith.constant 11 : index
    %c0_72 = arith.constant 0 : index
    %c0_73 = arith.constant 0 : index
    %269 = vector.load %arg3[%c11, %c0_72, %c0_73] : memref<98x1x256xf32, #tpu.memory_space<vmem>>, vector<1x1x256xf32>
    %270 = vector.shape_cast %269 : vector<1x1x256xf32> to vector<1x256xf32>
    %271 = vector.broadcast %270 : vector<1x256xf32> to vector<2x256xf32>
    %272 = arith.mulf %268, %271 : vector<2x256xf32>
    %273 = vector.extract_strided_slice %88 {offsets = [0, 225], sizes = [2, 31], strides = [1, 1]} : vector<2x256xf32> to vector<2x31xf32>
    %274 = vector.extract_strided_slice %88 {offsets = [0, 0], sizes = [2, 225], strides = [1, 1]} : vector<2x256xf32> to vector<2x225xf32>
    %275 = tpu.concatenate %273, %274 in 1 : vector<2x31xf32>, vector<2x225xf32> -> vector<2x256xf32>
    %c60 = arith.constant 60 : index
    %c0_74 = arith.constant 0 : index
    %c0_75 = arith.constant 0 : index
    %276 = vector.load %arg3[%c60, %c0_74, %c0_75] : memref<98x1x256xf32, #tpu.memory_space<vmem>>, vector<1x1x256xf32>
    %277 = vector.shape_cast %276 : vector<1x1x256xf32> to vector<1x256xf32>
    %278 = vector.broadcast %277 : vector<1x256xf32> to vector<2x256xf32>
    %279 = arith.mulf %275, %278 : vector<2x256xf32>
    %280 = arith.addf %272, %279 : vector<2x256xf32>
    %281 = arith.addf %265, %280 : vector<2x256xf32>
    %282 = vector.extract_strided_slice %87 {offsets = [0, 226], sizes = [2, 30], strides = [1, 1]} : vector<2x256xf32> to vector<2x30xf32>
    %283 = vector.extract_strided_slice %87 {offsets = [0, 0], sizes = [2, 226], strides = [1, 1]} : vector<2x256xf32> to vector<2x226xf32>
    %284 = tpu.concatenate %282, %283 in 1 : vector<2x30xf32>, vector<2x226xf32> -> vector<2x256xf32>
    %c12 = arith.constant 12 : index
    %c0_76 = arith.constant 0 : index
    %c0_77 = arith.constant 0 : index
    %285 = vector.load %arg3[%c12, %c0_76, %c0_77] : memref<98x1x256xf32, #tpu.memory_space<vmem>>, vector<1x1x256xf32>
    %286 = vector.shape_cast %285 : vector<1x1x256xf32> to vector<1x256xf32>
    %287 = vector.broadcast %286 : vector<1x256xf32> to vector<2x256xf32>
    %288 = arith.mulf %284, %287 : vector<2x256xf32>
    %289 = vector.extract_strided_slice %88 {offsets = [0, 226], sizes = [2, 30], strides = [1, 1]} : vector<2x256xf32> to vector<2x30xf32>
    %290 = vector.extract_strided_slice %88 {offsets = [0, 0], sizes = [2, 226], strides = [1, 1]} : vector<2x256xf32> to vector<2x226xf32>
    %291 = tpu.concatenate %289, %290 in 1 : vector<2x30xf32>, vector<2x226xf32> -> vector<2x256xf32>
    %c61 = arith.constant 61 : index
    %c0_78 = arith.constant 0 : index
    %c0_79 = arith.constant 0 : index
    %292 = vector.load %arg3[%c61, %c0_78, %c0_79] : memref<98x1x256xf32, #tpu.memory_space<vmem>>, vector<1x1x256xf32>
    %293 = vector.shape_cast %292 : vector<1x1x256xf32> to vector<1x256xf32>
    %294 = vector.broadcast %293 : vector<1x256xf32> to vector<2x256xf32>
    %295 = arith.mulf %291, %294 : vector<2x256xf32>
    %296 = arith.addf %288, %295 : vector<2x256xf32>
    %297 = arith.addf %281, %296 : vector<2x256xf32>
    %298 = vector.extract_strided_slice %87 {offsets = [0, 227], sizes = [2, 29], strides = [1, 1]} : vector<2x256xf32> to vector<2x29xf32>
    %299 = vector.extract_strided_slice %87 {offsets = [0, 0], sizes = [2, 227], strides = [1, 1]} : vector<2x256xf32> to vector<2x227xf32>
    %300 = tpu.concatenate %298, %299 in 1 : vector<2x29xf32>, vector<2x227xf32> -> vector<2x256xf32>
    %c13 = arith.constant 13 : index
    %c0_80 = arith.constant 0 : index
    %c0_81 = arith.constant 0 : index
    %301 = vector.load %arg3[%c13, %c0_80, %c0_81] : memref<98x1x256xf32, #tpu.memory_space<vmem>>, vector<1x1x256xf32>
    %302 = vector.shape_cast %301 : vector<1x1x256xf32> to vector<1x256xf32>
    %303 = vector.broadcast %302 : vector<1x256xf32> to vector<2x256xf32>
    %304 = arith.mulf %300, %303 : vector<2x256xf32>
    %305 = vector.extract_strided_slice %88 {offsets = [0, 227], sizes = [2, 29], strides = [1, 1]} : vector<2x256xf32> to vector<2x29xf32>
    %306 = vector.extract_strided_slice %88 {offsets = [0, 0], sizes = [2, 227], strides = [1, 1]} : vector<2x256xf32> to vector<2x227xf32>
    %307 = tpu.concatenate %305, %306 in 1 : vector<2x29xf32>, vector<2x227xf32> -> vector<2x256xf32>
    %c62 = arith.constant 62 : index
    %c0_82 = arith.constant 0 : index
    %c0_83 = arith.constant 0 : index
    %308 = vector.load %arg3[%c62, %c0_82, %c0_83] : memref<98x1x256xf32, #tpu.memory_space<vmem>>, vector<1x1x256xf32>
    %309 = vector.shape_cast %308 : vector<1x1x256xf32> to vector<1x256xf32>
    %310 = vector.broadcast %309 : vector<1x256xf32> to vector<2x256xf32>
    %311 = arith.mulf %307, %310 : vector<2x256xf32>
    %312 = arith.addf %304, %311 : vector<2x256xf32>
    %313 = arith.addf %297, %312 : vector<2x256xf32>
    %314 = vector.extract_strided_slice %87 {offsets = [0, 237], sizes = [2, 19], strides = [1, 1]} : vector<2x256xf32> to vector<2x19xf32>
    %315 = vector.extract_strided_slice %87 {offsets = [0, 0], sizes = [2, 237], strides = [1, 1]} : vector<2x256xf32> to vector<2x237xf32>
    %316 = tpu.concatenate %314, %315 in 1 : vector<2x19xf32>, vector<2x237xf32> -> vector<2x256xf32>
    %c14 = arith.constant 14 : index
    %c0_84 = arith.constant 0 : index
    %c0_85 = arith.constant 0 : index
    %317 = vector.load %arg3[%c14, %c0_84, %c0_85] : memref<98x1x256xf32, #tpu.memory_space<vmem>>, vector<1x1x256xf32>
    %318 = vector.shape_cast %317 : vector<1x1x256xf32> to vector<1x256xf32>
    %319 = vector.broadcast %318 : vector<1x256xf32> to vector<2x256xf32>
    %320 = arith.mulf %316, %319 : vector<2x256xf32>
    %321 = vector.extract_strided_slice %88 {offsets = [0, 237], sizes = [2, 19], strides = [1, 1]} : vector<2x256xf32> to vector<2x19xf32>
    %322 = vector.extract_strided_slice %88 {offsets = [0, 0], sizes = [2, 237], strides = [1, 1]} : vector<2x256xf32> to vector<2x237xf32>
    %323 = tpu.concatenate %321, %322 in 1 : vector<2x19xf32>, vector<2x237xf32> -> vector<2x256xf32>
    %c63 = arith.constant 63 : index
    %c0_86 = arith.constant 0 : index
    %c0_87 = arith.constant 0 : index
    %324 = vector.load %arg3[%c63, %c0_86, %c0_87] : memref<98x1x256xf32, #tpu.memory_space<vmem>>, vector<1x1x256xf32>
    %325 = vector.shape_cast %324 : vector<1x1x256xf32> to vector<1x256xf32>
    %326 = vector.broadcast %325 : vector<1x256xf32> to vector<2x256xf32>
    %327 = arith.mulf %323, %326 : vector<2x256xf32>
    %328 = arith.addf %320, %327 : vector<2x256xf32>
    %329 = arith.addf %313, %328 : vector<2x256xf32>
    %330 = vector.extract_strided_slice %87 {offsets = [0, 238], sizes = [2, 18], strides = [1, 1]} : vector<2x256xf32> to vector<2x18xf32>
    %331 = vector.extract_strided_slice %87 {offsets = [0, 0], sizes = [2, 238], strides = [1, 1]} : vector<2x256xf32> to vector<2x238xf32>
    %332 = tpu.concatenate %330, %331 in 1 : vector<2x18xf32>, vector<2x238xf32> -> vector<2x256xf32>
    %c15 = arith.constant 15 : index
    %c0_88 = arith.constant 0 : index
    %c0_89 = arith.constant 0 : index
    %333 = vector.load %arg3[%c15, %c0_88, %c0_89] : memref<98x1x256xf32, #tpu.memory_space<vmem>>, vector<1x1x256xf32>
    %334 = vector.shape_cast %333 : vector<1x1x256xf32> to vector<1x256xf32>
    %335 = vector.broadcast %334 : vector<1x256xf32> to vector<2x256xf32>
    %336 = arith.mulf %332, %335 : vector<2x256xf32>
    %337 = vector.extract_strided_slice %88 {offsets = [0, 238], sizes = [2, 18], strides = [1, 1]} : vector<2x256xf32> to vector<2x18xf32>
    %338 = vector.extract_strided_slice %88 {offsets = [0, 0], sizes = [2, 238], strides = [1, 1]} : vector<2x256xf32> to vector<2x238xf32>
    %339 = tpu.concatenate %337, %338 in 1 : vector<2x18xf32>, vector<2x238xf32> -> vector<2x256xf32>
    %c64 = arith.constant 64 : index
    %c0_90 = arith.constant 0 : index
    %c0_91 = arith.constant 0 : index
    %340 = vector.load %arg3[%c64, %c0_90, %c0_91] : memref<98x1x256xf32, #tpu.memory_space<vmem>>, vector<1x1x256xf32>
    %341 = vector.shape_cast %340 : vector<1x1x256xf32> to vector<1x256xf32>
    %342 = vector.broadcast %341 : vector<1x256xf32> to vector<2x256xf32>
    %343 = arith.mulf %339, %342 : vector<2x256xf32>
    %344 = arith.addf %336, %343 : vector<2x256xf32>
    %345 = arith.addf %329, %344 : vector<2x256xf32>
    %346 = vector.extract_strided_slice %87 {offsets = [0, 239], sizes = [2, 17], strides = [1, 1]} : vector<2x256xf32> to vector<2x17xf32>
    %347 = vector.extract_strided_slice %87 {offsets = [0, 0], sizes = [2, 239], strides = [1, 1]} : vector<2x256xf32> to vector<2x239xf32>
    %348 = tpu.concatenate %346, %347 in 1 : vector<2x17xf32>, vector<2x239xf32> -> vector<2x256xf32>
    %c16 = arith.constant 16 : index
    %c0_92 = arith.constant 0 : index
    %c0_93 = arith.constant 0 : index
    %349 = vector.load %arg3[%c16, %c0_92, %c0_93] : memref<98x1x256xf32, #tpu.memory_space<vmem>>, vector<1x1x256xf32>
    %350 = vector.shape_cast %349 : vector<1x1x256xf32> to vector<1x256xf32>
    %351 = vector.broadcast %350 : vector<1x256xf32> to vector<2x256xf32>
    %352 = arith.mulf %348, %351 : vector<2x256xf32>
    %353 = vector.extract_strided_slice %88 {offsets = [0, 239], sizes = [2, 17], strides = [1, 1]} : vector<2x256xf32> to vector<2x17xf32>
    %354 = vector.extract_strided_slice %88 {offsets = [0, 0], sizes = [2, 239], strides = [1, 1]} : vector<2x256xf32> to vector<2x239xf32>
    %355 = tpu.concatenate %353, %354 in 1 : vector<2x17xf32>, vector<2x239xf32> -> vector<2x256xf32>
    %c65 = arith.constant 65 : index
    %c0_94 = arith.constant 0 : index
    %c0_95 = arith.constant 0 : index
    %356 = vector.load %arg3[%c65, %c0_94, %c0_95] : memref<98x1x256xf32, #tpu.memory_space<vmem>>, vector<1x1x256xf32>
    %357 = vector.shape_cast %356 : vector<1x1x256xf32> to vector<1x256xf32>
    %358 = vector.broadcast %357 : vector<1x256xf32> to vector<2x256xf32>
    %359 = arith.mulf %355, %358 : vector<2x256xf32>
    %360 = arith.addf %352, %359 : vector<2x256xf32>
    %361 = arith.addf %345, %360 : vector<2x256xf32>
    %362 = vector.extract_strided_slice %87 {offsets = [0, 240], sizes = [2, 16], strides = [1, 1]} : vector<2x256xf32> to vector<2x16xf32>
    %363 = vector.extract_strided_slice %87 {offsets = [0, 0], sizes = [2, 240], strides = [1, 1]} : vector<2x256xf32> to vector<2x240xf32>
    %364 = tpu.concatenate %362, %363 in 1 : vector<2x16xf32>, vector<2x240xf32> -> vector<2x256xf32>
    %c17 = arith.constant 17 : index
    %c0_96 = arith.constant 0 : index
    %c0_97 = arith.constant 0 : index
    %365 = vector.load %arg3[%c17, %c0_96, %c0_97] : memref<98x1x256xf32, #tpu.memory_space<vmem>>, vector<1x1x256xf32>
    %366 = vector.shape_cast %365 : vector<1x1x256xf32> to vector<1x256xf32>
    %367 = vector.broadcast %366 : vector<1x256xf32> to vector<2x256xf32>
    %368 = arith.mulf %364, %367 : vector<2x256xf32>
    %369 = vector.extract_strided_slice %88 {offsets = [0, 240], sizes = [2, 16], strides = [1, 1]} : vector<2x256xf32> to vector<2x16xf32>
    %370 = vector.extract_strided_slice %88 {offsets = [0, 0], sizes = [2, 240], strides = [1, 1]} : vector<2x256xf32> to vector<2x240xf32>
    %371 = tpu.concatenate %369, %370 in 1 : vector<2x16xf32>, vector<2x240xf32> -> vector<2x256xf32>
    %c66 = arith.constant 66 : index
    %c0_98 = arith.constant 0 : index
    %c0_99 = arith.constant 0 : index
    %372 = vector.load %arg3[%c66, %c0_98, %c0_99] : memref<98x1x256xf32, #tpu.memory_space<vmem>>, vector<1x1x256xf32>
    %373 = vector.shape_cast %372 : vector<1x1x256xf32> to vector<1x256xf32>
    %374 = vector.broadcast %373 : vector<1x256xf32> to vector<2x256xf32>
    %375 = arith.mulf %371, %374 : vector<2x256xf32>
    %376 = arith.addf %368, %375 : vector<2x256xf32>
    %377 = arith.addf %361, %376 : vector<2x256xf32>
    %378 = vector.extract_strided_slice %87 {offsets = [0, 241], sizes = [2, 15], strides = [1, 1]} : vector<2x256xf32> to vector<2x15xf32>
    %379 = vector.extract_strided_slice %87 {offsets = [0, 0], sizes = [2, 241], strides = [1, 1]} : vector<2x256xf32> to vector<2x241xf32>
    %380 = tpu.concatenate %378, %379 in 1 : vector<2x15xf32>, vector<2x241xf32> -> vector<2x256xf32>
    %c18 = arith.constant 18 : index
    %c0_100 = arith.constant 0 : index
    %c0_101 = arith.constant 0 : index
    %381 = vector.load %arg3[%c18, %c0_100, %c0_101] : memref<98x1x256xf32, #tpu.memory_space<vmem>>, vector<1x1x256xf32>
    %382 = vector.shape_cast %381 : vector<1x1x256xf32> to vector<1x256xf32>
    %383 = vector.broadcast %382 : vector<1x256xf32> to vector<2x256xf32>
    %384 = arith.mulf %380, %383 : vector<2x256xf32>
    %385 = vector.extract_strided_slice %88 {offsets = [0, 241], sizes = [2, 15], strides = [1, 1]} : vector<2x256xf32> to vector<2x15xf32>
    %386 = vector.extract_strided_slice %88 {offsets = [0, 0], sizes = [2, 241], strides = [1, 1]} : vector<2x256xf32> to vector<2x241xf32>
    %387 = tpu.concatenate %385, %386 in 1 : vector<2x15xf32>, vector<2x241xf32> -> vector<2x256xf32>
    %c67 = arith.constant 67 : index
    %c0_102 = arith.constant 0 : index
    %c0_103 = arith.constant 0 : index
    %388 = vector.load %arg3[%c67, %c0_102, %c0_103] : memref<98x1x256xf32, #tpu.memory_space<vmem>>, vector<1x1x256xf32>
    %389 = vector.shape_cast %388 : vector<1x1x256xf32> to vector<1x256xf32>
    %390 = vector.broadcast %389 : vector<1x256xf32> to vector<2x256xf32>
    %391 = arith.mulf %387, %390 : vector<2x256xf32>
    %392 = arith.addf %384, %391 : vector<2x256xf32>
    %393 = arith.addf %377, %392 : vector<2x256xf32>
    %394 = vector.extract_strided_slice %87 {offsets = [0, 242], sizes = [2, 14], strides = [1, 1]} : vector<2x256xf32> to vector<2x14xf32>
    %395 = vector.extract_strided_slice %87 {offsets = [0, 0], sizes = [2, 242], strides = [1, 1]} : vector<2x256xf32> to vector<2x242xf32>
    %396 = tpu.concatenate %394, %395 in 1 : vector<2x14xf32>, vector<2x242xf32> -> vector<2x256xf32>
    %c19 = arith.constant 19 : index
    %c0_104 = arith.constant 0 : index
    %c0_105 = arith.constant 0 : index
    %397 = vector.load %arg3[%c19, %c0_104, %c0_105] : memref<98x1x256xf32, #tpu.memory_space<vmem>>, vector<1x1x256xf32>
    %398 = vector.shape_cast %397 : vector<1x1x256xf32> to vector<1x256xf32>
    %399 = vector.broadcast %398 : vector<1x256xf32> to vector<2x256xf32>
    %400 = arith.mulf %396, %399 : vector<2x256xf32>
    %401 = vector.extract_strided_slice %88 {offsets = [0, 242], sizes = [2, 14], strides = [1, 1]} : vector<2x256xf32> to vector<2x14xf32>
    %402 = vector.extract_strided_slice %88 {offsets = [0, 0], sizes = [2, 242], strides = [1, 1]} : vector<2x256xf32> to vector<2x242xf32>
    %403 = tpu.concatenate %401, %402 in 1 : vector<2x14xf32>, vector<2x242xf32> -> vector<2x256xf32>
    %c68 = arith.constant 68 : index
    %c0_106 = arith.constant 0 : index
    %c0_107 = arith.constant 0 : index
    %404 = vector.load %arg3[%c68, %c0_106, %c0_107] : memref<98x1x256xf32, #tpu.memory_space<vmem>>, vector<1x1x256xf32>
    %405 = vector.shape_cast %404 : vector<1x1x256xf32> to vector<1x256xf32>
    %406 = vector.broadcast %405 : vector<1x256xf32> to vector<2x256xf32>
    %407 = arith.mulf %403, %406 : vector<2x256xf32>
    %408 = arith.addf %400, %407 : vector<2x256xf32>
    %409 = arith.addf %393, %408 : vector<2x256xf32>
    %410 = vector.extract_strided_slice %87 {offsets = [0, 243], sizes = [2, 13], strides = [1, 1]} : vector<2x256xf32> to vector<2x13xf32>
    %411 = vector.extract_strided_slice %87 {offsets = [0, 0], sizes = [2, 243], strides = [1, 1]} : vector<2x256xf32> to vector<2x243xf32>
    %412 = tpu.concatenate %410, %411 in 1 : vector<2x13xf32>, vector<2x243xf32> -> vector<2x256xf32>
    %c20 = arith.constant 20 : index
    %c0_108 = arith.constant 0 : index
    %c0_109 = arith.constant 0 : index
    %413 = vector.load %arg3[%c20, %c0_108, %c0_109] : memref<98x1x256xf32, #tpu.memory_space<vmem>>, vector<1x1x256xf32>
    %414 = vector.shape_cast %413 : vector<1x1x256xf32> to vector<1x256xf32>
    %415 = vector.broadcast %414 : vector<1x256xf32> to vector<2x256xf32>
    %416 = arith.mulf %412, %415 : vector<2x256xf32>
    %417 = vector.extract_strided_slice %88 {offsets = [0, 243], sizes = [2, 13], strides = [1, 1]} : vector<2x256xf32> to vector<2x13xf32>
    %418 = vector.extract_strided_slice %88 {offsets = [0, 0], sizes = [2, 243], strides = [1, 1]} : vector<2x256xf32> to vector<2x243xf32>
    %419 = tpu.concatenate %417, %418 in 1 : vector<2x13xf32>, vector<2x243xf32> -> vector<2x256xf32>
    %c69 = arith.constant 69 : index
    %c0_110 = arith.constant 0 : index
    %c0_111 = arith.constant 0 : index
    %420 = vector.load %arg3[%c69, %c0_110, %c0_111] : memref<98x1x256xf32, #tpu.memory_space<vmem>>, vector<1x1x256xf32>
    %421 = vector.shape_cast %420 : vector<1x1x256xf32> to vector<1x256xf32>
    %422 = vector.broadcast %421 : vector<1x256xf32> to vector<2x256xf32>
    %423 = arith.mulf %419, %422 : vector<2x256xf32>
    %424 = arith.addf %416, %423 : vector<2x256xf32>
    %425 = arith.addf %409, %424 : vector<2x256xf32>
    %426 = vector.extract_strided_slice %87 {offsets = [0, 253], sizes = [2, 3], strides = [1, 1]} : vector<2x256xf32> to vector<2x3xf32>
    %427 = vector.extract_strided_slice %87 {offsets = [0, 0], sizes = [2, 253], strides = [1, 1]} : vector<2x256xf32> to vector<2x253xf32>
    %428 = tpu.concatenate %426, %427 in 1 : vector<2x3xf32>, vector<2x253xf32> -> vector<2x256xf32>
    %c21 = arith.constant 21 : index
    %c0_112 = arith.constant 0 : index
    %c0_113 = arith.constant 0 : index
    %429 = vector.load %arg3[%c21, %c0_112, %c0_113] : memref<98x1x256xf32, #tpu.memory_space<vmem>>, vector<1x1x256xf32>
    %430 = vector.shape_cast %429 : vector<1x1x256xf32> to vector<1x256xf32>
    %431 = vector.broadcast %430 : vector<1x256xf32> to vector<2x256xf32>
    %432 = arith.mulf %428, %431 : vector<2x256xf32>
    %433 = vector.extract_strided_slice %88 {offsets = [0, 253], sizes = [2, 3], strides = [1, 1]} : vector<2x256xf32> to vector<2x3xf32>
    %434 = vector.extract_strided_slice %88 {offsets = [0, 0], sizes = [2, 253], strides = [1, 1]} : vector<2x256xf32> to vector<2x253xf32>
    %435 = tpu.concatenate %433, %434 in 1 : vector<2x3xf32>, vector<2x253xf32> -> vector<2x256xf32>
    %c70 = arith.constant 70 : index
    %c0_114 = arith.constant 0 : index
    %c0_115 = arith.constant 0 : index
    %436 = vector.load %arg3[%c70, %c0_114, %c0_115] : memref<98x1x256xf32, #tpu.memory_space<vmem>>, vector<1x1x256xf32>
    %437 = vector.shape_cast %436 : vector<1x1x256xf32> to vector<1x256xf32>
    %438 = vector.broadcast %437 : vector<1x256xf32> to vector<2x256xf32>
    %439 = arith.mulf %435, %438 : vector<2x256xf32>
    %440 = arith.addf %432, %439 : vector<2x256xf32>
    %441 = arith.addf %425, %440 : vector<2x256xf32>
    %442 = vector.extract_strided_slice %87 {offsets = [0, 254], sizes = [2, 2], strides = [1, 1]} : vector<2x256xf32> to vector<2x2xf32>
    %443 = vector.extract_strided_slice %87 {offsets = [0, 0], sizes = [2, 254], strides = [1, 1]} : vector<2x256xf32> to vector<2x254xf32>
    %444 = tpu.concatenate %442, %443 in 1 : vector<2x2xf32>, vector<2x254xf32> -> vector<2x256xf32>
    %c22 = arith.constant 22 : index
    %c0_116 = arith.constant 0 : index
    %c0_117 = arith.constant 0 : index
    %445 = vector.load %arg3[%c22, %c0_116, %c0_117] : memref<98x1x256xf32, #tpu.memory_space<vmem>>, vector<1x1x256xf32>
    %446 = vector.shape_cast %445 : vector<1x1x256xf32> to vector<1x256xf32>
    %447 = vector.broadcast %446 : vector<1x256xf32> to vector<2x256xf32>
    %448 = arith.mulf %444, %447 : vector<2x256xf32>
    %449 = vector.extract_strided_slice %88 {offsets = [0, 254], sizes = [2, 2], strides = [1, 1]} : vector<2x256xf32> to vector<2x2xf32>
    %450 = vector.extract_strided_slice %88 {offsets = [0, 0], sizes = [2, 254], strides = [1, 1]} : vector<2x256xf32> to vector<2x254xf32>
    %451 = tpu.concatenate %449, %450 in 1 : vector<2x2xf32>, vector<2x254xf32> -> vector<2x256xf32>
    %c71 = arith.constant 71 : index
    %c0_118 = arith.constant 0 : index
    %c0_119 = arith.constant 0 : index
    %452 = vector.load %arg3[%c71, %c0_118, %c0_119] : memref<98x1x256xf32, #tpu.memory_space<vmem>>, vector<1x1x256xf32>
    %453 = vector.shape_cast %452 : vector<1x1x256xf32> to vector<1x256xf32>
    %454 = vector.broadcast %453 : vector<1x256xf32> to vector<2x256xf32>
    %455 = arith.mulf %451, %454 : vector<2x256xf32>
    %456 = arith.addf %448, %455 : vector<2x256xf32>
    %457 = arith.addf %441, %456 : vector<2x256xf32>
    %458 = vector.extract_strided_slice %87 {offsets = [0, 255], sizes = [2, 1], strides = [1, 1]} : vector<2x256xf32> to vector<2x1xf32>
    %459 = vector.extract_strided_slice %87 {offsets = [0, 0], sizes = [2, 255], strides = [1, 1]} : vector<2x256xf32> to vector<2x255xf32>
    %460 = tpu.concatenate %458, %459 in 1 : vector<2x1xf32>, vector<2x255xf32> -> vector<2x256xf32>
    %c23 = arith.constant 23 : index
    %c0_120 = arith.constant 0 : index
    %c0_121 = arith.constant 0 : index
    %461 = vector.load %arg3[%c23, %c0_120, %c0_121] : memref<98x1x256xf32, #tpu.memory_space<vmem>>, vector<1x1x256xf32>
    %462 = vector.shape_cast %461 : vector<1x1x256xf32> to vector<1x256xf32>
    %463 = vector.broadcast %462 : vector<1x256xf32> to vector<2x256xf32>
    %464 = arith.mulf %460, %463 : vector<2x256xf32>
    %465 = vector.extract_strided_slice %88 {offsets = [0, 255], sizes = [2, 1], strides = [1, 1]} : vector<2x256xf32> to vector<2x1xf32>
    %466 = vector.extract_strided_slice %88 {offsets = [0, 0], sizes = [2, 255], strides = [1, 1]} : vector<2x256xf32> to vector<2x255xf32>
    %467 = tpu.concatenate %465, %466 in 1 : vector<2x1xf32>, vector<2x255xf32> -> vector<2x256xf32>
    %c72 = arith.constant 72 : index
    %c0_122 = arith.constant 0 : index
    %c0_123 = arith.constant 0 : index
    %468 = vector.load %arg3[%c72, %c0_122, %c0_123] : memref<98x1x256xf32, #tpu.memory_space<vmem>>, vector<1x1x256xf32>
    %469 = vector.shape_cast %468 : vector<1x1x256xf32> to vector<1x256xf32>
    %470 = vector.broadcast %469 : vector<1x256xf32> to vector<2x256xf32>
    %471 = arith.mulf %467, %470 : vector<2x256xf32>
    %472 = arith.addf %464, %471 : vector<2x256xf32>
    %473 = arith.addf %457, %472 : vector<2x256xf32>
    %c24 = arith.constant 24 : index
    %c0_124 = arith.constant 0 : index
    %c0_125 = arith.constant 0 : index
    %474 = vector.load %arg3[%c24, %c0_124, %c0_125] : memref<98x1x256xf32, #tpu.memory_space<vmem>>, vector<1x1x256xf32>
    %475 = vector.shape_cast %474 : vector<1x1x256xf32> to vector<1x256xf32>
    %476 = vector.broadcast %475 : vector<1x256xf32> to vector<2x256xf32>
    %477 = arith.mulf %87, %476 : vector<2x256xf32>
    %c73 = arith.constant 73 : index
    %c0_126 = arith.constant 0 : index
    %c0_127 = arith.constant 0 : index
    %478 = vector.load %arg3[%c73, %c0_126, %c0_127] : memref<98x1x256xf32, #tpu.memory_space<vmem>>, vector<1x1x256xf32>
    %479 = vector.shape_cast %478 : vector<1x1x256xf32> to vector<1x256xf32>
    %480 = vector.broadcast %479 : vector<1x256xf32> to vector<2x256xf32>
    %481 = arith.mulf %88, %480 : vector<2x256xf32>
    %482 = arith.addf %477, %481 : vector<2x256xf32>
    %483 = arith.addf %473, %482 : vector<2x256xf32>
    %484 = vector.extract_strided_slice %87 {offsets = [0, 1], sizes = [2, 255], strides = [1, 1]} : vector<2x256xf32> to vector<2x255xf32>
    %485 = vector.extract_strided_slice %87 {offsets = [0, 0], sizes = [2, 1], strides = [1, 1]} : vector<2x256xf32> to vector<2x1xf32>
    %486 = tpu.concatenate %484, %485 in 1 : vector<2x255xf32>, vector<2x1xf32> -> vector<2x256xf32>
    %c25 = arith.constant 25 : index
    %c0_128 = arith.constant 0 : index
    %c0_129 = arith.constant 0 : index
    %487 = vector.load %arg3[%c25, %c0_128, %c0_129] : memref<98x1x256xf32, #tpu.memory_space<vmem>>, vector<1x1x256xf32>
    %488 = vector.shape_cast %487 : vector<1x1x256xf32> to vector<1x256xf32>
    %489 = vector.broadcast %488 : vector<1x256xf32> to vector<2x256xf32>
    %490 = arith.mulf %486, %489 : vector<2x256xf32>
    %491 = vector.extract_strided_slice %88 {offsets = [0, 1], sizes = [2, 255], strides = [1, 1]} : vector<2x256xf32> to vector<2x255xf32>
    %492 = vector.extract_strided_slice %88 {offsets = [0, 0], sizes = [2, 1], strides = [1, 1]} : vector<2x256xf32> to vector<2x1xf32>
    %493 = tpu.concatenate %491, %492 in 1 : vector<2x255xf32>, vector<2x1xf32> -> vector<2x256xf32>
    %c74 = arith.constant 74 : index
    %c0_130 = arith.constant 0 : index
    %c0_131 = arith.constant 0 : index
    %494 = vector.load %arg3[%c74, %c0_130, %c0_131] : memref<98x1x256xf32, #tpu.memory_space<vmem>>, vector<1x1x256xf32>
    %495 = vector.shape_cast %494 : vector<1x1x256xf32> to vector<1x256xf32>
    %496 = vector.broadcast %495 : vector<1x256xf32> to vector<2x256xf32>
    %497 = arith.mulf %493, %496 : vector<2x256xf32>
    %498 = arith.addf %490, %497 : vector<2x256xf32>
    %499 = arith.addf %483, %498 : vector<2x256xf32>
    %500 = vector.extract_strided_slice %87 {offsets = [0, 2], sizes = [2, 254], strides = [1, 1]} : vector<2x256xf32> to vector<2x254xf32>
    %501 = vector.extract_strided_slice %87 {offsets = [0, 0], sizes = [2, 2], strides = [1, 1]} : vector<2x256xf32> to vector<2x2xf32>
    %502 = tpu.concatenate %500, %501 in 1 : vector<2x254xf32>, vector<2x2xf32> -> vector<2x256xf32>
    %c26 = arith.constant 26 : index
    %c0_132 = arith.constant 0 : index
    %c0_133 = arith.constant 0 : index
    %503 = vector.load %arg3[%c26, %c0_132, %c0_133] : memref<98x1x256xf32, #tpu.memory_space<vmem>>, vector<1x1x256xf32>
    %504 = vector.shape_cast %503 : vector<1x1x256xf32> to vector<1x256xf32>
    %505 = vector.broadcast %504 : vector<1x256xf32> to vector<2x256xf32>
    %506 = arith.mulf %502, %505 : vector<2x256xf32>
    %507 = vector.extract_strided_slice %88 {offsets = [0, 2], sizes = [2, 254], strides = [1, 1]} : vector<2x256xf32> to vector<2x254xf32>
    %508 = vector.extract_strided_slice %88 {offsets = [0, 0], sizes = [2, 2], strides = [1, 1]} : vector<2x256xf32> to vector<2x2xf32>
    %509 = tpu.concatenate %507, %508 in 1 : vector<2x254xf32>, vector<2x2xf32> -> vector<2x256xf32>
    %c75 = arith.constant 75 : index
    %c0_134 = arith.constant 0 : index
    %c0_135 = arith.constant 0 : index
    %510 = vector.load %arg3[%c75, %c0_134, %c0_135] : memref<98x1x256xf32, #tpu.memory_space<vmem>>, vector<1x1x256xf32>
    %511 = vector.shape_cast %510 : vector<1x1x256xf32> to vector<1x256xf32>
    %512 = vector.broadcast %511 : vector<1x256xf32> to vector<2x256xf32>
    %513 = arith.mulf %509, %512 : vector<2x256xf32>
    %514 = arith.addf %506, %513 : vector<2x256xf32>
    %515 = arith.addf %499, %514 : vector<2x256xf32>
    %516 = vector.extract_strided_slice %87 {offsets = [0, 3], sizes = [2, 253], strides = [1, 1]} : vector<2x256xf32> to vector<2x253xf32>
    %517 = vector.extract_strided_slice %87 {offsets = [0, 0], sizes = [2, 3], strides = [1, 1]} : vector<2x256xf32> to vector<2x3xf32>
    %518 = tpu.concatenate %516, %517 in 1 : vector<2x253xf32>, vector<2x3xf32> -> vector<2x256xf32>
    %c27 = arith.constant 27 : index
    %c0_136 = arith.constant 0 : index
    %c0_137 = arith.constant 0 : index
    %519 = vector.load %arg3[%c27, %c0_136, %c0_137] : memref<98x1x256xf32, #tpu.memory_space<vmem>>, vector<1x1x256xf32>
    %520 = vector.shape_cast %519 : vector<1x1x256xf32> to vector<1x256xf32>
    %521 = vector.broadcast %520 : vector<1x256xf32> to vector<2x256xf32>
    %522 = arith.mulf %518, %521 : vector<2x256xf32>
    %523 = vector.extract_strided_slice %88 {offsets = [0, 3], sizes = [2, 253], strides = [1, 1]} : vector<2x256xf32> to vector<2x253xf32>
    %524 = vector.extract_strided_slice %88 {offsets = [0, 0], sizes = [2, 3], strides = [1, 1]} : vector<2x256xf32> to vector<2x3xf32>
    %525 = tpu.concatenate %523, %524 in 1 : vector<2x253xf32>, vector<2x3xf32> -> vector<2x256xf32>
    %c76 = arith.constant 76 : index
    %c0_138 = arith.constant 0 : index
    %c0_139 = arith.constant 0 : index
    %526 = vector.load %arg3[%c76, %c0_138, %c0_139] : memref<98x1x256xf32, #tpu.memory_space<vmem>>, vector<1x1x256xf32>
    %527 = vector.shape_cast %526 : vector<1x1x256xf32> to vector<1x256xf32>
    %528 = vector.broadcast %527 : vector<1x256xf32> to vector<2x256xf32>
    %529 = arith.mulf %525, %528 : vector<2x256xf32>
    %530 = arith.addf %522, %529 : vector<2x256xf32>
    %531 = arith.addf %515, %530 : vector<2x256xf32>
    %532 = vector.extract_strided_slice %87 {offsets = [0, 13], sizes = [2, 243], strides = [1, 1]} : vector<2x256xf32> to vector<2x243xf32>
    %533 = vector.extract_strided_slice %87 {offsets = [0, 0], sizes = [2, 13], strides = [1, 1]} : vector<2x256xf32> to vector<2x13xf32>
    %534 = tpu.concatenate %532, %533 in 1 : vector<2x243xf32>, vector<2x13xf32> -> vector<2x256xf32>
    %c28 = arith.constant 28 : index
    %c0_140 = arith.constant 0 : index
    %c0_141 = arith.constant 0 : index
    %535 = vector.load %arg3[%c28, %c0_140, %c0_141] : memref<98x1x256xf32, #tpu.memory_space<vmem>>, vector<1x1x256xf32>
    %536 = vector.shape_cast %535 : vector<1x1x256xf32> to vector<1x256xf32>
    %537 = vector.broadcast %536 : vector<1x256xf32> to vector<2x256xf32>
    %538 = arith.mulf %534, %537 : vector<2x256xf32>
    %539 = vector.extract_strided_slice %88 {offsets = [0, 13], sizes = [2, 243], strides = [1, 1]} : vector<2x256xf32> to vector<2x243xf32>
    %540 = vector.extract_strided_slice %88 {offsets = [0, 0], sizes = [2, 13], strides = [1, 1]} : vector<2x256xf32> to vector<2x13xf32>
    %541 = tpu.concatenate %539, %540 in 1 : vector<2x243xf32>, vector<2x13xf32> -> vector<2x256xf32>
    %c77 = arith.constant 77 : index
    %c0_142 = arith.constant 0 : index
    %c0_143 = arith.constant 0 : index
    %542 = vector.load %arg3[%c77, %c0_142, %c0_143] : memref<98x1x256xf32, #tpu.memory_space<vmem>>, vector<1x1x256xf32>
    %543 = vector.shape_cast %542 : vector<1x1x256xf32> to vector<1x256xf32>
    %544 = vector.broadcast %543 : vector<1x256xf32> to vector<2x256xf32>
    %545 = arith.mulf %541, %544 : vector<2x256xf32>
    %546 = arith.addf %538, %545 : vector<2x256xf32>
    %547 = arith.addf %531, %546 : vector<2x256xf32>
    %548 = vector.extract_strided_slice %87 {offsets = [0, 14], sizes = [2, 242], strides = [1, 1]} : vector<2x256xf32> to vector<2x242xf32>
    %549 = vector.extract_strided_slice %87 {offsets = [0, 0], sizes = [2, 14], strides = [1, 1]} : vector<2x256xf32> to vector<2x14xf32>
    %550 = tpu.concatenate %548, %549 in 1 : vector<2x242xf32>, vector<2x14xf32> -> vector<2x256xf32>
    %c29 = arith.constant 29 : index
    %c0_144 = arith.constant 0 : index
    %c0_145 = arith.constant 0 : index
    %551 = vector.load %arg3[%c29, %c0_144, %c0_145] : memref<98x1x256xf32, #tpu.memory_space<vmem>>, vector<1x1x256xf32>
    %552 = vector.shape_cast %551 : vector<1x1x256xf32> to vector<1x256xf32>
    %553 = vector.broadcast %552 : vector<1x256xf32> to vector<2x256xf32>
    %554 = arith.mulf %550, %553 : vector<2x256xf32>
    %555 = vector.extract_strided_slice %88 {offsets = [0, 14], sizes = [2, 242], strides = [1, 1]} : vector<2x256xf32> to vector<2x242xf32>
    %556 = vector.extract_strided_slice %88 {offsets = [0, 0], sizes = [2, 14], strides = [1, 1]} : vector<2x256xf32> to vector<2x14xf32>
    %557 = tpu.concatenate %555, %556 in 1 : vector<2x242xf32>, vector<2x14xf32> -> vector<2x256xf32>
    %c78 = arith.constant 78 : index
    %c0_146 = arith.constant 0 : index
    %c0_147 = arith.constant 0 : index
    %558 = vector.load %arg3[%c78, %c0_146, %c0_147] : memref<98x1x256xf32, #tpu.memory_space<vmem>>, vector<1x1x256xf32>
    %559 = vector.shape_cast %558 : vector<1x1x256xf32> to vector<1x256xf32>
    %560 = vector.broadcast %559 : vector<1x256xf32> to vector<2x256xf32>
    %561 = arith.mulf %557, %560 : vector<2x256xf32>
    %562 = arith.addf %554, %561 : vector<2x256xf32>
    %563 = arith.addf %547, %562 : vector<2x256xf32>
    %564 = vector.extract_strided_slice %87 {offsets = [0, 15], sizes = [2, 241], strides = [1, 1]} : vector<2x256xf32> to vector<2x241xf32>
    %565 = vector.extract_strided_slice %87 {offsets = [0, 0], sizes = [2, 15], strides = [1, 1]} : vector<2x256xf32> to vector<2x15xf32>
    %566 = tpu.concatenate %564, %565 in 1 : vector<2x241xf32>, vector<2x15xf32> -> vector<2x256xf32>
    %c30 = arith.constant 30 : index
    %c0_148 = arith.constant 0 : index
    %c0_149 = arith.constant 0 : index
    %567 = vector.load %arg3[%c30, %c0_148, %c0_149] : memref<98x1x256xf32, #tpu.memory_space<vmem>>, vector<1x1x256xf32>
    %568 = vector.shape_cast %567 : vector<1x1x256xf32> to vector<1x256xf32>
    %569 = vector.broadcast %568 : vector<1x256xf32> to vector<2x256xf32>
    %570 = arith.mulf %566, %569 : vector<2x256xf32>
    %571 = vector.extract_strided_slice %88 {offsets = [0, 15], sizes = [2, 241], strides = [1, 1]} : vector<2x256xf32> to vector<2x241xf32>
    %572 = vector.extract_strided_slice %88 {offsets = [0, 0], sizes = [2, 15], strides = [1, 1]} : vector<2x256xf32> to vector<2x15xf32>
    %573 = tpu.concatenate %571, %572 in 1 : vector<2x241xf32>, vector<2x15xf32> -> vector<2x256xf32>
    %c79 = arith.constant 79 : index
    %c0_150 = arith.constant 0 : index
    %c0_151 = arith.constant 0 : index
    %574 = vector.load %arg3[%c79, %c0_150, %c0_151] : memref<98x1x256xf32, #tpu.memory_space<vmem>>, vector<1x1x256xf32>
    %575 = vector.shape_cast %574 : vector<1x1x256xf32> to vector<1x256xf32>
    %576 = vector.broadcast %575 : vector<1x256xf32> to vector<2x256xf32>
    %577 = arith.mulf %573, %576 : vector<2x256xf32>
    %578 = arith.addf %570, %577 : vector<2x256xf32>
    %579 = arith.addf %563, %578 : vector<2x256xf32>
    %580 = vector.extract_strided_slice %87 {offsets = [0, 16], sizes = [2, 240], strides = [1, 1]} : vector<2x256xf32> to vector<2x240xf32>
    %581 = vector.extract_strided_slice %87 {offsets = [0, 0], sizes = [2, 16], strides = [1, 1]} : vector<2x256xf32> to vector<2x16xf32>
    %582 = tpu.concatenate %580, %581 in 1 : vector<2x240xf32>, vector<2x16xf32> -> vector<2x256xf32>
    %c31 = arith.constant 31 : index
    %c0_152 = arith.constant 0 : index
    %c0_153 = arith.constant 0 : index
    %583 = vector.load %arg3[%c31, %c0_152, %c0_153] : memref<98x1x256xf32, #tpu.memory_space<vmem>>, vector<1x1x256xf32>
    %584 = vector.shape_cast %583 : vector<1x1x256xf32> to vector<1x256xf32>
    %585 = vector.broadcast %584 : vector<1x256xf32> to vector<2x256xf32>
    %586 = arith.mulf %582, %585 : vector<2x256xf32>
    %587 = vector.extract_strided_slice %88 {offsets = [0, 16], sizes = [2, 240], strides = [1, 1]} : vector<2x256xf32> to vector<2x240xf32>
    %588 = vector.extract_strided_slice %88 {offsets = [0, 0], sizes = [2, 16], strides = [1, 1]} : vector<2x256xf32> to vector<2x16xf32>
    %589 = tpu.concatenate %587, %588 in 1 : vector<2x240xf32>, vector<2x16xf32> -> vector<2x256xf32>
    %c80 = arith.constant 80 : index
    %c0_154 = arith.constant 0 : index
    %c0_155 = arith.constant 0 : index
    %590 = vector.load %arg3[%c80, %c0_154, %c0_155] : memref<98x1x256xf32, #tpu.memory_space<vmem>>, vector<1x1x256xf32>
    %591 = vector.shape_cast %590 : vector<1x1x256xf32> to vector<1x256xf32>
    %592 = vector.broadcast %591 : vector<1x256xf32> to vector<2x256xf32>
    %593 = arith.mulf %589, %592 : vector<2x256xf32>
    %594 = arith.addf %586, %593 : vector<2x256xf32>
    %595 = arith.addf %579, %594 : vector<2x256xf32>
    %596 = vector.extract_strided_slice %87 {offsets = [0, 17], sizes = [2, 239], strides = [1, 1]} : vector<2x256xf32> to vector<2x239xf32>
    %597 = vector.extract_strided_slice %87 {offsets = [0, 0], sizes = [2, 17], strides = [1, 1]} : vector<2x256xf32> to vector<2x17xf32>
    %598 = tpu.concatenate %596, %597 in 1 : vector<2x239xf32>, vector<2x17xf32> -> vector<2x256xf32>
    %c32 = arith.constant 32 : index
    %c0_156 = arith.constant 0 : index
    %c0_157 = arith.constant 0 : index
    %599 = vector.load %arg3[%c32, %c0_156, %c0_157] : memref<98x1x256xf32, #tpu.memory_space<vmem>>, vector<1x1x256xf32>
    %600 = vector.shape_cast %599 : vector<1x1x256xf32> to vector<1x256xf32>
    %601 = vector.broadcast %600 : vector<1x256xf32> to vector<2x256xf32>
    %602 = arith.mulf %598, %601 : vector<2x256xf32>
    %603 = vector.extract_strided_slice %88 {offsets = [0, 17], sizes = [2, 239], strides = [1, 1]} : vector<2x256xf32> to vector<2x239xf32>
    %604 = vector.extract_strided_slice %88 {offsets = [0, 0], sizes = [2, 17], strides = [1, 1]} : vector<2x256xf32> to vector<2x17xf32>
    %605 = tpu.concatenate %603, %604 in 1 : vector<2x239xf32>, vector<2x17xf32> -> vector<2x256xf32>
    %c81 = arith.constant 81 : index
    %c0_158 = arith.constant 0 : index
    %c0_159 = arith.constant 0 : index
    %606 = vector.load %arg3[%c81, %c0_158, %c0_159] : memref<98x1x256xf32, #tpu.memory_space<vmem>>, vector<1x1x256xf32>
    %607 = vector.shape_cast %606 : vector<1x1x256xf32> to vector<1x256xf32>
    %608 = vector.broadcast %607 : vector<1x256xf32> to vector<2x256xf32>
    %609 = arith.mulf %605, %608 : vector<2x256xf32>
    %610 = arith.addf %602, %609 : vector<2x256xf32>
    %611 = arith.addf %595, %610 : vector<2x256xf32>
    %612 = vector.extract_strided_slice %87 {offsets = [0, 18], sizes = [2, 238], strides = [1, 1]} : vector<2x256xf32> to vector<2x238xf32>
    %613 = vector.extract_strided_slice %87 {offsets = [0, 0], sizes = [2, 18], strides = [1, 1]} : vector<2x256xf32> to vector<2x18xf32>
    %614 = tpu.concatenate %612, %613 in 1 : vector<2x238xf32>, vector<2x18xf32> -> vector<2x256xf32>
    %c33 = arith.constant 33 : index
    %c0_160 = arith.constant 0 : index
    %c0_161 = arith.constant 0 : index
    %615 = vector.load %arg3[%c33, %c0_160, %c0_161] : memref<98x1x256xf32, #tpu.memory_space<vmem>>, vector<1x1x256xf32>
    %616 = vector.shape_cast %615 : vector<1x1x256xf32> to vector<1x256xf32>
    %617 = vector.broadcast %616 : vector<1x256xf32> to vector<2x256xf32>
    %618 = arith.mulf %614, %617 : vector<2x256xf32>
    %619 = vector.extract_strided_slice %88 {offsets = [0, 18], sizes = [2, 238], strides = [1, 1]} : vector<2x256xf32> to vector<2x238xf32>
    %620 = vector.extract_strided_slice %88 {offsets = [0, 0], sizes = [2, 18], strides = [1, 1]} : vector<2x256xf32> to vector<2x18xf32>
    %621 = tpu.concatenate %619, %620 in 1 : vector<2x238xf32>, vector<2x18xf32> -> vector<2x256xf32>
    %c82 = arith.constant 82 : index
    %c0_162 = arith.constant 0 : index
    %c0_163 = arith.constant 0 : index
    %622 = vector.load %arg3[%c82, %c0_162, %c0_163] : memref<98x1x256xf32, #tpu.memory_space<vmem>>, vector<1x1x256xf32>
    %623 = vector.shape_cast %622 : vector<1x1x256xf32> to vector<1x256xf32>
    %624 = vector.broadcast %623 : vector<1x256xf32> to vector<2x256xf32>
    %625 = arith.mulf %621, %624 : vector<2x256xf32>
    %626 = arith.addf %618, %625 : vector<2x256xf32>
    %627 = arith.addf %611, %626 : vector<2x256xf32>
    %628 = vector.extract_strided_slice %87 {offsets = [0, 19], sizes = [2, 237], strides = [1, 1]} : vector<2x256xf32> to vector<2x237xf32>
    %629 = vector.extract_strided_slice %87 {offsets = [0, 0], sizes = [2, 19], strides = [1, 1]} : vector<2x256xf32> to vector<2x19xf32>
    %630 = tpu.concatenate %628, %629 in 1 : vector<2x237xf32>, vector<2x19xf32> -> vector<2x256xf32>
    %c34 = arith.constant 34 : index
    %c0_164 = arith.constant 0 : index
    %c0_165 = arith.constant 0 : index
    %631 = vector.load %arg3[%c34, %c0_164, %c0_165] : memref<98x1x256xf32, #tpu.memory_space<vmem>>, vector<1x1x256xf32>
    %632 = vector.shape_cast %631 : vector<1x1x256xf32> to vector<1x256xf32>
    %633 = vector.broadcast %632 : vector<1x256xf32> to vector<2x256xf32>
    %634 = arith.mulf %630, %633 : vector<2x256xf32>
    %635 = vector.extract_strided_slice %88 {offsets = [0, 19], sizes = [2, 237], strides = [1, 1]} : vector<2x256xf32> to vector<2x237xf32>
    %636 = vector.extract_strided_slice %88 {offsets = [0, 0], sizes = [2, 19], strides = [1, 1]} : vector<2x256xf32> to vector<2x19xf32>
    %637 = tpu.concatenate %635, %636 in 1 : vector<2x237xf32>, vector<2x19xf32> -> vector<2x256xf32>
    %c83 = arith.constant 83 : index
    %c0_166 = arith.constant 0 : index
    %c0_167 = arith.constant 0 : index
    %638 = vector.load %arg3[%c83, %c0_166, %c0_167] : memref<98x1x256xf32, #tpu.memory_space<vmem>>, vector<1x1x256xf32>
    %639 = vector.shape_cast %638 : vector<1x1x256xf32> to vector<1x256xf32>
    %640 = vector.broadcast %639 : vector<1x256xf32> to vector<2x256xf32>
    %641 = arith.mulf %637, %640 : vector<2x256xf32>
    %642 = arith.addf %634, %641 : vector<2x256xf32>
    %643 = arith.addf %627, %642 : vector<2x256xf32>
    %644 = vector.extract_strided_slice %87 {offsets = [0, 29], sizes = [2, 227], strides = [1, 1]} : vector<2x256xf32> to vector<2x227xf32>
    %645 = vector.extract_strided_slice %87 {offsets = [0, 0], sizes = [2, 29], strides = [1, 1]} : vector<2x256xf32> to vector<2x29xf32>
    %646 = tpu.concatenate %644, %645 in 1 : vector<2x227xf32>, vector<2x29xf32> -> vector<2x256xf32>
    %c35 = arith.constant 35 : index
    %c0_168 = arith.constant 0 : index
    %c0_169 = arith.constant 0 : index
    %647 = vector.load %arg3[%c35, %c0_168, %c0_169] : memref<98x1x256xf32, #tpu.memory_space<vmem>>, vector<1x1x256xf32>
    %648 = vector.shape_cast %647 : vector<1x1x256xf32> to vector<1x256xf32>
    %649 = vector.broadcast %648 : vector<1x256xf32> to vector<2x256xf32>
    %650 = arith.mulf %646, %649 : vector<2x256xf32>
    %651 = vector.extract_strided_slice %88 {offsets = [0, 29], sizes = [2, 227], strides = [1, 1]} : vector<2x256xf32> to vector<2x227xf32>
    %652 = vector.extract_strided_slice %88 {offsets = [0, 0], sizes = [2, 29], strides = [1, 1]} : vector<2x256xf32> to vector<2x29xf32>
    %653 = tpu.concatenate %651, %652 in 1 : vector<2x227xf32>, vector<2x29xf32> -> vector<2x256xf32>
    %c84 = arith.constant 84 : index
    %c0_170 = arith.constant 0 : index
    %c0_171 = arith.constant 0 : index
    %654 = vector.load %arg3[%c84, %c0_170, %c0_171] : memref<98x1x256xf32, #tpu.memory_space<vmem>>, vector<1x1x256xf32>
    %655 = vector.shape_cast %654 : vector<1x1x256xf32> to vector<1x256xf32>
    %656 = vector.broadcast %655 : vector<1x256xf32> to vector<2x256xf32>
    %657 = arith.mulf %653, %656 : vector<2x256xf32>
    %658 = arith.addf %650, %657 : vector<2x256xf32>
    %659 = arith.addf %643, %658 : vector<2x256xf32>
    %660 = vector.extract_strided_slice %87 {offsets = [0, 30], sizes = [2, 226], strides = [1, 1]} : vector<2x256xf32> to vector<2x226xf32>
    %661 = vector.extract_strided_slice %87 {offsets = [0, 0], sizes = [2, 30], strides = [1, 1]} : vector<2x256xf32> to vector<2x30xf32>
    %662 = tpu.concatenate %660, %661 in 1 : vector<2x226xf32>, vector<2x30xf32> -> vector<2x256xf32>
    %c36 = arith.constant 36 : index
    %c0_172 = arith.constant 0 : index
    %c0_173 = arith.constant 0 : index
    %663 = vector.load %arg3[%c36, %c0_172, %c0_173] : memref<98x1x256xf32, #tpu.memory_space<vmem>>, vector<1x1x256xf32>
    %664 = vector.shape_cast %663 : vector<1x1x256xf32> to vector<1x256xf32>
    %665 = vector.broadcast %664 : vector<1x256xf32> to vector<2x256xf32>
    %666 = arith.mulf %662, %665 : vector<2x256xf32>
    %667 = vector.extract_strided_slice %88 {offsets = [0, 30], sizes = [2, 226], strides = [1, 1]} : vector<2x256xf32> to vector<2x226xf32>
    %668 = vector.extract_strided_slice %88 {offsets = [0, 0], sizes = [2, 30], strides = [1, 1]} : vector<2x256xf32> to vector<2x30xf32>
    %669 = tpu.concatenate %667, %668 in 1 : vector<2x226xf32>, vector<2x30xf32> -> vector<2x256xf32>
    %c85 = arith.constant 85 : index
    %c0_174 = arith.constant 0 : index
    %c0_175 = arith.constant 0 : index
    %670 = vector.load %arg3[%c85, %c0_174, %c0_175] : memref<98x1x256xf32, #tpu.memory_space<vmem>>, vector<1x1x256xf32>
    %671 = vector.shape_cast %670 : vector<1x1x256xf32> to vector<1x256xf32>
    %672 = vector.broadcast %671 : vector<1x256xf32> to vector<2x256xf32>
    %673 = arith.mulf %669, %672 : vector<2x256xf32>
    %674 = arith.addf %666, %673 : vector<2x256xf32>
    %675 = arith.addf %659, %674 : vector<2x256xf32>
    %676 = vector.extract_strided_slice %87 {offsets = [0, 31], sizes = [2, 225], strides = [1, 1]} : vector<2x256xf32> to vector<2x225xf32>
    %677 = vector.extract_strided_slice %87 {offsets = [0, 0], sizes = [2, 31], strides = [1, 1]} : vector<2x256xf32> to vector<2x31xf32>
    %678 = tpu.concatenate %676, %677 in 1 : vector<2x225xf32>, vector<2x31xf32> -> vector<2x256xf32>
    %c37 = arith.constant 37 : index
    %c0_176 = arith.constant 0 : index
    %c0_177 = arith.constant 0 : index
    %679 = vector.load %arg3[%c37, %c0_176, %c0_177] : memref<98x1x256xf32, #tpu.memory_space<vmem>>, vector<1x1x256xf32>
    %680 = vector.shape_cast %679 : vector<1x1x256xf32> to vector<1x256xf32>
    %681 = vector.broadcast %680 : vector<1x256xf32> to vector<2x256xf32>
    %682 = arith.mulf %678, %681 : vector<2x256xf32>
    %683 = vector.extract_strided_slice %88 {offsets = [0, 31], sizes = [2, 225], strides = [1, 1]} : vector<2x256xf32> to vector<2x225xf32>
    %684 = vector.extract_strided_slice %88 {offsets = [0, 0], sizes = [2, 31], strides = [1, 1]} : vector<2x256xf32> to vector<2x31xf32>
    %685 = tpu.concatenate %683, %684 in 1 : vector<2x225xf32>, vector<2x31xf32> -> vector<2x256xf32>
    %c86 = arith.constant 86 : index
    %c0_178 = arith.constant 0 : index
    %c0_179 = arith.constant 0 : index
    %686 = vector.load %arg3[%c86, %c0_178, %c0_179] : memref<98x1x256xf32, #tpu.memory_space<vmem>>, vector<1x1x256xf32>
    %687 = vector.shape_cast %686 : vector<1x1x256xf32> to vector<1x256xf32>
    %688 = vector.broadcast %687 : vector<1x256xf32> to vector<2x256xf32>
    %689 = arith.mulf %685, %688 : vector<2x256xf32>
    %690 = arith.addf %682, %689 : vector<2x256xf32>
    %691 = arith.addf %675, %690 : vector<2x256xf32>
    %692 = vector.extract_strided_slice %87 {offsets = [0, 32], sizes = [2, 224], strides = [1, 1]} : vector<2x256xf32> to vector<2x224xf32>
    %693 = vector.extract_strided_slice %87 {offsets = [0, 0], sizes = [2, 32], strides = [1, 1]} : vector<2x256xf32> to vector<2x32xf32>
    %694 = tpu.concatenate %692, %693 in 1 : vector<2x224xf32>, vector<2x32xf32> -> vector<2x256xf32>
    %c38 = arith.constant 38 : index
    %c0_180 = arith.constant 0 : index
    %c0_181 = arith.constant 0 : index
    %695 = vector.load %arg3[%c38, %c0_180, %c0_181] : memref<98x1x256xf32, #tpu.memory_space<vmem>>, vector<1x1x256xf32>
    %696 = vector.shape_cast %695 : vector<1x1x256xf32> to vector<1x256xf32>
    %697 = vector.broadcast %696 : vector<1x256xf32> to vector<2x256xf32>
    %698 = arith.mulf %694, %697 : vector<2x256xf32>
    %699 = vector.extract_strided_slice %88 {offsets = [0, 32], sizes = [2, 224], strides = [1, 1]} : vector<2x256xf32> to vector<2x224xf32>
    %700 = vector.extract_strided_slice %88 {offsets = [0, 0], sizes = [2, 32], strides = [1, 1]} : vector<2x256xf32> to vector<2x32xf32>
    %701 = tpu.concatenate %699, %700 in 1 : vector<2x224xf32>, vector<2x32xf32> -> vector<2x256xf32>
    %c87 = arith.constant 87 : index
    %c0_182 = arith.constant 0 : index
    %c0_183 = arith.constant 0 : index
    %702 = vector.load %arg3[%c87, %c0_182, %c0_183] : memref<98x1x256xf32, #tpu.memory_space<vmem>>, vector<1x1x256xf32>
    %703 = vector.shape_cast %702 : vector<1x1x256xf32> to vector<1x256xf32>
    %704 = vector.broadcast %703 : vector<1x256xf32> to vector<2x256xf32>
    %705 = arith.mulf %701, %704 : vector<2x256xf32>
    %706 = arith.addf %698, %705 : vector<2x256xf32>
    %707 = arith.addf %691, %706 : vector<2x256xf32>
    %708 = vector.extract_strided_slice %87 {offsets = [0, 33], sizes = [2, 223], strides = [1, 1]} : vector<2x256xf32> to vector<2x223xf32>
    %709 = vector.extract_strided_slice %87 {offsets = [0, 0], sizes = [2, 33], strides = [1, 1]} : vector<2x256xf32> to vector<2x33xf32>
    %710 = tpu.concatenate %708, %709 in 1 : vector<2x223xf32>, vector<2x33xf32> -> vector<2x256xf32>
    %c39 = arith.constant 39 : index
    %c0_184 = arith.constant 0 : index
    %c0_185 = arith.constant 0 : index
    %711 = vector.load %arg3[%c39, %c0_184, %c0_185] : memref<98x1x256xf32, #tpu.memory_space<vmem>>, vector<1x1x256xf32>
    %712 = vector.shape_cast %711 : vector<1x1x256xf32> to vector<1x256xf32>
    %713 = vector.broadcast %712 : vector<1x256xf32> to vector<2x256xf32>
    %714 = arith.mulf %710, %713 : vector<2x256xf32>
    %715 = vector.extract_strided_slice %88 {offsets = [0, 33], sizes = [2, 223], strides = [1, 1]} : vector<2x256xf32> to vector<2x223xf32>
    %716 = vector.extract_strided_slice %88 {offsets = [0, 0], sizes = [2, 33], strides = [1, 1]} : vector<2x256xf32> to vector<2x33xf32>
    %717 = tpu.concatenate %715, %716 in 1 : vector<2x223xf32>, vector<2x33xf32> -> vector<2x256xf32>
    %c88 = arith.constant 88 : index
    %c0_186 = arith.constant 0 : index
    %c0_187 = arith.constant 0 : index
    %718 = vector.load %arg3[%c88, %c0_186, %c0_187] : memref<98x1x256xf32, #tpu.memory_space<vmem>>, vector<1x1x256xf32>
    %719 = vector.shape_cast %718 : vector<1x1x256xf32> to vector<1x256xf32>
    %720 = vector.broadcast %719 : vector<1x256xf32> to vector<2x256xf32>
    %721 = arith.mulf %717, %720 : vector<2x256xf32>
    %722 = arith.addf %714, %721 : vector<2x256xf32>
    %723 = arith.addf %707, %722 : vector<2x256xf32>
    %724 = vector.extract_strided_slice %87 {offsets = [0, 34], sizes = [2, 222], strides = [1, 1]} : vector<2x256xf32> to vector<2x222xf32>
    %725 = vector.extract_strided_slice %87 {offsets = [0, 0], sizes = [2, 34], strides = [1, 1]} : vector<2x256xf32> to vector<2x34xf32>
    %726 = tpu.concatenate %724, %725 in 1 : vector<2x222xf32>, vector<2x34xf32> -> vector<2x256xf32>
    %c40 = arith.constant 40 : index
    %c0_188 = arith.constant 0 : index
    %c0_189 = arith.constant 0 : index
    %727 = vector.load %arg3[%c40, %c0_188, %c0_189] : memref<98x1x256xf32, #tpu.memory_space<vmem>>, vector<1x1x256xf32>
    %728 = vector.shape_cast %727 : vector<1x1x256xf32> to vector<1x256xf32>
    %729 = vector.broadcast %728 : vector<1x256xf32> to vector<2x256xf32>
    %730 = arith.mulf %726, %729 : vector<2x256xf32>
    %731 = vector.extract_strided_slice %88 {offsets = [0, 34], sizes = [2, 222], strides = [1, 1]} : vector<2x256xf32> to vector<2x222xf32>
    %732 = vector.extract_strided_slice %88 {offsets = [0, 0], sizes = [2, 34], strides = [1, 1]} : vector<2x256xf32> to vector<2x34xf32>
    %733 = tpu.concatenate %731, %732 in 1 : vector<2x222xf32>, vector<2x34xf32> -> vector<2x256xf32>
    %c89 = arith.constant 89 : index
    %c0_190 = arith.constant 0 : index
    %c0_191 = arith.constant 0 : index
    %734 = vector.load %arg3[%c89, %c0_190, %c0_191] : memref<98x1x256xf32, #tpu.memory_space<vmem>>, vector<1x1x256xf32>
    %735 = vector.shape_cast %734 : vector<1x1x256xf32> to vector<1x256xf32>
    %736 = vector.broadcast %735 : vector<1x256xf32> to vector<2x256xf32>
    %737 = arith.mulf %733, %736 : vector<2x256xf32>
    %738 = arith.addf %730, %737 : vector<2x256xf32>
    %739 = arith.addf %723, %738 : vector<2x256xf32>
    %740 = vector.extract_strided_slice %87 {offsets = [0, 35], sizes = [2, 221], strides = [1, 1]} : vector<2x256xf32> to vector<2x221xf32>
    %741 = vector.extract_strided_slice %87 {offsets = [0, 0], sizes = [2, 35], strides = [1, 1]} : vector<2x256xf32> to vector<2x35xf32>
    %742 = tpu.concatenate %740, %741 in 1 : vector<2x221xf32>, vector<2x35xf32> -> vector<2x256xf32>
    %c41 = arith.constant 41 : index
    %c0_192 = arith.constant 0 : index
    %c0_193 = arith.constant 0 : index
    %743 = vector.load %arg3[%c41, %c0_192, %c0_193] : memref<98x1x256xf32, #tpu.memory_space<vmem>>, vector<1x1x256xf32>
    %744 = vector.shape_cast %743 : vector<1x1x256xf32> to vector<1x256xf32>
    %745 = vector.broadcast %744 : vector<1x256xf32> to vector<2x256xf32>
    %746 = arith.mulf %742, %745 : vector<2x256xf32>
    %747 = vector.extract_strided_slice %88 {offsets = [0, 35], sizes = [2, 221], strides = [1, 1]} : vector<2x256xf32> to vector<2x221xf32>
    %748 = vector.extract_strided_slice %88 {offsets = [0, 0], sizes = [2, 35], strides = [1, 1]} : vector<2x256xf32> to vector<2x35xf32>
    %749 = tpu.concatenate %747, %748 in 1 : vector<2x221xf32>, vector<2x35xf32> -> vector<2x256xf32>
    %c90 = arith.constant 90 : index
    %c0_194 = arith.constant 0 : index
    %c0_195 = arith.constant 0 : index
    %750 = vector.load %arg3[%c90, %c0_194, %c0_195] : memref<98x1x256xf32, #tpu.memory_space<vmem>>, vector<1x1x256xf32>
    %751 = vector.shape_cast %750 : vector<1x1x256xf32> to vector<1x256xf32>
    %752 = vector.broadcast %751 : vector<1x256xf32> to vector<2x256xf32>
    %753 = arith.mulf %749, %752 : vector<2x256xf32>
    %754 = arith.addf %746, %753 : vector<2x256xf32>
    %755 = arith.addf %739, %754 : vector<2x256xf32>
    %756 = vector.extract_strided_slice %87 {offsets = [0, 45], sizes = [2, 211], strides = [1, 1]} : vector<2x256xf32> to vector<2x211xf32>
    %757 = vector.extract_strided_slice %87 {offsets = [0, 0], sizes = [2, 45], strides = [1, 1]} : vector<2x256xf32> to vector<2x45xf32>
    %758 = tpu.concatenate %756, %757 in 1 : vector<2x211xf32>, vector<2x45xf32> -> vector<2x256xf32>
    %c42 = arith.constant 42 : index
    %c0_196 = arith.constant 0 : index
    %c0_197 = arith.constant 0 : index
    %759 = vector.load %arg3[%c42, %c0_196, %c0_197] : memref<98x1x256xf32, #tpu.memory_space<vmem>>, vector<1x1x256xf32>
    %760 = vector.shape_cast %759 : vector<1x1x256xf32> to vector<1x256xf32>
    %761 = vector.broadcast %760 : vector<1x256xf32> to vector<2x256xf32>
    %762 = arith.mulf %758, %761 : vector<2x256xf32>
    %763 = vector.extract_strided_slice %88 {offsets = [0, 45], sizes = [2, 211], strides = [1, 1]} : vector<2x256xf32> to vector<2x211xf32>
    %764 = vector.extract_strided_slice %88 {offsets = [0, 0], sizes = [2, 45], strides = [1, 1]} : vector<2x256xf32> to vector<2x45xf32>
    %765 = tpu.concatenate %763, %764 in 1 : vector<2x211xf32>, vector<2x45xf32> -> vector<2x256xf32>
    %c91 = arith.constant 91 : index
    %c0_198 = arith.constant 0 : index
    %c0_199 = arith.constant 0 : index
    %766 = vector.load %arg3[%c91, %c0_198, %c0_199] : memref<98x1x256xf32, #tpu.memory_space<vmem>>, vector<1x1x256xf32>
    %767 = vector.shape_cast %766 : vector<1x1x256xf32> to vector<1x256xf32>
    %768 = vector.broadcast %767 : vector<1x256xf32> to vector<2x256xf32>
    %769 = arith.mulf %765, %768 : vector<2x256xf32>
    %770 = arith.addf %762, %769 : vector<2x256xf32>
    %771 = arith.addf %755, %770 : vector<2x256xf32>
    %772 = vector.extract_strided_slice %87 {offsets = [0, 46], sizes = [2, 210], strides = [1, 1]} : vector<2x256xf32> to vector<2x210xf32>
    %773 = vector.extract_strided_slice %87 {offsets = [0, 0], sizes = [2, 46], strides = [1, 1]} : vector<2x256xf32> to vector<2x46xf32>
    %774 = tpu.concatenate %772, %773 in 1 : vector<2x210xf32>, vector<2x46xf32> -> vector<2x256xf32>
    %c43 = arith.constant 43 : index
    %c0_200 = arith.constant 0 : index
    %c0_201 = arith.constant 0 : index
    %775 = vector.load %arg3[%c43, %c0_200, %c0_201] : memref<98x1x256xf32, #tpu.memory_space<vmem>>, vector<1x1x256xf32>
    %776 = vector.shape_cast %775 : vector<1x1x256xf32> to vector<1x256xf32>
    %777 = vector.broadcast %776 : vector<1x256xf32> to vector<2x256xf32>
    %778 = arith.mulf %774, %777 : vector<2x256xf32>
    %779 = vector.extract_strided_slice %88 {offsets = [0, 46], sizes = [2, 210], strides = [1, 1]} : vector<2x256xf32> to vector<2x210xf32>
    %780 = vector.extract_strided_slice %88 {offsets = [0, 0], sizes = [2, 46], strides = [1, 1]} : vector<2x256xf32> to vector<2x46xf32>
    %781 = tpu.concatenate %779, %780 in 1 : vector<2x210xf32>, vector<2x46xf32> -> vector<2x256xf32>
    %c92 = arith.constant 92 : index
    %c0_202 = arith.constant 0 : index
    %c0_203 = arith.constant 0 : index
    %782 = vector.load %arg3[%c92, %c0_202, %c0_203] : memref<98x1x256xf32, #tpu.memory_space<vmem>>, vector<1x1x256xf32>
    %783 = vector.shape_cast %782 : vector<1x1x256xf32> to vector<1x256xf32>
    %784 = vector.broadcast %783 : vector<1x256xf32> to vector<2x256xf32>
    %785 = arith.mulf %781, %784 : vector<2x256xf32>
    %786 = arith.addf %778, %785 : vector<2x256xf32>
    %787 = arith.addf %771, %786 : vector<2x256xf32>
    %788 = vector.extract_strided_slice %87 {offsets = [0, 47], sizes = [2, 209], strides = [1, 1]} : vector<2x256xf32> to vector<2x209xf32>
    %789 = vector.extract_strided_slice %87 {offsets = [0, 0], sizes = [2, 47], strides = [1, 1]} : vector<2x256xf32> to vector<2x47xf32>
    %790 = tpu.concatenate %788, %789 in 1 : vector<2x209xf32>, vector<2x47xf32> -> vector<2x256xf32>
    %c44 = arith.constant 44 : index
    %c0_204 = arith.constant 0 : index
    %c0_205 = arith.constant 0 : index
    %791 = vector.load %arg3[%c44, %c0_204, %c0_205] : memref<98x1x256xf32, #tpu.memory_space<vmem>>, vector<1x1x256xf32>
    %792 = vector.shape_cast %791 : vector<1x1x256xf32> to vector<1x256xf32>
    %793 = vector.broadcast %792 : vector<1x256xf32> to vector<2x256xf32>
    %794 = arith.mulf %790, %793 : vector<2x256xf32>
    %795 = vector.extract_strided_slice %88 {offsets = [0, 47], sizes = [2, 209], strides = [1, 1]} : vector<2x256xf32> to vector<2x209xf32>
    %796 = vector.extract_strided_slice %88 {offsets = [0, 0], sizes = [2, 47], strides = [1, 1]} : vector<2x256xf32> to vector<2x47xf32>
    %797 = tpu.concatenate %795, %796 in 1 : vector<2x209xf32>, vector<2x47xf32> -> vector<2x256xf32>
    %c93 = arith.constant 93 : index
    %c0_206 = arith.constant 0 : index
    %c0_207 = arith.constant 0 : index
    %798 = vector.load %arg3[%c93, %c0_206, %c0_207] : memref<98x1x256xf32, #tpu.memory_space<vmem>>, vector<1x1x256xf32>
    %799 = vector.shape_cast %798 : vector<1x1x256xf32> to vector<1x256xf32>
    %800 = vector.broadcast %799 : vector<1x256xf32> to vector<2x256xf32>
    %801 = arith.mulf %797, %800 : vector<2x256xf32>
    %802 = arith.addf %794, %801 : vector<2x256xf32>
    %803 = arith.addf %787, %802 : vector<2x256xf32>
    %804 = vector.extract_strided_slice %87 {offsets = [0, 48], sizes = [2, 208], strides = [1, 1]} : vector<2x256xf32> to vector<2x208xf32>
    %805 = vector.extract_strided_slice %87 {offsets = [0, 0], sizes = [2, 48], strides = [1, 1]} : vector<2x256xf32> to vector<2x48xf32>
    %806 = tpu.concatenate %804, %805 in 1 : vector<2x208xf32>, vector<2x48xf32> -> vector<2x256xf32>
    %c45 = arith.constant 45 : index
    %c0_208 = arith.constant 0 : index
    %c0_209 = arith.constant 0 : index
    %807 = vector.load %arg3[%c45, %c0_208, %c0_209] : memref<98x1x256xf32, #tpu.memory_space<vmem>>, vector<1x1x256xf32>
    %808 = vector.shape_cast %807 : vector<1x1x256xf32> to vector<1x256xf32>
    %809 = vector.broadcast %808 : vector<1x256xf32> to vector<2x256xf32>
    %810 = arith.mulf %806, %809 : vector<2x256xf32>
    %811 = vector.extract_strided_slice %88 {offsets = [0, 48], sizes = [2, 208], strides = [1, 1]} : vector<2x256xf32> to vector<2x208xf32>
    %812 = vector.extract_strided_slice %88 {offsets = [0, 0], sizes = [2, 48], strides = [1, 1]} : vector<2x256xf32> to vector<2x48xf32>
    %813 = tpu.concatenate %811, %812 in 1 : vector<2x208xf32>, vector<2x48xf32> -> vector<2x256xf32>
    %c94 = arith.constant 94 : index
    %c0_210 = arith.constant 0 : index
    %c0_211 = arith.constant 0 : index
    %814 = vector.load %arg3[%c94, %c0_210, %c0_211] : memref<98x1x256xf32, #tpu.memory_space<vmem>>, vector<1x1x256xf32>
    %815 = vector.shape_cast %814 : vector<1x1x256xf32> to vector<1x256xf32>
    %816 = vector.broadcast %815 : vector<1x256xf32> to vector<2x256xf32>
    %817 = arith.mulf %813, %816 : vector<2x256xf32>
    %818 = arith.addf %810, %817 : vector<2x256xf32>
    %819 = arith.addf %803, %818 : vector<2x256xf32>
    %820 = vector.extract_strided_slice %87 {offsets = [0, 49], sizes = [2, 207], strides = [1, 1]} : vector<2x256xf32> to vector<2x207xf32>
    %821 = vector.extract_strided_slice %87 {offsets = [0, 0], sizes = [2, 49], strides = [1, 1]} : vector<2x256xf32> to vector<2x49xf32>
    %822 = tpu.concatenate %820, %821 in 1 : vector<2x207xf32>, vector<2x49xf32> -> vector<2x256xf32>
    %c46 = arith.constant 46 : index
    %c0_212 = arith.constant 0 : index
    %c0_213 = arith.constant 0 : index
    %823 = vector.load %arg3[%c46, %c0_212, %c0_213] : memref<98x1x256xf32, #tpu.memory_space<vmem>>, vector<1x1x256xf32>
    %824 = vector.shape_cast %823 : vector<1x1x256xf32> to vector<1x256xf32>
    %825 = vector.broadcast %824 : vector<1x256xf32> to vector<2x256xf32>
    %826 = arith.mulf %822, %825 : vector<2x256xf32>
    %827 = vector.extract_strided_slice %88 {offsets = [0, 49], sizes = [2, 207], strides = [1, 1]} : vector<2x256xf32> to vector<2x207xf32>
    %828 = vector.extract_strided_slice %88 {offsets = [0, 0], sizes = [2, 49], strides = [1, 1]} : vector<2x256xf32> to vector<2x49xf32>
    %829 = tpu.concatenate %827, %828 in 1 : vector<2x207xf32>, vector<2x49xf32> -> vector<2x256xf32>
    %c95 = arith.constant 95 : index
    %c0_214 = arith.constant 0 : index
    %c0_215 = arith.constant 0 : index
    %830 = vector.load %arg3[%c95, %c0_214, %c0_215] : memref<98x1x256xf32, #tpu.memory_space<vmem>>, vector<1x1x256xf32>
    %831 = vector.shape_cast %830 : vector<1x1x256xf32> to vector<1x256xf32>
    %832 = vector.broadcast %831 : vector<1x256xf32> to vector<2x256xf32>
    %833 = arith.mulf %829, %832 : vector<2x256xf32>
    %834 = arith.addf %826, %833 : vector<2x256xf32>
    %835 = arith.addf %819, %834 : vector<2x256xf32>
    %836 = vector.extract_strided_slice %87 {offsets = [0, 50], sizes = [2, 206], strides = [1, 1]} : vector<2x256xf32> to vector<2x206xf32>
    %837 = vector.extract_strided_slice %87 {offsets = [0, 0], sizes = [2, 50], strides = [1, 1]} : vector<2x256xf32> to vector<2x50xf32>
    %838 = tpu.concatenate %836, %837 in 1 : vector<2x206xf32>, vector<2x50xf32> -> vector<2x256xf32>
    %c47 = arith.constant 47 : index
    %c0_216 = arith.constant 0 : index
    %c0_217 = arith.constant 0 : index
    %839 = vector.load %arg3[%c47, %c0_216, %c0_217] : memref<98x1x256xf32, #tpu.memory_space<vmem>>, vector<1x1x256xf32>
    %840 = vector.shape_cast %839 : vector<1x1x256xf32> to vector<1x256xf32>
    %841 = vector.broadcast %840 : vector<1x256xf32> to vector<2x256xf32>
    %842 = arith.mulf %838, %841 : vector<2x256xf32>
    %843 = vector.extract_strided_slice %88 {offsets = [0, 50], sizes = [2, 206], strides = [1, 1]} : vector<2x256xf32> to vector<2x206xf32>
    %844 = vector.extract_strided_slice %88 {offsets = [0, 0], sizes = [2, 50], strides = [1, 1]} : vector<2x256xf32> to vector<2x50xf32>
    %845 = tpu.concatenate %843, %844 in 1 : vector<2x206xf32>, vector<2x50xf32> -> vector<2x256xf32>
    %c96 = arith.constant 96 : index
    %c0_218 = arith.constant 0 : index
    %c0_219 = arith.constant 0 : index
    %846 = vector.load %arg3[%c96, %c0_218, %c0_219] : memref<98x1x256xf32, #tpu.memory_space<vmem>>, vector<1x1x256xf32>
    %847 = vector.shape_cast %846 : vector<1x1x256xf32> to vector<1x256xf32>
    %848 = vector.broadcast %847 : vector<1x256xf32> to vector<2x256xf32>
    %849 = arith.mulf %845, %848 : vector<2x256xf32>
    %850 = arith.addf %842, %849 : vector<2x256xf32>
    %851 = arith.addf %835, %850 : vector<2x256xf32>
    %852 = vector.extract_strided_slice %87 {offsets = [0, 51], sizes = [2, 205], strides = [1, 1]} : vector<2x256xf32> to vector<2x205xf32>
    %853 = vector.extract_strided_slice %87 {offsets = [0, 0], sizes = [2, 51], strides = [1, 1]} : vector<2x256xf32> to vector<2x51xf32>
    %854 = tpu.concatenate %852, %853 in 1 : vector<2x205xf32>, vector<2x51xf32> -> vector<2x256xf32>
    %c48 = arith.constant 48 : index
    %c0_220 = arith.constant 0 : index
    %c0_221 = arith.constant 0 : index
    %855 = vector.load %arg3[%c48, %c0_220, %c0_221] : memref<98x1x256xf32, #tpu.memory_space<vmem>>, vector<1x1x256xf32>
    %856 = vector.shape_cast %855 : vector<1x1x256xf32> to vector<1x256xf32>
    %857 = vector.broadcast %856 : vector<1x256xf32> to vector<2x256xf32>
    %858 = arith.mulf %854, %857 : vector<2x256xf32>
    %859 = vector.extract_strided_slice %88 {offsets = [0, 51], sizes = [2, 205], strides = [1, 1]} : vector<2x256xf32> to vector<2x205xf32>
    %860 = vector.extract_strided_slice %88 {offsets = [0, 0], sizes = [2, 51], strides = [1, 1]} : vector<2x256xf32> to vector<2x51xf32>
    %861 = tpu.concatenate %859, %860 in 1 : vector<2x205xf32>, vector<2x51xf32> -> vector<2x256xf32>
    %c97 = arith.constant 97 : index
    %c0_222 = arith.constant 0 : index
    %c0_223 = arith.constant 0 : index
    %862 = vector.load %arg3[%c97, %c0_222, %c0_223] : memref<98x1x256xf32, #tpu.memory_space<vmem>>, vector<1x1x256xf32>
    %863 = vector.shape_cast %862 : vector<1x1x256xf32> to vector<1x256xf32>
    %864 = vector.broadcast %863 : vector<1x256xf32> to vector<2x256xf32>
    %865 = arith.mulf %861, %864 : vector<2x256xf32>
    %866 = arith.addf %858, %865 : vector<2x256xf32>
    %867 = arith.addf %851, %866 : vector<2x256xf32>
    %868 = vector.broadcast %4 : f32 to vector<2x256xf32>
    %869 = arith.mulf %867, %868 : vector<2x256xf32>
    %870 = vector.broadcast %5 : f32 to vector<2x256xf32>
    %871 = arith.addf %869, %870 : vector<2x256xf32>
    %cst_224 = arith.constant 0.000000e+00 : f32
    %872 = vector.broadcast %cst_224 : f32 to vector<2x256xf32>
    %873 = arith.maximumf %871, %872 : vector<2x256xf32>
    %874 = arith.negf %873 : vector<2x256xf32>
    %875 = math.exp %874 : vector<2x256xf32>
    %cst_225 = arith.constant 1.000000e+00 : f32
    %876 = vector.broadcast %cst_225 : f32 to vector<2x256xf32>
    %877 = arith.addf %876, %875 : vector<2x256xf32>
    %878 = arith.divf %876, %877 : vector<2x256xf32>
    %879 = vector.extract_strided_slice %878 {offsets = [0, 0], sizes = [1, 256], strides = [1, 1]} : vector<2x256xf32> to vector<1x256xf32>
    %880 = vector.shape_cast %879 : vector<1x256xf32> to vector<1x1x256xf32>
    %881 = vector.extract_strided_slice %878 {offsets = [1, 0], sizes = [1, 256], strides = [1, 1]} : vector<2x256xf32> to vector<1x256xf32>
    %882 = vector.shape_cast %881 : vector<1x256xf32> to vector<1x1x256xf32>
    %883 = vector.broadcast %880 : vector<1x1x256xf32> to vector<1x8x256xf32>
    %884 = arith.mulf %71, %883 : vector<1x8x256xf32>
    %885 = vector.broadcast %882 : vector<1x1x256xf32> to vector<1x8x256xf32>
    %886 = arith.mulf %74, %885 : vector<1x8x256xf32>
    %887 = arith.addf %884, %886 : vector<1x8x256xf32>
    %888 = arith.addf %887, %0 : vector<1x8x256xf32>
    %cst_226 = arith.constant 0.000000e+00 : f32
    %889 = vector.broadcast %cst_226 : f32 to vector<1x8x256xf32>
    %890 = arith.maximumf %888, %889 : vector<1x8x256xf32>
    %c0_227 = arith.constant 0 : index
    %c0_228 = arith.constant 0 : index
    %c0_229 = arith.constant 0 : index
    %891 = vector.load %arg5[%c0_227, %c0_228, %c0_229] : memref<1x8x256xf32, #tpu.memory_space<vmem>>, vector<1x8x256xf32>
    tpu.vector_store %arg5[%c0_227, %c0_228, %c0_229], %890 {strides = array<i32>} : memref<1x8x256xf32, #tpu.memory_space<vmem>>, vector<1x8x256xf32>,
    return
  }
  func.func @transform_0(%arg0: i32) -> i32 {
    %c0_i32 = arith.constant 0 : i32
    %c0_i32_0 = arith.constant 0 : i32
    return %c0_i32 : i32
  }
  func.func @transform_1(%arg0: i32) -> i32 {
    %c0_i32 = arith.constant 0 : i32
    %c0_i32_0 = arith.constant 0 : i32
    return %c0_i32 : i32
  }
  func.func @transform_2(%arg0: i32) -> (i32, i32, i32) {
    %c0_i32 = arith.constant 0 : i32
    %c0_i32_0 = arith.constant 0 : i32
    %c0_i32_1 = arith.constant 0 : i32
    %c0_i32_2 = arith.constant 0 : i32
    return %c0_i32, %c0_i32_0, %c0_i32_1 : i32, i32, i32
  }
  func.func @transform_3(%arg0: i32) -> (i32, i32, i32) {
    %c0_i32 = arith.constant 0 : i32
    %c0_i32_0 = arith.constant 0 : i32
    %c0_i32_1 = arith.constant 0 : i32
    return %arg0, %c0_i32, %c0_i32_0 : i32, i32, i32
  }
  func.func @transform_4(%arg0: i32) -> (i32, i32, i32) {
    %c0_i32 = arith.constant 0 : i32
    %c0_i32_0 = arith.constant 0 : i32
    %c0_i32_1 = arith.constant 0 : i32
    return %arg0, %c0_i32, %c0_i32_0 : i32, i32, i32
  }
}

</mosaic_0001>

<llo_original>
// kernel: fwd.1
$region0: #{fwd.1}
  #allocation0 [shape = 'u32[]', space=smem, size = 0x4, offset = 0x4, fixed_abs, tag = 'smem constant byte address 0x4 - core index']
  #allocation1 [shape = 'u32[144,128]{1,0:T(1,128)}', space=vmem, size = 0x12000, scoped, tag = 'internal scratch']
  %s0 = inlined_call_operand.vmem [shape: f32[5], index: 0, kind: input, shape index: {}]
  %s1 = inlined_call_operand.vmem [shape: f32[3], index: 1, kind: input, shape index: {}]
  %s2 = inlined_call_operand.vmem [shape: f32[98,1,256], index: 2, kind: input, shape index: {}]
  %s3 = inlined_call_operand.vmem [shape: f32[2,8,256], index: 3, kind: input, shape index: {}]
  %s4 = inlined_call_operand.vmem [shape: f32[2,8,256], index: 4, kind: output, shape index: {}]
  %s5 = sld [smem:[#allocation0]]
  $region57: #{fwd.1} parent=0
    _
  %s7 = ssub.s32 1, %s5
  %s8 = scalar_select 0, %s7, %s5
  $region1: #{fwd.1} parent=0
    #allocation2 [shape = 'u8[512]{0}', space=smem, size = 0x200, scoped, tag = 'input window, operand 0, single buffered']
    #allocation3 [shape = 's32[2]{0}', space=sflag, size = 0x8, scoped, tag = 'scoped memory for fwd.1']
    #allocation4 [shape = 'u8[512]{0}', space=smem, size = 0x200, scoped, tag = 'input window, operand 1, single buffered']
    #allocation5 [shape = 's32[1]{0}', space=sflag, size = 0x4, scoped, tag = 'scoped memory for fwd.1']
    %9 = vsyncpa [#allocation3], 0
    %10 = vsyncpa [#allocation5], 0
    loop: start=0, step=1, limit=4
    $region2: #{fwd.1} parent=1 // loop_pre_header
      _
    $region3: #{fwd.1} parent=1 // loop_header
      %s12 = sphi 0, %s16
      %p13 = scmp.ge.s32.totalorder %s12, 4
      %s20 = sphi 0, %s20
      %s22 = sphi 0, %s20
      %s23 = sphi 0, %s22
      %s37 = sphi 0, %s23
      %s41 = sphi 0, %s41
      %s43 = sphi 0, %s41
      %s44 = sphi 0, %s43
      %s58 = sphi 0, %s44
      %s62 = sphi 0, %s62
      %s64 = sphi 0, %s62
      %s65 = sphi 0, %s64
      %s79 = sphi 0, %s65
      %s85 = sphi 0, %s87
      %s88 = sphi 0, %s85
      %s89 = sphi 0, %s88
      %s105 = sphi 0, %s89
      %s111 = sphi 0, %s113
      %s114 = sphi 0, %s111
      %s115 = sphi 0, %s114
      %s131 = sphi 0, %s115
    $region4: #{fwd.1} parent=1 // loop_header_branch
      %15 = sbr.rel (%p13) target = $region8
    $region5: #{fwd.1} parent=1 // loop_body
      %s17 = ssub.s32 %s12, 1
      %s18 = ssub.s32 %s12, 2
      %s19 = sadd.s32 %s12, 1
      %s21 = sadd.s32 %s20, 1
      %p24 = scmp.eq.s32.totalorder %s12, 1
      %p25 = scmp.ne.s32.totalorder %s20, %s22
      %p26 = scmp.eq.s32.totalorder %s12, 0
      %p27 = por %p25, %p26
      %p28 = scmp.ne.s32.totalorder %s20, %s22
      %p29 = scmp.eq.s32.totalorder %s17, 1
      %p30 = por %p28, %p29
      %p31 = scmp.ne.s32.totalorder %s22, %s23
      %p32 = scmp.eq.s32.totalorder %s17, 0
      %p33 = por %p31, %p32
      %p34 = scmp.ne.s32.totalorder %s22, %s23
      %p35 = scmp.eq.s32.totalorder %s18, 1
      %p36 = por %p34, %p35
      %p38 = scmp.ne.s32.totalorder %s23, %s37
      %p39 = scmp.eq.s32.totalorder %s18, 0
      %p40 = por %p38, %p39
      %s42 = sadd.s32 %s41, 1
      %p45 = scmp.eq.s32.totalorder %s12, 1
      %p46 = scmp.ne.s32.totalorder %s41, %s43
      %p47 = scmp.eq.s32.totalorder %s12, 0
      %p48 = por %p46, %p47
      %p49 = scmp.ne.s32.totalorder %s41, %s43
      %p50 = scmp.eq.s32.totalorder %s17, 1
      %p51 = por %p49, %p50
      %p52 = scmp.ne.s32.totalorder %s43, %s44
      %p53 = scmp.eq.s32.totalorder %s17, 0
      %p54 = por %p52, %p53
      %p55 = scmp.ne.s32.totalorder %s43, %s44
      %p56 = scmp.eq.s32.totalorder %s18, 1
      %p57 = por %p55, %p56
      %p59 = scmp.ne.s32.totalorder %s44, %s58
      %p60 = scmp.eq.s32.totalorder %s18, 0
      %p61 = por %p59, %p60
      %s63 = sadd.s32 %s62, 1
      %p66 = scmp.eq.s32.totalorder %s12, 1
      %p67 = scmp.ne.s32.totalorder %s62, %s64
      %p68 = scmp.eq.s32.totalorder %s12, 0
      %p69 = por %p67, %p68
      %p70 = scmp.ne.s32.totalorder %s62, %s64
      %p71 = scmp.eq.s32.totalorder %s17, 1
      %p72 = por %p70, %p71
      %p73 = scmp.ne.s32.totalorder %s64, %s65
      %p74 = scmp.eq.s32.totalorder %s17, 0
      %p75 = por %p73, %p74
      %p76 = scmp.ne.s32.totalorder %s64, %s65
      %p77 = scmp.eq.s32.totalorder %s18, 1
      %p78 = por %p76, %p77
      %p80 = scmp.ne.s32.totalorder %s65, %s79
      %p81 = scmp.eq.s32.totalorder %s18, 0
      %p82 = por %p80, %p81
      %s83 = ssub.s32 %s12, %s19
      %p84 = scmp.eq.s32.totalorder %s83, 0
      %s86 = sadd.s32 %s85, 1
      %s87 = scalar_select %p84, %s85, %s86
      %p90 = pneg %p84
      %p91 = scmp.eq.s32.totalorder %s12, 1
      %p92 = por %p90, %p91
      %p93 = scmp.ne.s32.totalorder %s85, %s88
      %p94 = scmp.eq.s32.totalorder %s12, 0
      %p95 = por %p93, %p94
      %p96 = scmp.ne.s32.totalorder %s85, %s88
      %p97 = scmp.eq.s32.totalorder %s17, 1
      %p98 = por %p96, %p97
      %p99 = scmp.ne.s32.totalorder %s88, %s89
      %p100 = scmp.eq.s32.totalorder %s17, 0
      %p101 = por %p99, %p100
      %p102 = scmp.ne.s32.totalorder %s88, %s89
      %p103 = scmp.eq.s32.totalorder %s18, 1
      %p104 = por %p102, %p103
      %p106 = scmp.ne.s32.totalorder %s89, %s105
      %p107 = scmp.eq.s32.totalorder %s18, 0
      %p108 = por %p106, %p107
      %s109 = ssub.s32 %s12, %s19
      %p110 = scmp.eq.s32.totalorder %s109, 0
      %s112 = sadd.s32 %s111, 1
      %s113 = scalar_select %p110, %s111, %s112
      %p116 = pneg %p110
      %p117 = scmp.eq.s32.totalorder %s12, 1
      %p118 = por %p116, %p117
      %p119 = scmp.ne.s32.totalorder %s111, %s114
      %p120 = scmp.eq.s32.totalorder %s12, 0
      %p121 = por %p119, %p120
      %p122 = scmp.ne.s32.totalorder %s111, %s114
      %p123 = scmp.eq.s32.totalorder %s17, 1
      %p124 = por %p122, %p123
      %p125 = scmp.ne.s32.totalorder %s114, %s115
      %p126 = scmp.eq.s32.totalorder %s17, 0
      %p127 = por %p125, %p126
      %p128 = scmp.ne.s32.totalorder %s114, %s115
      %p129 = scmp.eq.s32.totalorder %s18, 1
      %p130 = por %p128, %p129
      %p132 = scmp.ne.s32.totalorder %s115, %s131
      %p133 = scmp.eq.s32.totalorder %s18, 0
      %p134 = por %p132, %p133
      %p135 = scmp.le.s32.totalorder 1, %s12
      %p136 = scmp.lt.s32.totalorder %s12, 3
      %p137 = pnand %p135, %p136
      %p138 = pneg %p137
      // Predicated region
      $region9: #{fwd.1} parent=5 // pred_check
        _
      $region10: #{fwd.1} parent=5 // pred_check_branch
        %140 = sbr.rel (%p137) target = $region12
      $region11: #{fwd.1} parent=5 // pred_region
        %s141 = ssub.s32 %s12, 1
        // Predicated region
        $region13: #{fwd.1} parent=11 // pred_check
          %p142 = pneg %p33
        $region14: #{fwd.1} parent=11 // pred_check_branch
          %144 = sbr.rel (%p142) target = $region16
        $region15: #{fwd.1} parent=11 // pred_region
          %s146 = ssub.s32 16, 16
          %147 = vsyncadd [#allocation3], %s146
          %s149 = sshll.u32 %s0, 4
          %s150 = int_to_ptr.vmem [resolvable:$true] %s149
          %152 = dma.vmem_to_smem %s150, 16, [#allocation2], [#allocation3]
        $region16: #{fwd.1} parent=11 // pred_fallthru
          _
        // Predicated region
        $region17: #{fwd.1} parent=11 // pred_check
          %p153 = pneg %p54
        $region18: #{fwd.1} parent=11 // pred_check_branch
          %155 = sbr.rel (%p153) target = $region20
        $region19: #{fwd.1} parent=11 // pred_region
          %s157 = ssub.s32 16, 16
          %158 = vsyncadd [#allocation5], %s157
          %s160 = sshll.u32 %s1, 4
          %s161 = int_to_ptr.vmem [resolvable:$true] %s160
          %163 = dma.vmem_to_smem %s161, 16, [#allocation4], [#allocation5]
        $region20: #{fwd.1} parent=11 // pred_fallthru
          _
        // Predicated region
        $region21: #{fwd.1} parent=11 // pred_check
          %p164 = pneg %p75
        $region22: #{fwd.1} parent=11 // pred_check_branch
          %166 = sbr.rel (%p164) target = $region24
        $region23: #{fwd.1} parent=11 // pred_region
          _
        $region24: #{fwd.1} parent=11 // pred_fallthru
          _
      $region12: #{fwd.1} parent=5 // pred_fallthru
        _
      %p167 = scmp.lt.s32.totalorder %s12, 2
      // Predicated region
      $region25: #{fwd.1} parent=5 // pred_check
        %p168 = pneg %p167
      $region26: #{fwd.1} parent=5 // pred_check_branch
        %170 = sbr.rel (%p168) target = $region28
      $region27: #{fwd.1} parent=5 // pred_region
        // Predicated region
        $region29: #{fwd.1} parent=27 // pred_check
          %p171 = pneg %p95
        $region30: #{fwd.1} parent=27 // pred_check_branch
          %173 = sbr.rel (%p171) target = $region32
        $region31: #{fwd.1} parent=27 // pred_region
          %p174 = scmp.lt.s32.totalorder %s12, 1
          %s175 = scalar_select %p174, %s12, 1
          %s176 = smul.addr %s175, 2
          %s177 = smul.addr %s176, 8
          %s178 = scalar_lea.vmem %s3, %s177
        $region32: #{fwd.1} parent=27 // pred_fallthru
          _
      $region28: #{fwd.1} parent=5 // pred_fallthru
        _
      %p179 = scmp.le.s32.totalorder 1, %s12
      %p180 = scmp.lt.s32.totalorder %s12, 3
      %p181 = pnand %p179, %p180
      %p182 = pneg %p181
      // Predicated region
      $region33: #{fwd.1} parent=5 // pred_check
        _
      $region34: #{fwd.1} parent=5 // pred_check_branch
        %184 = sbr.rel (%p181) target = $region36
      $region35: #{fwd.1} parent=5 // pred_region
        %s185 = ssub.s32 %s12, 1
        // Predicated region
        $region37: #{fwd.1} parent=35 // pred_check
          %p186 = pneg %p33
        $region38: #{fwd.1} parent=35 // pred_check_branch
          %188 = sbr.rel (%p186) target = $region40
        $region39: #{fwd.1} parent=35 // pred_region
          %189 = dma.done [#allocation3], 16
        $region40: #{fwd.1} parent=35 // pred_fallthru
          _
        // Predicated region
        $region41: #{fwd.1} parent=35 // pred_check
          %p190 = pneg %p54
        $region42: #{fwd.1} parent=35 // pred_check_branch
          %192 = sbr.rel (%p190) target = $region44
        $region43: #{fwd.1} parent=35 // pred_region
          %193 = dma.done [#allocation5], 16
        $region44: #{fwd.1} parent=35 // pred_fallthru
          _
        %194 = sfence
        %p195 = pneg %p33
        %p196 = pneg %p30
        %p197 = pneg %p54
        %p198 = pneg %p51
        %p199 = pneg %p75
        %p200 = pneg %p72
        %p201 = scmp.lt.s32.totalorder %s17, 1
        %s202 = scalar_select %p201, %s17, 1
        %s203 = smul.addr %s202, 2
        %s204 = smul.addr %s203, 8
        %s205 = scalar_lea.vmem %s3, %s204
        %p206 = pneg %p101
        %p207 = pneg %p98
        %p208 = pneg %p127
        %p209 = pneg %p124
        %p210 = scmp.lt.s32.totalorder %s17, 1
        %s211 = scalar_select %p210, %s17, 1
        %s212 = smul.addr %s211, 2
        %s213 = smul.addr %s212, 8
        %s214 = scalar_lea.vmem %s4, %s213
        %p215 = scmp.lt.s32.totalorder %s17, 1
        %s216 = scalar_select %p215, %s17, 1
        %s217 = smul.addr %s216, 2
        %s218 = smul.addr %s217, 8
        %s219 = scalar_lea.vmem %s3, %s218
        %p220 = scmp.lt.s32.totalorder %s17, 1
        %s221 = scalar_select %p220, %s17, 1
        %s222 = smul.addr %s221, 2
        %s223 = smul.addr %s222, 8
        %s224 = scalar_lea.vmem %s4, %s223
        %v225 = vld [vmem:[%s219] sm:$0xff]
        %v226 = vld [vmem:[%s219 + $0x8] sm:$0xff]
        %s227 = sld [smem:[#allocation2]]
        %s228 = sld [smem:[#allocation2 + $0x1]]
        %s229 = sld [smem:[#allocation2 + $0x2]]
        %s230 = sld [smem:[#allocation2 + $0x3]]
        %s231 = sld [smem:[#allocation2 + $0x4]]
        %v232 = vadd.f32 %v225, %v226
        %233 = vadd.xlane.f32.xlu0 %v232
        %v234 = vpop.xlane.xlu0 %233
        %v235 = vrcp.pop 256.0
        %v236 = vmul.f32 %v234, %v235
        %v237 = vmax.f32 %v225, %v226
        %238 = vmax.xlane.f32.xlu0 %v237
        %v239 = vpop.xlane.xlu0 %238
        %v240 = vadd.f32 %v236, %v239
        %v241 = vmul.f32 %v240, 0.5
        %v242 = vstv %s227
        %v243 = vmul.f32 %v242, %v236
        %v244 = vadd.f32 %v241, %v243
        %v245 = vstv %s228
        %v246 = vmul.f32 %v245, %v239
        %v247 = vadd.f32 %v244, %v246
        %v249 = vlaneseq
        %v250 = vand.u32 %v249, 127
        %v251 = vadd.s32 %v250, 4294967295
        %v252 = vlaneseq
        %v253 = vshrl.u32 %v252, 7
        %v254 = vsub.s32 %v251, %v253
        %v255 = vrot.slane %v247, %v254
        %vm257 = vcmask 7168
        %v258 = vsel %vm257, 0.0, %v255
        %vm259 = vcmask 72704
        %v260 = vsel %vm259, %v258, 0.0
        %v261 = vstv %s229
        %v262 = vadd.f32 %v261, 0.0
        %s263 = sld [smem:[#allocation4]]
        %v264 = vstv %s263
        %v265 = vmul.f32 %v264, %v260
        %v266 = vadd.f32 %v262, %v265
        %s267 = sld [smem:[#allocation4 + $0x1]]
        %v268 = vstv %s267
        %v269 = vmul.f32 %v268, %v260
        %271 = vrot.lane.b32.xlu0 %v269, 127
        %v272 = vpop.permute.xlu0 %271
        %v274 = vadd.f32 %v266, %v272
        %s275 = sld [smem:[#allocation4 + $0x2]]
        %v276 = vstv %s275
        %v277 = vmul.f32 %v276, %v260
        %279 = vrot.lane.b32.xlu0 %v277, 126
        %v280 = vpop.permute.xlu0 %279
        %v282 = vadd.f32 %v274, %v280
        %v283 = vxor.u32 %v282, 2147483648
        %v284 = vmul.f32 %v283, 1.442695
        %v285 = vpow.pop %v284
        %v286 = vadd.f32 %v285, 1.0
        %v287 = vrcp.pop %v286
        %v288 = vmul.f32 1.0, %v287
        %v289 = vlaneseq
        %v290 = vshrl.u32 %v289, 7
        %v291 = vsub.s32 0, %v290
        %v292 = vrot.slane %v288, %v291
        %294 = vbcast.lane.b32.xlu0 %v292, 256
        %v295 = vpop.permute.xlu0 %294
        %v296 = vmul.f32 %v295, %v225
        %v297 = vmul.f32 %v295, %v226
        %v298 = vlaneseq
        %v299 = vshrl.u32 %v298, 7
        %vm300 = vcmp.gt.f32.partialorder %v292, %v295
        %vm301 = vcmp.eq.f32.partialorder %v292, %v295
        %vm302 = vcmp.lt.s32.totalorder %v250, %v299
        %vm303 = vmand %vm301, %vm302
        %vm304 = vmor %vm300, %vm303
        %v305 = vsel %vm304, 1, 0
        %vm306 = vcmask 64512
        %v307 = vsel %vm306, %v305, 0
        %v308 = vand.u32 %v307, 65535
        %v309 = vshrl.u32 %v307, 16
        %v310 = vcvt.s32.f32 %v308
        %v311 = vcvt.s32.f32 %v309
        %312 = vadd.xlane.f32.xlu0 %v310
        %v313 = vpop.xlane.xlu0 %312
        %314 = vadd.xlane.f32.xlu0 %v311
        %v315 = vpop.xlane.xlu0 %314
        %v316 = vcvt.f32.s32 %v313
        %v317 = vcvt.f32.s32 %v315
        %v318 = vshll.u32 %v317, 16
        %v319 = vadd.s32 %v318, %v316
        %vm320 = vcmp.lt.s32.totalorder %v319, 4
        %v321 = vsel %vm320, 1, 0
        %v322 = vcvt.s32.f32 %v321
        %v323 = vsub.f32 1.0, %v322
        %v324 = vmul.f32 %v322, %v296
        %v325 = vmul.f32 %v322, %v297
        %v326 = vmul.f32 %v323, %v296
        %v327 = vmul.f32 %v323, %v297
        %v328 = vrot.slane %v324, 4
        %v329 = vadd.f32 %v324, %v328
        %v330 = vrot.slane %v329, 2
        %v331 = vadd.f32 %v329, %v330
        %v332 = vrot.slane %v331, 1
        %v333 = vadd.f32 %v331, %v332
        %v334 = vrot.slane %v325, 4
        %v335 = vadd.f32 %v325, %v334
        %v336 = vrot.slane %v335, 2
        %v337 = vadd.f32 %v335, %v336
        %v338 = vrot.slane %v337, 1
        %v339 = vadd.f32 %v337, %v338
        %v340 = vrcp.pop 8.0
        %v341 = vmul.f32 %v333, %v340
        %v342 = vmul.f32 %v339, %v340
        %v343 = vmul.f32 %v341, 2.0
        %v344 = vmul.f32 %v342, 2.0
        %v345 = vrot.slane %v324, 4
        %v346 = vmax.f32 %v324, %v345
        %v347 = vrot.slane %v346, 2
        %v348 = vmax.f32 %v346, %v347
        %v349 = vrot.slane %v348, 1
        %v350 = vmax.f32 %v348, %v349
        %v351 = vrot.slane %v325, 4
        %v352 = vmax.f32 %v325, %v351
        %v353 = vrot.slane %v352, 2
        %v354 = vmax.f32 %v352, %v353
        %v355 = vrot.slane %v354, 1
        %v356 = vmax.f32 %v354, %v355
        %v357 = vrot.slane %v326, 4
        %v358 = vadd.f32 %v326, %v357
        %v359 = vrot.slane %v358, 2
        %v360 = vadd.f32 %v358, %v359
        %v361 = vrot.slane %v360, 1
        %v362 = vadd.f32 %v360, %v361
        %v363 = vrot.slane %v327, 4
        %v364 = vadd.f32 %v327, %v363
        %v365 = vrot.slane %v364, 2
        %v366 = vadd.f32 %v364, %v365
        %v367 = vrot.slane %v366, 1
        %v368 = vadd.f32 %v366, %v367
        %v369 = vmul.f32 %v362, %v340
        %v370 = vmul.f32 %v368, %v340
        %v371 = vmul.f32 %v369, 2.0
        %v372 = vmul.f32 %v370, 2.0
        %v373 = vrot.slane %v326, 4
        %v374 = vmax.f32 %v326, %v373
        %v375 = vrot.slane %v374, 2
        %v376 = vmax.f32 %v374, %v375
        %v377 = vrot.slane %v376, 1
        %v378 = vmax.f32 %v376, %v377
        %v379 = vrot.slane %v327, 4
        %v380 = vmax.f32 %v327, %v379
        %v381 = vrot.slane %v380, 2
        %v382 = vmax.f32 %v380, %v381
        %v383 = vrot.slane %v382, 1
        %v384 = vmax.f32 %v382, %v383
        %vm385 = vcmask 1040384
        %v386 = vsel %vm385, %v343, %v371
        %v387 = vsel %vm385, %v344, %v372
        %v388 = vsel %vm385, %v350, %v378
        %v389 = vsel %vm385, %v356, %v384
        %391 = vrot.lane.b32.xlu0 %v387, 51
        %v392 = vpop.permute.xlu0 %391
        %395 = vrot.lane.b32.xlu0 %v386, 51
        %v396 = vpop.permute.xlu0 %395
        %vm397 = vcmask 416768
        %v398 = vsel %vm397, %v396, %v392
        %v401 = vsel %vm397, %v392, %v396
        %v402 = vld [vmem:[%s2] sm:$0x3]
        %v404 = vlaneseq
        %v405 = vshrl.u32 %v404, 7
        %v406 = vsub.s32 0, %v405
        %v407 = vrot.slane %v402, %v406
        %v408 = vlaneseq
        %v409 = vshrl.u32 %v408, 7
        %v410 = vsub.s32 1, %v409
        %v411 = vrot.slane %v402, %v410
        %v414 = vmul.f32 %v401, %v407
        %v415 = vmul.f32 %v398, %v411
        %417 = vrot.lane.b32.xlu0 %v389, 51
        %v418 = vpop.permute.xlu0 %417
        %421 = vrot.lane.b32.xlu0 %v388, 51
        %v422 = vpop.permute.xlu0 %421
        %v423 = vsel %vm397, %v422, %v418
        %v426 = vsel %vm397, %v418, %v422
        %s427 = scalar_lea.vmem %s2, 98
        %v428 = vld [vmem:[%s427] sm:$0x3]
        %v430 = vlaneseq
        %v431 = vshrl.u32 %v430, 7
        %v432 = vsub.s32 0, %v431
        %v433 = vrot.slane %v428, %v432
        %v434 = vlaneseq
        %v435 = vshrl.u32 %v434, 7
        %v436 = vsub.s32 1, %v435
        %v437 = vrot.slane %v428, %v436
        %v440 = vmul.f32 %v426, %v433
        %v441 = vmul.f32 %v423, %v437
        %v442 = vadd.f32 %v414, %v440
        %v443 = vadd.f32 %v415, %v441
        %v444 = vadd.f32 %v442, 0.0
        %v445 = vadd.f32 %v443, 0.0
        %446 = vrot.lane.b32.xlu0 %v387, 50
        %v447 = vpop.permute.xlu0 %446
        %449 = vrot.lane.b32.xlu0 %v386, 50
        %v450 = vpop.permute.xlu0 %449
        %vm451 = vcmask 408576
        %v452 = vsel %vm451, %v450, %v447
        %v455 = vsel %vm451, %v447, %v450
        %s456 = scalar_lea.vmem %s2, 2
        %v457 = vld [vmem:[%s456] sm:$0x3]
        %v459 = vlaneseq
        %v460 = vshrl.u32 %v459, 7
        %v461 = vsub.s32 0, %v460
        %v462 = vrot.slane %v457, %v461
        %v463 = vlaneseq
        %v464 = vshrl.u32 %v463, 7
        %v465 = vsub.s32 1, %v464
        %v466 = vrot.slane %v457, %v465
        %v469 = vmul.f32 %v455, %v462
        %v470 = vmul.f32 %v452, %v466
        %471 = vrot.lane.b32.xlu0 %v389, 50
        %v472 = vpop.permute.xlu0 %471
        %474 = vrot.lane.b32.xlu0 %v388, 50
        %v475 = vpop.permute.xlu0 %474
        %v476 = vsel %vm451, %v475, %v472
        %v479 = vsel %vm451, %v472, %v475
        %s480 = scalar_lea.vmem %s2, 100
        %v481 = vld [vmem:[%s480] sm:$0x3]
        %v483 = vlaneseq
        %v484 = vshrl.u32 %v483, 7
        %v485 = vsub.s32 0, %v484
        %v486 = vrot.slane %v481, %v485
        %v487 = vlaneseq
        %v488 = vshrl.u32 %v487, 7
        %v489 = vsub.s32 1, %v488
        %v490 = vrot.slane %v481, %v489
        %v493 = vmul.f32 %v479, %v486
        %v494 = vmul.f32 %v476, %v490
        %v495 = vadd.f32 %v469, %v493
        %v496 = vadd.f32 %v470, %v494
        %v497 = vadd.f32 %v444, %v495
        %v498 = vadd.f32 %v445, %v496
        %499 = vrot.lane.b32.xlu0 %v387, 49
        %v500 = vpop.permute.xlu0 %499
        %502 = vrot.lane.b32.xlu0 %v386, 49
        %v503 = vpop.permute.xlu0 %502
        %vm504 = vcmask 400384
        %v505 = vsel %vm504, %v503, %v500
        %v508 = vsel %vm504, %v500, %v503
        %s509 = scalar_lea.vmem %s2, 4
        %v510 = vld [vmem:[%s509] sm:$0x3]
        %v512 = vlaneseq
        %v513 = vshrl.u32 %v512, 7
        %v514 = vsub.s32 0, %v513
        %v515 = vrot.slane %v510, %v514
        %v516 = vlaneseq
        %v517 = vshrl.u32 %v516, 7
        %v518 = vsub.s32 1, %v517
        %v519 = vrot.slane %v510, %v518
        %v522 = vmul.f32 %v508, %v515
        %v523 = vmul.f32 %v505, %v519
        %524 = vrot.lane.b32.xlu0 %v389, 49
        %v525 = vpop.permute.xlu0 %524
        %527 = vrot.lane.b32.xlu0 %v388, 49
        %v528 = vpop.permute.xlu0 %527
        %v529 = vsel %vm504, %v528, %v525
        %v532 = vsel %vm504, %v525, %v528
        %s533 = scalar_lea.vmem %s2, 102
        %v534 = vld [vmem:[%s533] sm:$0x3]
        %v536 = vlaneseq
        %v537 = vshrl.u32 %v536, 7
        %v538 = vsub.s32 0, %v537
        %v539 = vrot.slane %v534, %v538
        %v540 = vlaneseq
        %v541 = vshrl.u32 %v540, 7
        %v542 = vsub.s32 1, %v541
        %v543 = vrot.slane %v534, %v542
        %v546 = vmul.f32 %v532, %v539
        %v547 = vmul.f32 %v529, %v543
        %v548 = vadd.f32 %v522, %v546
        %v549 = vadd.f32 %v523, %v547
        %v550 = vadd.f32 %v497, %v548
        %v551 = vadd.f32 %v498, %v549
        %552 = vrot.lane.b32.xlu0 %v387, 48
        %v553 = vpop.permute.xlu0 %552
        %555 = vrot.lane.b32.xlu0 %v386, 48
        %v556 = vpop.permute.xlu0 %555
        %vm557 = vcmask 392192
        %v558 = vsel %vm557, %v556, %v553
        %v561 = vsel %vm557, %v553, %v556
        %s562 = scalar_lea.vmem %s2, 6
        %v563 = vld [vmem:[%s562] sm:$0x3]
        %v565 = vlaneseq
        %v566 = vshrl.u32 %v565, 7
        %v567 = vsub.s32 0, %v566
        %v568 = vrot.slane %v563, %v567
        %v569 = vlaneseq
        %v570 = vshrl.u32 %v569, 7
        %v571 = vsub.s32 1, %v570
        %v572 = vrot.slane %v563, %v571
        %v575 = vmul.f32 %v561, %v568
        %v576 = vmul.f32 %v558, %v572
        %577 = vrot.lane.b32.xlu0 %v389, 48
        %v578 = vpop.permute.xlu0 %577
        %580 = vrot.lane.b32.xlu0 %v388, 48
        %v581 = vpop.permute.xlu0 %580
        %v582 = vsel %vm557, %v581, %v578
        %v585 = vsel %vm557, %v578, %v581
        %s586 = scalar_lea.vmem %s2, 104
        %v587 = vld [vmem:[%s586] sm:$0x3]
        %v589 = vlaneseq
        %v590 = vshrl.u32 %v589, 7
        %v591 = vsub.s32 0, %v590
        %v592 = vrot.slane %v587, %v591
        %v593 = vlaneseq
        %v594 = vshrl.u32 %v593, 7
        %v595 = vsub.s32 1, %v594
        %v596 = vrot.slane %v587, %v595
        %v599 = vmul.f32 %v585, %v592
        %v600 = vmul.f32 %v582, %v596
        %v601 = vadd.f32 %v575, %v599
        %v602 = vadd.f32 %v576, %v600
        %v603 = vadd.f32 %v550, %v601
        %v604 = vadd.f32 %v551, %v602
        %605 = vrot.lane.b32.xlu0 %v387, 47
        %v606 = vpop.permute.xlu0 %605
        %608 = vrot.lane.b32.xlu0 %v386, 47
        %v609 = vpop.permute.xlu0 %608
        %vm610 = vcmask 384000
        %v611 = vsel %vm610, %v609, %v606
        %v614 = vsel %vm610, %v606, %v609
        %s615 = scalar_lea.vmem %s2, 8
        %v616 = vld [vmem:[%s615] sm:$0x3]
        %v618 = vlaneseq
        %v619 = vshrl.u32 %v618, 7
        %v620 = vsub.s32 0, %v619
        %v621 = vrot.slane %v616, %v620
        %v622 = vlaneseq
        %v623 = vshrl.u32 %v622, 7
        %v624 = vsub.s32 1, %v623
        %v625 = vrot.slane %v616, %v624
        %v628 = vmul.f32 %v614, %v621
        %v629 = vmul.f32 %v611, %v625
        %630 = vrot.lane.b32.xlu0 %v389, 47
        %v631 = vpop.permute.xlu0 %630
        %633 = vrot.lane.b32.xlu0 %v388, 47
        %v634 = vpop.permute.xlu0 %633
        %v635 = vsel %vm610, %v634, %v631
        %v638 = vsel %vm610, %v631, %v634
        %s639 = scalar_lea.vmem %s2, 106
        %v640 = vld [vmem:[%s639] sm:$0x3]
        %v642 = vlaneseq
        %v643 = vshrl.u32 %v642, 7
        %v644 = vsub.s32 0, %v643
        %v645 = vrot.slane %v640, %v644
        %v646 = vlaneseq
        %v647 = vshrl.u32 %v646, 7
        %v648 = vsub.s32 1, %v647
        %v649 = vrot.slane %v640, %v648
        %v652 = vmul.f32 %v638, %v645
        %v653 = vmul.f32 %v635, %v649
        %v654 = vadd.f32 %v628, %v652
        %v655 = vadd.f32 %v629, %v653
        %v656 = vadd.f32 %v603, %v654
        %v657 = vadd.f32 %v604, %v655
        %658 = vrot.lane.b32.xlu0 %v387, 46
        %v659 = vpop.permute.xlu0 %658
        %661 = vrot.lane.b32.xlu0 %v386, 46
        %v662 = vpop.permute.xlu0 %661
        %vm663 = vcmask 375808
        %v664 = vsel %vm663, %v662, %v659
        %v667 = vsel %vm663, %v659, %v662
        %s668 = scalar_lea.vmem %s2, 10
        %v669 = vld [vmem:[%s668] sm:$0x3]
        %v671 = vlaneseq
        %v672 = vshrl.u32 %v671, 7
        %v673 = vsub.s32 0, %v672
        %v674 = vrot.slane %v669, %v673
        %v675 = vlaneseq
        %v676 = vshrl.u32 %v675, 7
        %v677 = vsub.s32 1, %v676
        %v678 = vrot.slane %v669, %v677
        %v681 = vmul.f32 %v667, %v674
        %v682 = vmul.f32 %v664, %v678
        %683 = vrot.lane.b32.xlu0 %v389, 46
        %v684 = vpop.permute.xlu0 %683
        %686 = vrot.lane.b32.xlu0 %v388, 46
        %v687 = vpop.permute.xlu0 %686
        %v688 = vsel %vm663, %v687, %v684
        %v691 = vsel %vm663, %v684, %v687
        %s692 = scalar_lea.vmem %s2, 108
        %v693 = vld [vmem:[%s692] sm:$0x3]
        %v695 = vlaneseq
        %v696 = vshrl.u32 %v695, 7
        %v697 = vsub.s32 0, %v696
        %v698 = vrot.slane %v693, %v697
        %v699 = vlaneseq
        %v700 = vshrl.u32 %v699, 7
        %v701 = vsub.s32 1, %v700
        %v702 = vrot.slane %v693, %v701
        %v705 = vmul.f32 %v691, %v698
        %v706 = vmul.f32 %v688, %v702
        %v707 = vadd.f32 %v681, %v705
        %v708 = vadd.f32 %v682, %v706
        %v709 = vadd.f32 %v656, %v707
        %v710 = vadd.f32 %v657, %v708
        %711 = vrot.lane.b32.xlu0 %v387, 45
        %v712 = vpop.permute.xlu0 %711
        %714 = vrot.lane.b32.xlu0 %v386, 45
        %v715 = vpop.permute.xlu0 %714
        %vm716 = vcmask 367616
        %v717 = vsel %vm716, %v715, %v712
        %v720 = vsel %vm716, %v712, %v715
        %s721 = scalar_lea.vmem %s2, 12
        %v722 = vld [vmem:[%s721] sm:$0x3]
        %v724 = vlaneseq
        %v725 = vshrl.u32 %v724, 7
        %v726 = vsub.s32 0, %v725
        %v727 = vrot.slane %v722, %v726
        %v728 = vlaneseq
        %v729 = vshrl.u32 %v728, 7
        %v730 = vsub.s32 1, %v729
        %v731 = vrot.slane %v722, %v730
        %v734 = vmul.f32 %v720, %v727
        %v735 = vmul.f32 %v717, %v731
        %736 = vrot.lane.b32.xlu0 %v389, 45
        %v737 = vpop.permute.xlu0 %736
        %739 = vrot.lane.b32.xlu0 %v388, 45
        %v740 = vpop.permute.xlu0 %739
        %v741 = vsel %vm716, %v740, %v737
        %v744 = vsel %vm716, %v737, %v740
        %s745 = scalar_lea.vmem %s2, 110
        %v746 = vld [vmem:[%s745] sm:$0x3]
        %v748 = vlaneseq
        %v749 = vshrl.u32 %v748, 7
        %v750 = vsub.s32 0, %v749
        %v751 = vrot.slane %v746, %v750
        %v752 = vlaneseq
        %v753 = vshrl.u32 %v752, 7
        %v754 = vsub.s32 1, %v753
        %v755 = vrot.slane %v746, %v754
        %v758 = vmul.f32 %v744, %v751
        %v759 = vmul.f32 %v741, %v755
        %v760 = vadd.f32 %v734, %v758
        %v761 = vadd.f32 %v735, %v759
        %v762 = vadd.f32 %v709, %v760
        %v763 = vadd.f32 %v710, %v761
        %764 = vrot.lane.b32.xlu0 %v387, 35
        %v765 = vpop.permute.xlu0 %764
        %767 = vrot.lane.b32.xlu0 %v386, 35
        %v768 = vpop.permute.xlu0 %767
        %vm769 = vcmask 285696
        %v770 = vsel %vm769, %v768, %v765
        %v773 = vsel %vm769, %v765, %v768
        %s774 = scalar_lea.vmem %s2, 14
        %v775 = vld [vmem:[%s774] sm:$0x3]
        %v777 = vlaneseq
        %v778 = vshrl.u32 %v777, 7
        %v779 = vsub.s32 0, %v778
        %v780 = vrot.slane %v775, %v779
        %v781 = vlaneseq
        %v782 = vshrl.u32 %v781, 7
        %v783 = vsub.s32 1, %v782
        %v784 = vrot.slane %v775, %v783
        %v787 = vmul.f32 %v773, %v780
        %v788 = vmul.f32 %v770, %v784
        %789 = vrot.lane.b32.xlu0 %v389, 35
        %v790 = vpop.permute.xlu0 %789
        %792 = vrot.lane.b32.xlu0 %v388, 35
        %v793 = vpop.permute.xlu0 %792
        %v794 = vsel %vm769, %v793, %v790
        %v797 = vsel %vm769, %v790, %v793
        %s798 = scalar_lea.vmem %s2, 112
        %v799 = vld [vmem:[%s798] sm:$0x3]
        %v801 = vlaneseq
        %v802 = vshrl.u32 %v801, 7
        %v803 = vsub.s32 0, %v802
        %v804 = vrot.slane %v799, %v803
        %v805 = vlaneseq
        %v806 = vshrl.u32 %v805, 7
        %v807 = vsub.s32 1, %v806
        %v808 = vrot.slane %v799, %v807
        %v811 = vmul.f32 %v797, %v804
        %v812 = vmul.f32 %v794, %v808
        %v813 = vadd.f32 %v787, %v811
        %v814 = vadd.f32 %v788, %v812
        %v815 = vadd.f32 %v762, %v813
        %v816 = vadd.f32 %v763, %v814
        %817 = vrot.lane.b32.xlu0 %v387, 34
        %v818 = vpop.permute.xlu0 %817
        %820 = vrot.lane.b32.xlu0 %v386, 34
        %v821 = vpop.permute.xlu0 %820
        %vm822 = vcmask 277504
        %v823 = vsel %vm822, %v821, %v818
        %v826 = vsel %vm822, %v818, %v821
        %s827 = scalar_lea.vmem %s2, 16
        %v828 = vld [vmem:[%s827] sm:$0x3]
        %v830 = vlaneseq
        %v831 = vshrl.u32 %v830, 7
        %v832 = vsub.s32 0, %v831
        %v833 = vrot.slane %v828, %v832
        %v834 = vlaneseq
        %v835 = vshrl.u32 %v834, 7
        %v836 = vsub.s32 1, %v835
        %v837 = vrot.slane %v828, %v836
        %v840 = vmul.f32 %v826, %v833
        %v841 = vmul.f32 %v823, %v837
        %842 = vrot.lane.b32.xlu0 %v389, 34
        %v843 = vpop.permute.xlu0 %842
        %845 = vrot.lane.b32.xlu0 %v388, 34
        %v846 = vpop.permute.xlu0 %845
        %v847 = vsel %vm822, %v846, %v843
        %v850 = vsel %vm822, %v843, %v846
        %s851 = scalar_lea.vmem %s2, 114
        %v852 = vld [vmem:[%s851] sm:$0x3]
        %v854 = vlaneseq
        %v855 = vshrl.u32 %v854, 7
        %v856 = vsub.s32 0, %v855
        %v857 = vrot.slane %v852, %v856
        %v858 = vlaneseq
        %v859 = vshrl.u32 %v858, 7
        %v860 = vsub.s32 1, %v859
        %v861 = vrot.slane %v852, %v860
        %v864 = vmul.f32 %v850, %v857
        %v865 = vmul.f32 %v847, %v861
        %v866 = vadd.f32 %v840, %v864
        %v867 = vadd.f32 %v841, %v865
        %v868 = vadd.f32 %v815, %v866
        %v869 = vadd.f32 %v816, %v867
        %870 = vrot.lane.b32.xlu0 %v387, 33
        %v871 = vpop.permute.xlu0 %870
        %873 = vrot.lane.b32.xlu0 %v386, 33
        %v874 = vpop.permute.xlu0 %873
        %vm875 = vcmask 269312
        %v876 = vsel %vm875, %v874, %v871
        %v879 = vsel %vm875, %v871, %v874
        %s880 = scalar_lea.vmem %s2, 18
        %v881 = vld [vmem:[%s880] sm:$0x3]
        %v883 = vlaneseq
        %v884 = vshrl.u32 %v883, 7
        %v885 = vsub.s32 0, %v884
        %v886 = vrot.slane %v881, %v885
        %v887 = vlaneseq
        %v888 = vshrl.u32 %v887, 7
        %v889 = vsub.s32 1, %v888
        %v890 = vrot.slane %v881, %v889
        %v893 = vmul.f32 %v879, %v886
        %v894 = vmul.f32 %v876, %v890
        %895 = vrot.lane.b32.xlu0 %v389, 33
        %v896 = vpop.permute.xlu0 %895
        %898 = vrot.lane.b32.xlu0 %v388, 33
        %v899 = vpop.permute.xlu0 %898
        %v900 = vsel %vm875, %v899, %v896
        %v903 = vsel %vm875, %v896, %v899
        %s904 = scalar_lea.vmem %s2, 116
        %v905 = vld [vmem:[%s904] sm:$0x3]
        %v907 = vlaneseq
        %v908 = vshrl.u32 %v907, 7
        %v909 = vsub.s32 0, %v908
        %v910 = vrot.slane %v905, %v909
        %v911 = vlaneseq
        %v912 = vshrl.u32 %v911, 7
        %v913 = vsub.s32 1, %v912
        %v914 = vrot.slane %v905, %v913
        %v917 = vmul.f32 %v903, %v910
        %v918 = vmul.f32 %v900, %v914
        %v919 = vadd.f32 %v893, %v917
        %v920 = vadd.f32 %v894, %v918
        %v921 = vadd.f32 %v868, %v919
        %v922 = vadd.f32 %v869, %v920
        %923 = vrot.lane.b32.xlu0 %v387, 32
        %v924 = vpop.permute.xlu0 %923
        %926 = vrot.lane.b32.xlu0 %v386, 32
        %v927 = vpop.permute.xlu0 %926
        %vm928 = vcmask 261120
        %v929 = vsel %vm928, %v927, %v924
        %v932 = vsel %vm928, %v924, %v927
        %s933 = scalar_lea.vmem %s2, 20
        %v934 = vld [vmem:[%s933] sm:$0x3]
        %v936 = vlaneseq
        %v937 = vshrl.u32 %v936, 7
        %v938 = vsub.s32 0, %v937
        %v939 = vrot.slane %v934, %v938
        %v940 = vlaneseq
        %v941 = vshrl.u32 %v940, 7
        %v942 = vsub.s32 1, %v941
        %v943 = vrot.slane %v934, %v942
        %v946 = vmul.f32 %v932, %v939
        %v947 = vmul.f32 %v929, %v943
        %948 = vrot.lane.b32.xlu0 %v389, 32
        %v949 = vpop.permute.xlu0 %948
        %951 = vrot.lane.b32.xlu0 %v388, 32
        %v952 = vpop.permute.xlu0 %951
        %v953 = vsel %vm928, %v952, %v949
        %v956 = vsel %vm928, %v949, %v952
        %s957 = scalar_lea.vmem %s2, 118
        %v958 = vld [vmem:[%s957] sm:$0x3]
        %v960 = vlaneseq
        %v961 = vshrl.u32 %v960, 7
        %v962 = vsub.s32 0, %v961
        %v963 = vrot.slane %v958, %v962
        %v964 = vlaneseq
        %v965 = vshrl.u32 %v964, 7
        %v966 = vsub.s32 1, %v965
        %v967 = vrot.slane %v958, %v966
        %v970 = vmul.f32 %v956, %v963
        %v971 = vmul.f32 %v953, %v967
        %v972 = vadd.f32 %v946, %v970
        %v973 = vadd.f32 %v947, %v971
        %v974 = vadd.f32 %v921, %v972
        %v975 = vadd.f32 %v922, %v973
        %976 = vrot.lane.b32.xlu0 %v387, 31
        %v977 = vpop.permute.xlu0 %976
        %979 = vrot.lane.b32.xlu0 %v386, 31
        %v980 = vpop.permute.xlu0 %979
        %vm981 = vcmask 252928
        %v982 = vsel %vm981, %v980, %v977
        %v985 = vsel %vm981, %v977, %v980
        %s986 = scalar_lea.vmem %s2, 22
        %v987 = vld [vmem:[%s986] sm:$0x3]
        %v989 = vlaneseq
        %v990 = vshrl.u32 %v989, 7
        %v991 = vsub.s32 0, %v990
        %v992 = vrot.slane %v987, %v991
        %v993 = vlaneseq
        %v994 = vshrl.u32 %v993, 7
        %v995 = vsub.s32 1, %v994
        %v996 = vrot.slane %v987, %v995
        %v999 = vmul.f32 %v985, %v992
        %v1000 = vmul.f32 %v982, %v996
        %1001 = vrot.lane.b32.xlu0 %v389, 31
        %v1002 = vpop.permute.xlu0 %1001
        %1004 = vrot.lane.b32.xlu0 %v388, 31
        %v1005 = vpop.permute.xlu0 %1004
        %v1006 = vsel %vm981, %v1005, %v1002
        %v1009 = vsel %vm981, %v1002, %v1005
        %s1010 = scalar_lea.vmem %s2, 120
        %v1011 = vld [vmem:[%s1010] sm:$0x3]
        %v1013 = vlaneseq
        %v1014 = vshrl.u32 %v1013, 7
        %v1015 = vsub.s32 0, %v1014
        %v1016 = vrot.slane %v1011, %v1015
        %v1017 = vlaneseq
        %v1018 = vshrl.u32 %v1017, 7
        %v1019 = vsub.s32 1, %v1018
        %v1020 = vrot.slane %v1011, %v1019
        %v1023 = vmul.f32 %v1009, %v1016
        %v1024 = vmul.f32 %v1006, %v1020
        %v1025 = vadd.f32 %v999, %v1023
        %v1026 = vadd.f32 %v1000, %v1024
        %v1027 = vadd.f32 %v974, %v1025
        %v1028 = vadd.f32 %v975, %v1026
        %1029 = vrot.lane.b32.xlu0 %v387, 30
        %v1030 = vpop.permute.xlu0 %1029
        %1032 = vrot.lane.b32.xlu0 %v386, 30
        %v1033 = vpop.permute.xlu0 %1032
        %vm1034 = vcmask 244736
        %v1035 = vsel %vm1034, %v1033, %v1030
        %v1038 = vsel %vm1034, %v1030, %v1033
        %s1039 = scalar_lea.vmem %s2, 24
        %v1040 = vld [vmem:[%s1039] sm:$0x3]
        %v1042 = vlaneseq
        %v1043 = vshrl.u32 %v1042, 7
        %v1044 = vsub.s32 0, %v1043
        %v1045 = vrot.slane %v1040, %v1044
        %v1046 = vlaneseq
        %v1047 = vshrl.u32 %v1046, 7
        %v1048 = vsub.s32 1, %v1047
        %v1049 = vrot.slane %v1040, %v1048
        %v1052 = vmul.f32 %v1038, %v1045
        %v1053 = vmul.f32 %v1035, %v1049
        %1054 = vrot.lane.b32.xlu0 %v389, 30
        %v1055 = vpop.permute.xlu0 %1054
        %1057 = vrot.lane.b32.xlu0 %v388, 30
        %v1058 = vpop.permute.xlu0 %1057
        %v1059 = vsel %vm1034, %v1058, %v1055
        %v1062 = vsel %vm1034, %v1055, %v1058
        %s1063 = scalar_lea.vmem %s2, 122
        %v1064 = vld [vmem:[%s1063] sm:$0x3]
        %v1066 = vlaneseq
        %v1067 = vshrl.u32 %v1066, 7
        %v1068 = vsub.s32 0, %v1067
        %v1069 = vrot.slane %v1064, %v1068
        %v1070 = vlaneseq
        %v1071 = vshrl.u32 %v1070, 7
        %v1072 = vsub.s32 1, %v1071
        %v1073 = vrot.slane %v1064, %v1072
        %v1076 = vmul.f32 %v1062, %v1069
        %v1077 = vmul.f32 %v1059, %v1073
        %v1078 = vadd.f32 %v1052, %v1076
        %v1079 = vadd.f32 %v1053, %v1077
        %v1080 = vadd.f32 %v1027, %v1078
        %v1081 = vadd.f32 %v1028, %v1079
        %1082 = vrot.lane.b32.xlu0 %v387, 29
        %v1083 = vpop.permute.xlu0 %1082
        %1085 = vrot.lane.b32.xlu0 %v386, 29
        %v1086 = vpop.permute.xlu0 %1085
        %vm1087 = vcmask 236544
        %v1088 = vsel %vm1087, %v1086, %v1083
        %v1091 = vsel %vm1087, %v1083, %v1086
        %s1092 = scalar_lea.vmem %s2, 26
        %v1093 = vld [vmem:[%s1092] sm:$0x3]
        %v1095 = vlaneseq
        %v1096 = vshrl.u32 %v1095, 7
        %v1097 = vsub.s32 0, %v1096
        %v1098 = vrot.slane %v1093, %v1097
        %v1099 = vlaneseq
        %v1100 = vshrl.u32 %v1099, 7
        %v1101 = vsub.s32 1, %v1100
        %v1102 = vrot.slane %v1093, %v1101
        %v1105 = vmul.f32 %v1091, %v1098
        %v1106 = vmul.f32 %v1088, %v1102
        %1107 = vrot.lane.b32.xlu0 %v389, 29
        %v1108 = vpop.permute.xlu0 %1107
        %1110 = vrot.lane.b32.xlu0 %v388, 29
        %v1111 = vpop.permute.xlu0 %1110
        %v1112 = vsel %vm1087, %v1111, %v1108
        %v1115 = vsel %vm1087, %v1108, %v1111
        %s1116 = scalar_lea.vmem %s2, 124
        %v1117 = vld [vmem:[%s1116] sm:$0x3]
        %v1119 = vlaneseq
        %v1120 = vshrl.u32 %v1119, 7
        %v1121 = vsub.s32 0, %v1120
        %v1122 = vrot.slane %v1117, %v1121
        %v1123 = vlaneseq
        %v1124 = vshrl.u32 %v1123, 7
        %v1125 = vsub.s32 1, %v1124
        %v1126 = vrot.slane %v1117, %v1125
        %v1129 = vmul.f32 %v1115, %v1122
        %v1130 = vmul.f32 %v1112, %v1126
        %v1131 = vadd.f32 %v1105, %v1129
        %v1132 = vadd.f32 %v1106, %v1130
        %v1133 = vadd.f32 %v1080, %v1131
        %v1134 = vadd.f32 %v1081, %v1132
        %1135 = vrot.lane.b32.xlu0 %v387, 19
        %v1136 = vpop.permute.xlu0 %1135
        %1138 = vrot.lane.b32.xlu0 %v386, 19
        %v1139 = vpop.permute.xlu0 %1138
        %vm1140 = vcmask 154624
        %v1141 = vsel %vm1140, %v1139, %v1136
        %v1144 = vsel %vm1140, %v1136, %v1139
        %s1145 = scalar_lea.vmem %s2, 28
        %v1146 = vld [vmem:[%s1145] sm:$0x3]
        %v1148 = vlaneseq
        %v1149 = vshrl.u32 %v1148, 7
        %v1150 = vsub.s32 0, %v1149
        %v1151 = vrot.slane %v1146, %v1150
        %v1152 = vlaneseq
        %v1153 = vshrl.u32 %v1152, 7
        %v1154 = vsub.s32 1, %v1153
        %v1155 = vrot.slane %v1146, %v1154
        %v1158 = vmul.f32 %v1144, %v1151
        %v1159 = vmul.f32 %v1141, %v1155
        %1160 = vrot.lane.b32.xlu0 %v389, 19
        %v1161 = vpop.permute.xlu0 %1160
        %1163 = vrot.lane.b32.xlu0 %v388, 19
        %v1164 = vpop.permute.xlu0 %1163
        %v1165 = vsel %vm1140, %v1164, %v1161
        %v1168 = vsel %vm1140, %v1161, %v1164
        %s1169 = scalar_lea.vmem %s2, 126
        %v1170 = vld [vmem:[%s1169] sm:$0x3]
        %v1172 = vlaneseq
        %v1173 = vshrl.u32 %v1172, 7
        %v1174 = vsub.s32 0, %v1173
        %v1175 = vrot.slane %v1170, %v1174
        %v1176 = vlaneseq
        %v1177 = vshrl.u32 %v1176, 7
        %v1178 = vsub.s32 1, %v1177
        %v1179 = vrot.slane %v1170, %v1178
        %v1182 = vmul.f32 %v1168, %v1175
        %v1183 = vmul.f32 %v1165, %v1179
        %v1184 = vadd.f32 %v1158, %v1182
        %v1185 = vadd.f32 %v1159, %v1183
        %v1186 = vadd.f32 %v1133, %v1184
        %v1187 = vadd.f32 %v1134, %v1185
        %1188 = vrot.lane.b32.xlu0 %v387, 18
        %v1189 = vpop.permute.xlu0 %1188
        %1191 = vrot.lane.b32.xlu0 %v386, 18
        %v1192 = vpop.permute.xlu0 %1191
        %vm1193 = vcmask 146432
        %v1194 = vsel %vm1193, %v1192, %v1189
        %v1197 = vsel %vm1193, %v1189, %v1192
        %s1198 = scalar_lea.vmem %s2, 30
        %v1199 = vld [vmem:[%s1198] sm:$0x3]
        %v1201 = vlaneseq
        %v1202 = vshrl.u32 %v1201, 7
        %v1203 = vsub.s32 0, %v1202
        %v1204 = vrot.slane %v1199, %v1203
        %v1205 = vlaneseq
        %v1206 = vshrl.u32 %v1205, 7
        %v1207 = vsub.s32 1, %v1206
        %v1208 = vrot.slane %v1199, %v1207
        %v1211 = vmul.f32 %v1197, %v1204
        %v1212 = vmul.f32 %v1194, %v1208
        %1213 = vrot.lane.b32.xlu0 %v389, 18
        %v1214 = vpop.permute.xlu0 %1213
        %1216 = vrot.lane.b32.xlu0 %v388, 18
        %v1217 = vpop.permute.xlu0 %1216
        %v1218 = vsel %vm1193, %v1217, %v1214
        %v1221 = vsel %vm1193, %v1214, %v1217
        %s1222 = scalar_lea.vmem %s2, 128
        %v1223 = vld [vmem:[%s1222] sm:$0x3]
        %v1225 = vlaneseq
        %v1226 = vshrl.u32 %v1225, 7
        %v1227 = vsub.s32 0, %v1226
        %v1228 = vrot.slane %v1223, %v1227
        %v1229 = vlaneseq
        %v1230 = vshrl.u32 %v1229, 7
        %v1231 = vsub.s32 1, %v1230
        %v1232 = vrot.slane %v1223, %v1231
        %v1235 = vmul.f32 %v1221, %v1228
        %v1236 = vmul.f32 %v1218, %v1232
        %v1237 = vadd.f32 %v1211, %v1235
        %v1238 = vadd.f32 %v1212, %v1236
        %v1239 = vadd.f32 %v1186, %v1237
        %v1240 = vadd.f32 %v1187, %v1238
        %1241 = vrot.lane.b32.xlu0 %v387, 17
        %v1242 = vpop.permute.xlu0 %1241
        %1244 = vrot.lane.b32.xlu0 %v386, 17
        %v1245 = vpop.permute.xlu0 %1244
        %vm1246 = vcmask 138240
        %v1247 = vsel %vm1246, %v1245, %v1242
        %v1250 = vsel %vm1246, %v1242, %v1245
        %s1251 = scalar_lea.vmem %s2, 32
        %v1252 = vld [vmem:[%s1251] sm:$0x3]
        %v1254 = vlaneseq
        %v1255 = vshrl.u32 %v1254, 7
        %v1256 = vsub.s32 0, %v1255
        %v1257 = vrot.slane %v1252, %v1256
        %v1258 = vlaneseq
        %v1259 = vshrl.u32 %v1258, 7
        %v1260 = vsub.s32 1, %v1259
        %v1261 = vrot.slane %v1252, %v1260
        %v1264 = vmul.f32 %v1250, %v1257
        %v1265 = vmul.f32 %v1247, %v1261
        %1266 = vrot.lane.b32.xlu0 %v389, 17
        %v1267 = vpop.permute.xlu0 %1266
        %1269 = vrot.lane.b32.xlu0 %v388, 17
        %v1270 = vpop.permute.xlu0 %1269
        %v1271 = vsel %vm1246, %v1270, %v1267
        %v1274 = vsel %vm1246, %v1267, %v1270
        %s1275 = scalar_lea.vmem %s2, 130
        %v1276 = vld [vmem:[%s1275] sm:$0x3]
        %v1278 = vlaneseq
        %v1279 = vshrl.u32 %v1278, 7
        %v1280 = vsub.s32 0, %v1279
        %v1281 = vrot.slane %v1276, %v1280
        %v1282 = vlaneseq
        %v1283 = vshrl.u32 %v1282, 7
        %v1284 = vsub.s32 1, %v1283
        %v1285 = vrot.slane %v1276, %v1284
        %v1288 = vmul.f32 %v1274, %v1281
        %v1289 = vmul.f32 %v1271, %v1285
        %v1290 = vadd.f32 %v1264, %v1288
        %v1291 = vadd.f32 %v1265, %v1289
        %v1292 = vadd.f32 %v1239, %v1290
        %v1293 = vadd.f32 %v1240, %v1291
        %1294 = vrot.lane.b32.xlu0 %v387, 16
        %v1295 = vpop.permute.xlu0 %1294
        %1297 = vrot.lane.b32.xlu0 %v386, 16
        %v1298 = vpop.permute.xlu0 %1297
        %vm1299 = vcmask 130048
        %v1300 = vsel %vm1299, %v1298, %v1295
        %v1303 = vsel %vm1299, %v1295, %v1298
        %s1304 = scalar_lea.vmem %s2, 34
        %v1305 = vld [vmem:[%s1304] sm:$0x3]
        %v1307 = vlaneseq
        %v1308 = vshrl.u32 %v1307, 7
        %v1309 = vsub.s32 0, %v1308
        %v1310 = vrot.slane %v1305, %v1309
        %v1311 = vlaneseq
        %v1312 = vshrl.u32 %v1311, 7
        %v1313 = vsub.s32 1, %v1312
        %v1314 = vrot.slane %v1305, %v1313
        %v1317 = vmul.f32 %v1303, %v1310
        %v1318 = vmul.f32 %v1300, %v1314
        %1319 = vrot.lane.b32.xlu0 %v389, 16
        %v1320 = vpop.permute.xlu0 %1319
        %1322 = vrot.lane.b32.xlu0 %v388, 16
        %v1323 = vpop.permute.xlu0 %1322
        %v1324 = vsel %vm1299, %v1323, %v1320
        %v1327 = vsel %vm1299, %v1320, %v1323
        %s1328 = scalar_lea.vmem %s2, 132
        %v1329 = vld [vmem:[%s1328] sm:$0x3]
        %v1331 = vlaneseq
        %v1332 = vshrl.u32 %v1331, 7
        %v1333 = vsub.s32 0, %v1332
        %v1334 = vrot.slane %v1329, %v1333
        %v1335 = vlaneseq
        %v1336 = vshrl.u32 %v1335, 7
        %v1337 = vsub.s32 1, %v1336
        %v1338 = vrot.slane %v1329, %v1337
        %v1341 = vmul.f32 %v1327, %v1334
        %v1342 = vmul.f32 %v1324, %v1338
        %v1343 = vadd.f32 %v1317, %v1341
        %v1344 = vadd.f32 %v1318, %v1342
        %v1345 = vadd.f32 %v1292, %v1343
        %v1346 = vadd.f32 %v1293, %v1344
        %1347 = vrot.lane.b32.xlu0 %v387, 15
        %v1348 = vpop.permute.xlu0 %1347
        %1350 = vrot.lane.b32.xlu0 %v386, 15
        %v1351 = vpop.permute.xlu0 %1350
        %vm1352 = vcmask 121856
        %v1353 = vsel %vm1352, %v1351, %v1348
        %v1356 = vsel %vm1352, %v1348, %v1351
        %s1357 = scalar_lea.vmem %s2, 36
        %v1358 = vld [vmem:[%s1357] sm:$0x3]
        %v1360 = vlaneseq
        %v1361 = vshrl.u32 %v1360, 7
        %v1362 = vsub.s32 0, %v1361
        %v1363 = vrot.slane %v1358, %v1362
        %v1364 = vlaneseq
        %v1365 = vshrl.u32 %v1364, 7
        %v1366 = vsub.s32 1, %v1365
        %v1367 = vrot.slane %v1358, %v1366
        %v1370 = vmul.f32 %v1356, %v1363
        %v1371 = vmul.f32 %v1353, %v1367
        %1372 = vrot.lane.b32.xlu0 %v389, 15
        %v1373 = vpop.permute.xlu0 %1372
        %1375 = vrot.lane.b32.xlu0 %v388, 15
        %v1376 = vpop.permute.xlu0 %1375
        %v1377 = vsel %vm1352, %v1376, %v1373
        %v1380 = vsel %vm1352, %v1373, %v1376
        %s1381 = scalar_lea.vmem %s2, 134
        %v1382 = vld [vmem:[%s1381] sm:$0x3]
        %v1384 = vlaneseq
        %v1385 = vshrl.u32 %v1384, 7
        %v1386 = vsub.s32 0, %v1385
        %v1387 = vrot.slane %v1382, %v1386
        %v1388 = vlaneseq
        %v1389 = vshrl.u32 %v1388, 7
        %v1390 = vsub.s32 1, %v1389
        %v1391 = vrot.slane %v1382, %v1390
        %v1394 = vmul.f32 %v1380, %v1387
        %v1395 = vmul.f32 %v1377, %v1391
        %v1396 = vadd.f32 %v1370, %v1394
        %v1397 = vadd.f32 %v1371, %v1395
        %v1398 = vadd.f32 %v1345, %v1396
        %v1399 = vadd.f32 %v1346, %v1397
        %1400 = vrot.lane.b32.xlu0 %v387, 14
        %v1401 = vpop.permute.xlu0 %1400
        %1403 = vrot.lane.b32.xlu0 %v386, 14
        %v1404 = vpop.permute.xlu0 %1403
        %vm1405 = vcmask 113664
        %v1406 = vsel %vm1405, %v1404, %v1401
        %v1409 = vsel %vm1405, %v1401, %v1404
        %s1410 = scalar_lea.vmem %s2, 38
        %v1411 = vld [vmem:[%s1410] sm:$0x3]
        %v1413 = vlaneseq
        %v1414 = vshrl.u32 %v1413, 7
        %v1415 = vsub.s32 0, %v1414
        %v1416 = vrot.slane %v1411, %v1415
        %v1417 = vlaneseq
        %v1418 = vshrl.u32 %v1417, 7
        %v1419 = vsub.s32 1, %v1418
        %v1420 = vrot.slane %v1411, %v1419
        %v1423 = vmul.f32 %v1409, %v1416
        %v1424 = vmul.f32 %v1406, %v1420
        %1425 = vrot.lane.b32.xlu0 %v389, 14
        %v1426 = vpop.permute.xlu0 %1425
        %1428 = vrot.lane.b32.xlu0 %v388, 14
        %v1429 = vpop.permute.xlu0 %1428
        %v1430 = vsel %vm1405, %v1429, %v1426
        %v1433 = vsel %vm1405, %v1426, %v1429
        %s1434 = scalar_lea.vmem %s2, 136
        %v1435 = vld [vmem:[%s1434] sm:$0x3]
        %v1437 = vlaneseq
        %v1438 = vshrl.u32 %v1437, 7
        %v1439 = vsub.s32 0, %v1438
        %v1440 = vrot.slane %v1435, %v1439
        %v1441 = vlaneseq
        %v1442 = vshrl.u32 %v1441, 7
        %v1443 = vsub.s32 1, %v1442
        %v1444 = vrot.slane %v1435, %v1443
        %v1447 = vmul.f32 %v1433, %v1440
        %v1448 = vmul.f32 %v1430, %v1444
        %v1449 = vadd.f32 %v1423, %v1447
        %v1450 = vadd.f32 %v1424, %v1448
        %v1451 = vadd.f32 %v1398, %v1449
        %v1452 = vadd.f32 %v1399, %v1450
        %1453 = vrot.lane.b32.xlu0 %v387, 13
        %v1454 = vpop.permute.xlu0 %1453
        %1456 = vrot.lane.b32.xlu0 %v386, 13
        %v1457 = vpop.permute.xlu0 %1456
        %vm1458 = vcmask 105472
        %v1459 = vsel %vm1458, %v1457, %v1454
        %v1462 = vsel %vm1458, %v1454, %v1457
        %s1463 = scalar_lea.vmem %s2, 40
        %v1464 = vld [vmem:[%s1463] sm:$0x3]
        %v1466 = vlaneseq
        %v1467 = vshrl.u32 %v1466, 7
        %v1468 = vsub.s32 0, %v1467
        %v1469 = vrot.slane %v1464, %v1468
        %v1470 = vlaneseq
        %v1471 = vshrl.u32 %v1470, 7
        %v1472 = vsub.s32 1, %v1471
        %v1473 = vrot.slane %v1464, %v1472
        %v1476 = vmul.f32 %v1462, %v1469
        %v1477 = vmul.f32 %v1459, %v1473
        %1478 = vrot.lane.b32.xlu0 %v389, 13
        %v1479 = vpop.permute.xlu0 %1478
        %1481 = vrot.lane.b32.xlu0 %v388, 13
        %v1482 = vpop.permute.xlu0 %1481
        %v1483 = vsel %vm1458, %v1482, %v1479
        %v1486 = vsel %vm1458, %v1479, %v1482
        %s1487 = scalar_lea.vmem %s2, 138
        %v1488 = vld [vmem:[%s1487] sm:$0x3]
        %v1490 = vlaneseq
        %v1491 = vshrl.u32 %v1490, 7
        %v1492 = vsub.s32 0, %v1491
        %v1493 = vrot.slane %v1488, %v1492
        %v1494 = vlaneseq
        %v1495 = vshrl.u32 %v1494, 7
        %v1496 = vsub.s32 1, %v1495
        %v1497 = vrot.slane %v1488, %v1496
        %v1500 = vmul.f32 %v1486, %v1493
        %v1501 = vmul.f32 %v1483, %v1497
        %v1502 = vadd.f32 %v1476, %v1500
        %v1503 = vadd.f32 %v1477, %v1501
        %v1504 = vadd.f32 %v1451, %v1502
        %v1505 = vadd.f32 %v1452, %v1503
        %1506 = vrot.lane.b32.xlu0 %v387, 3
        %v1507 = vpop.permute.xlu0 %1506
        %1509 = vrot.lane.b32.xlu0 %v386, 3
        %v1510 = vpop.permute.xlu0 %1509
        %vm1511 = vcmask 23552
        %v1512 = vsel %vm1511, %v1510, %v1507
        %v1515 = vsel %vm1511, %v1507, %v1510
        %s1516 = scalar_lea.vmem %s2, 42
        %v1517 = vld [vmem:[%s1516] sm:$0x3]
        %v1519 = vlaneseq
        %v1520 = vshrl.u32 %v1519, 7
        %v1521 = vsub.s32 0, %v1520
        %v1522 = vrot.slane %v1517, %v1521
        %v1523 = vlaneseq
        %v1524 = vshrl.u32 %v1523, 7
        %v1525 = vsub.s32 1, %v1524
        %v1526 = vrot.slane %v1517, %v1525
        %v1529 = vmul.f32 %v1515, %v1522
        %v1530 = vmul.f32 %v1512, %v1526
        %1531 = vrot.lane.b32.xlu0 %v389, 3
        %v1532 = vpop.permute.xlu0 %1531
        %1534 = vrot.lane.b32.xlu0 %v388, 3
        %v1535 = vpop.permute.xlu0 %1534
        %v1536 = vsel %vm1511, %v1535, %v1532
        %v1539 = vsel %vm1511, %v1532, %v1535
        %s1540 = scalar_lea.vmem %s2, 140
        %v1541 = vld [vmem:[%s1540] sm:$0x3]
        %v1543 = vlaneseq
        %v1544 = vshrl.u32 %v1543, 7
        %v1545 = vsub.s32 0, %v1544
        %v1546 = vrot.slane %v1541, %v1545
        %v1547 = vlaneseq
        %v1548 = vshrl.u32 %v1547, 7
        %v1549 = vsub.s32 1, %v1548
        %v1550 = vrot.slane %v1541, %v1549
        %v1553 = vmul.f32 %v1539, %v1546
        %v1554 = vmul.f32 %v1536, %v1550
        %v1555 = vadd.f32 %v1529, %v1553
        %v1556 = vadd.f32 %v1530, %v1554
        %v1557 = vadd.f32 %v1504, %v1555
        %v1558 = vadd.f32 %v1505, %v1556
        %1559 = vrot.lane.b32.xlu0 %v387, 2
        %v1560 = vpop.permute.xlu0 %1559
        %1562 = vrot.lane.b32.xlu0 %v386, 2
        %v1563 = vpop.permute.xlu0 %1562
        %vm1564 = vcmask 15360
        %v1565 = vsel %vm1564, %v1563, %v1560
        %v1568 = vsel %vm1564, %v1560, %v1563
        %s1569 = scalar_lea.vmem %s2, 44
        %v1570 = vld [vmem:[%s1569] sm:$0x3]
        %v1572 = vlaneseq
        %v1573 = vshrl.u32 %v1572, 7
        %v1574 = vsub.s32 0, %v1573
        %v1575 = vrot.slane %v1570, %v1574
        %v1576 = vlaneseq
        %v1577 = vshrl.u32 %v1576, 7
        %v1578 = vsub.s32 1, %v1577
        %v1579 = vrot.slane %v1570, %v1578
        %v1582 = vmul.f32 %v1568, %v1575
        %v1583 = vmul.f32 %v1565, %v1579
        %1584 = vrot.lane.b32.xlu0 %v389, 2
        %v1585 = vpop.permute.xlu0 %1584
        %1587 = vrot.lane.b32.xlu0 %v388, 2
        %v1588 = vpop.permute.xlu0 %1587
        %v1589 = vsel %vm1564, %v1588, %v1585
        %v1592 = vsel %vm1564, %v1585, %v1588
        %s1593 = scalar_lea.vmem %s2, 142
        %v1594 = vld [vmem:[%s1593] sm:$0x3]
        %v1596 = vlaneseq
        %v1597 = vshrl.u32 %v1596, 7
        %v1598 = vsub.s32 0, %v1597
        %v1599 = vrot.slane %v1594, %v1598
        %v1600 = vlaneseq
        %v1601 = vshrl.u32 %v1600, 7
        %v1602 = vsub.s32 1, %v1601
        %v1603 = vrot.slane %v1594, %v1602
        %v1606 = vmul.f32 %v1592, %v1599
        %v1607 = vmul.f32 %v1589, %v1603
        %v1608 = vadd.f32 %v1582, %v1606
        %v1609 = vadd.f32 %v1583, %v1607
        %v1610 = vadd.f32 %v1557, %v1608
        %v1611 = vadd.f32 %v1558, %v1609
        %1612 = vrot.lane.b32.xlu0 %v387, 1
        %v1613 = vpop.permute.xlu0 %1612
        %1615 = vrot.lane.b32.xlu0 %v386, 1
        %v1616 = vpop.permute.xlu0 %1615
        %v1617 = vsel %vm257, %v1616, %v1613
        %v1620 = vsel %vm257, %v1613, %v1616
        %s1621 = scalar_lea.vmem %s2, 46
        %v1622 = vld [vmem:[%s1621] sm:$0x3]
        %v1624 = vlaneseq
        %v1625 = vshrl.u32 %v1624, 7
        %v1626 = vsub.s32 0, %v1625
        %v1627 = vrot.slane %v1622, %v1626
        %v1628 = vlaneseq
        %v1629 = vshrl.u32 %v1628, 7
        %v1630 = vsub.s32 1, %v1629
        %v1631 = vrot.slane %v1622, %v1630
        %v1634 = vmul.f32 %v1620, %v1627
        %v1635 = vmul.f32 %v1617, %v1631
        %1636 = vrot.lane.b32.xlu0 %v389, 1
        %v1637 = vpop.permute.xlu0 %1636
        %1639 = vrot.lane.b32.xlu0 %v388, 1
        %v1640 = vpop.permute.xlu0 %1639
        %v1641 = vsel %vm257, %v1640, %v1637
        %v1644 = vsel %vm257, %v1637, %v1640
        %s1645 = scalar_lea.vmem %s2, 144
        %v1646 = vld [vmem:[%s1645] sm:$0x3]
        %v1648 = vlaneseq
        %v1649 = vshrl.u32 %v1648, 7
        %v1650 = vsub.s32 0, %v1649
        %v1651 = vrot.slane %v1646, %v1650
        %v1652 = vlaneseq
        %v1653 = vshrl.u32 %v1652, 7
        %v1654 = vsub.s32 1, %v1653
        %v1655 = vrot.slane %v1646, %v1654
        %v1658 = vmul.f32 %v1644, %v1651
        %v1659 = vmul.f32 %v1641, %v1655
        %v1660 = vadd.f32 %v1634, %v1658
        %v1661 = vadd.f32 %v1635, %v1659
        %v1662 = vadd.f32 %v1610, %v1660
        %v1663 = vadd.f32 %v1611, %v1661
        %s1664 = scalar_lea.vmem %s2, 48
        %v1665 = vld [vmem:[%s1664] sm:$0x3]
        %v1667 = vlaneseq
        %v1668 = vshrl.u32 %v1667, 7
        %v1669 = vsub.s32 0, %v1668
        %v1670 = vrot.slane %v1665, %v1669
        %v1671 = vlaneseq
        %v1672 = vshrl.u32 %v1671, 7
        %v1673 = vsub.s32 1, %v1672
        %v1674 = vrot.slane %v1665, %v1673
        %v1677 = vmul.f32 %v386, %v1670
        %v1678 = vmul.f32 %v387, %v1674
        %s1679 = scalar_lea.vmem %s2, 146
        %v1680 = vld [vmem:[%s1679] sm:$0x3]
        %v1682 = vlaneseq
        %v1683 = vshrl.u32 %v1682, 7
        %v1684 = vsub.s32 0, %v1683
        %v1685 = vrot.slane %v1680, %v1684
        %v1686 = vlaneseq
        %v1687 = vshrl.u32 %v1686, 7
        %v1688 = vsub.s32 1, %v1687
        %v1689 = vrot.slane %v1680, %v1688
        %v1692 = vmul.f32 %v388, %v1685
        %v1693 = vmul.f32 %v389, %v1689
        %v1694 = vadd.f32 %v1677, %v1692
        %v1695 = vadd.f32 %v1678, %v1693
        %v1696 = vadd.f32 %v1662, %v1694
        %v1697 = vadd.f32 %v1663, %v1695
        %1698 = vrot.lane.b32.xlu0 %v386, 127
        %v1699 = vpop.permute.xlu0 %1698
        %1700 = vrot.lane.b32.xlu0 %v387, 127
        %v1701 = vpop.permute.xlu0 %1700
        %vm1702 = vcmask 1039360
        %v1703 = vsel %vm1702, %v1699, %v1701
        %v1707 = vsel %vm1702, %v1701, %v1699
        %s1708 = scalar_lea.vmem %s2, 50
        %v1709 = vld [vmem:[%s1708] sm:$0x3]
        %v1711 = vlaneseq
        %v1712 = vshrl.u32 %v1711, 7
        %v1713 = vsub.s32 0, %v1712
        %v1714 = vrot.slane %v1709, %v1713
        %v1715 = vlaneseq
        %v1716 = vshrl.u32 %v1715, 7
        %v1717 = vsub.s32 1, %v1716
        %v1718 = vrot.slane %v1709, %v1717
        %v1721 = vmul.f32 %v1703, %v1714
        %v1722 = vmul.f32 %v1707, %v1718
        %1723 = vrot.lane.b32.xlu0 %v388, 127
        %v1724 = vpop.permute.xlu0 %1723
        %1725 = vrot.lane.b32.xlu0 %v389, 127
        %v1726 = vpop.permute.xlu0 %1725
        %v1727 = vsel %vm1702, %v1724, %v1726
        %v1731 = vsel %vm1702, %v1726, %v1724
        %s1732 = scalar_lea.vmem %s2, 148
        %v1733 = vld [vmem:[%s1732] sm:$0x3]
        %v1735 = vlaneseq
        %v1736 = vshrl.u32 %v1735, 7
        %v1737 = vsub.s32 0, %v1736
        %v1738 = vrot.slane %v1733, %v1737
        %v1739 = vlaneseq
        %v1740 = vshrl.u32 %v1739, 7
        %v1741 = vsub.s32 1, %v1740
        %v1742 = vrot.slane %v1733, %v1741
        %v1745 = vmul.f32 %v1727, %v1738
        %v1746 = vmul.f32 %v1731, %v1742
        %v1747 = vadd.f32 %v1721, %v1745
        %v1748 = vadd.f32 %v1722, %v1746
        %v1749 = vadd.f32 %v1696, %v1747
        %v1750 = vadd.f32 %v1697, %v1748
        %1751 = vrot.lane.b32.xlu0 %v386, 126
        %v1752 = vpop.permute.xlu0 %1751
        %1753 = vrot.lane.b32.xlu0 %v387, 126
        %v1754 = vpop.permute.xlu0 %1753
        %vm1755 = vcmask 1031168
        %v1756 = vsel %vm1755, %v1752, %v1754
        %v1760 = vsel %vm1755, %v1754, %v1752
        %s1761 = scalar_lea.vmem %s2, 52
        %v1762 = vld [vmem:[%s1761] sm:$0x3]
        %v1764 = vlaneseq
        %v1765 = vshrl.u32 %v1764, 7
        %v1766 = vsub.s32 0, %v1765
        %v1767 = vrot.slane %v1762, %v1766
        %v1768 = vlaneseq
        %v1769 = vshrl.u32 %v1768, 7
        %v1770 = vsub.s32 1, %v1769
        %v1771 = vrot.slane %v1762, %v1770
        %v1774 = vmul.f32 %v1756, %v1767
        %v1775 = vmul.f32 %v1760, %v1771
        %1776 = vrot.lane.b32.xlu0 %v388, 126
        %v1777 = vpop.permute.xlu0 %1776
        %1778 = vrot.lane.b32.xlu0 %v389, 126
        %v1779 = vpop.permute.xlu0 %1778
        %v1780 = vsel %vm1755, %v1777, %v1779
        %v1784 = vsel %vm1755, %v1779, %v1777
        %s1785 = scalar_lea.vmem %s2, 150
        %v1786 = vld [vmem:[%s1785] sm:$0x3]
        %v1788 = vlaneseq
        %v1789 = vshrl.u32 %v1788, 7
        %v1790 = vsub.s32 0, %v1789
        %v1791 = vrot.slane %v1786, %v1790
        %v1792 = vlaneseq
        %v1793 = vshrl.u32 %v1792, 7
        %v1794 = vsub.s32 1, %v1793
        %v1795 = vrot.slane %v1786, %v1794
        %v1798 = vmul.f32 %v1780, %v1791
        %v1799 = vmul.f32 %v1784, %v1795
        %v1800 = vadd.f32 %v1774, %v1798
        %v1801 = vadd.f32 %v1775, %v1799
        %v1802 = vadd.f32 %v1749, %v1800
        %v1803 = vadd.f32 %v1750, %v1801
        %1804 = vrot.lane.b32.xlu0 %v386, 125
        %v1805 = vpop.permute.xlu0 %1804
        %1806 = vrot.lane.b32.xlu0 %v387, 125
        %v1807 = vpop.permute.xlu0 %1806
        %vm1808 = vcmask 1022976
        %v1809 = vsel %vm1808, %v1805, %v1807
        %v1813 = vsel %vm1808, %v1807, %v1805
        %s1814 = scalar_lea.vmem %s2, 54
        %v1815 = vld [vmem:[%s1814] sm:$0x3]
        %v1817 = vlaneseq
        %v1818 = vshrl.u32 %v1817, 7
        %v1819 = vsub.s32 0, %v1818
        %v1820 = vrot.slane %v1815, %v1819
        %v1821 = vlaneseq
        %v1822 = vshrl.u32 %v1821, 7
        %v1823 = vsub.s32 1, %v1822
        %v1824 = vrot.slane %v1815, %v1823
        %v1827 = vmul.f32 %v1809, %v1820
        %v1828 = vmul.f32 %v1813, %v1824
        %1829 = vrot.lane.b32.xlu0 %v388, 125
        %v1830 = vpop.permute.xlu0 %1829
        %1831 = vrot.lane.b32.xlu0 %v389, 125
        %v1832 = vpop.permute.xlu0 %1831
        %v1833 = vsel %vm1808, %v1830, %v1832
        %v1837 = vsel %vm1808, %v1832, %v1830
        %s1838 = scalar_lea.vmem %s2, 152
        %v1839 = vld [vmem:[%s1838] sm:$0x3]
        %v1841 = vlaneseq
        %v1842 = vshrl.u32 %v1841, 7
        %v1843 = vsub.s32 0, %v1842
        %v1844 = vrot.slane %v1839, %v1843
        %v1845 = vlaneseq
        %v1846 = vshrl.u32 %v1845, 7
        %v1847 = vsub.s32 1, %v1846
        %v1848 = vrot.slane %v1839, %v1847
        %v1851 = vmul.f32 %v1833, %v1844
        %v1852 = vmul.f32 %v1837, %v1848
        %v1853 = vadd.f32 %v1827, %v1851
        %v1854 = vadd.f32 %v1828, %v1852
        %v1855 = vadd.f32 %v1802, %v1853
        %v1856 = vadd.f32 %v1803, %v1854
        %1857 = vrot.lane.b32.xlu0 %v386, 115
        %v1858 = vpop.permute.xlu0 %1857
        %1859 = vrot.lane.b32.xlu0 %v387, 115
        %v1860 = vpop.permute.xlu0 %1859
        %vm1861 = vcmask 941056
        %v1862 = vsel %vm1861, %v1858, %v1860
        %v1866 = vsel %vm1861, %v1860, %v1858
        %s1867 = scalar_lea.vmem %s2, 56
        %v1868 = vld [vmem:[%s1867] sm:$0x3]
        %v1870 = vlaneseq
        %v1871 = vshrl.u32 %v1870, 7
        %v1872 = vsub.s32 0, %v1871
        %v1873 = vrot.slane %v1868, %v1872
        %v1874 = vlaneseq
        %v1875 = vshrl.u32 %v1874, 7
        %v1876 = vsub.s32 1, %v1875
        %v1877 = vrot.slane %v1868, %v1876
        %v1880 = vmul.f32 %v1862, %v1873
        %v1881 = vmul.f32 %v1866, %v1877
        %1882 = vrot.lane.b32.xlu0 %v388, 115
        %v1883 = vpop.permute.xlu0 %1882
        %1884 = vrot.lane.b32.xlu0 %v389, 115
        %v1885 = vpop.permute.xlu0 %1884
        %v1886 = vsel %vm1861, %v1883, %v1885
        %v1890 = vsel %vm1861, %v1885, %v1883
        %s1891 = scalar_lea.vmem %s2, 154
        %v1892 = vld [vmem:[%s1891] sm:$0x3]
        %v1894 = vlaneseq
        %v1895 = vshrl.u32 %v1894, 7
        %v1896 = vsub.s32 0, %v1895
        %v1897 = vrot.slane %v1892, %v1896
        %v1898 = vlaneseq
        %v1899 = vshrl.u32 %v1898, 7
        %v1900 = vsub.s32 1, %v1899
        %v1901 = vrot.slane %v1892, %v1900
        %v1904 = vmul.f32 %v1886, %v1897
        %v1905 = vmul.f32 %v1890, %v1901
        %v1906 = vadd.f32 %v1880, %v1904
        %v1907 = vadd.f32 %v1881, %v1905
        %v1908 = vadd.f32 %v1855, %v1906
        %v1909 = vadd.f32 %v1856, %v1907
        %1910 = vrot.lane.b32.xlu0 %v386, 114
        %v1911 = vpop.permute.xlu0 %1910
        %1912 = vrot.lane.b32.xlu0 %v387, 114
        %v1913 = vpop.permute.xlu0 %1912
        %vm1914 = vcmask 932864
        %v1915 = vsel %vm1914, %v1911, %v1913
        %v1919 = vsel %vm1914, %v1913, %v1911
        %s1920 = scalar_lea.vmem %s2, 58
        %v1921 = vld [vmem:[%s1920] sm:$0x3]
        %v1923 = vlaneseq
        %v1924 = vshrl.u32 %v1923, 7
        %v1925 = vsub.s32 0, %v1924
        %v1926 = vrot.slane %v1921, %v1925
        %v1927 = vlaneseq
        %v1928 = vshrl.u32 %v1927, 7
        %v1929 = vsub.s32 1, %v1928
        %v1930 = vrot.slane %v1921, %v1929
        %v1933 = vmul.f32 %v1915, %v1926
        %v1934 = vmul.f32 %v1919, %v1930
        %1935 = vrot.lane.b32.xlu0 %v388, 114
        %v1936 = vpop.permute.xlu0 %1935
        %1937 = vrot.lane.b32.xlu0 %v389, 114
        %v1938 = vpop.permute.xlu0 %1937
        %v1939 = vsel %vm1914, %v1936, %v1938
        %v1943 = vsel %vm1914, %v1938, %v1936
        %s1944 = scalar_lea.vmem %s2, 156
        %v1945 = vld [vmem:[%s1944] sm:$0x3]
        %v1947 = vlaneseq
        %v1948 = vshrl.u32 %v1947, 7
        %v1949 = vsub.s32 0, %v1948
        %v1950 = vrot.slane %v1945, %v1949
        %v1951 = vlaneseq
        %v1952 = vshrl.u32 %v1951, 7
        %v1953 = vsub.s32 1, %v1952
        %v1954 = vrot.slane %v1945, %v1953
        %v1957 = vmul.f32 %v1939, %v1950
        %v1958 = vmul.f32 %v1943, %v1954
        %v1959 = vadd.f32 %v1933, %v1957
        %v1960 = vadd.f32 %v1934, %v1958
        %v1961 = vadd.f32 %v1908, %v1959
        %v1962 = vadd.f32 %v1909, %v1960
        %1963 = vrot.lane.b32.xlu0 %v386, 113
        %v1964 = vpop.permute.xlu0 %1963
        %1965 = vrot.lane.b32.xlu0 %v387, 113
        %v1966 = vpop.permute.xlu0 %1965
        %vm1967 = vcmask 924672
        %v1968 = vsel %vm1967, %v1964, %v1966
        %v1972 = vsel %vm1967, %v1966, %v1964
        %s1973 = scalar_lea.vmem %s2, 60
        %v1974 = vld [vmem:[%s1973] sm:$0x3]
        %v1976 = vlaneseq
        %v1977 = vshrl.u32 %v1976, 7
        %v1978 = vsub.s32 0, %v1977
        %v1979 = vrot.slane %v1974, %v1978
        %v1980 = vlaneseq
        %v1981 = vshrl.u32 %v1980, 7
        %v1982 = vsub.s32 1, %v1981
        %v1983 = vrot.slane %v1974, %v1982
        %v1986 = vmul.f32 %v1968, %v1979
        %v1987 = vmul.f32 %v1972, %v1983
        %1988 = vrot.lane.b32.xlu0 %v388, 113
        %v1989 = vpop.permute.xlu0 %1988
        %1990 = vrot.lane.b32.xlu0 %v389, 113
        %v1991 = vpop.permute.xlu0 %1990
        %v1992 = vsel %vm1967, %v1989, %v1991
        %v1996 = vsel %vm1967, %v1991, %v1989
        %s1997 = scalar_lea.vmem %s2, 158
        %v1998 = vld [vmem:[%s1997] sm:$0x3]
        %v2000 = vlaneseq
        %v2001 = vshrl.u32 %v2000, 7
        %v2002 = vsub.s32 0, %v2001
        %v2003 = vrot.slane %v1998, %v2002
        %v2004 = vlaneseq
        %v2005 = vshrl.u32 %v2004, 7
        %v2006 = vsub.s32 1, %v2005
        %v2007 = vrot.slane %v1998, %v2006
        %v2010 = vmul.f32 %v1992, %v2003
        %v2011 = vmul.f32 %v1996, %v2007
        %v2012 = vadd.f32 %v1986, %v2010
        %v2013 = vadd.f32 %v1987, %v2011
        %v2014 = vadd.f32 %v1961, %v2012
        %v2015 = vadd.f32 %v1962, %v2013
        %2016 = vrot.lane.b32.xlu0 %v386, 112
        %v2017 = vpop.permute.xlu0 %2016
        %2018 = vrot.lane.b32.xlu0 %v387, 112
        %v2019 = vpop.permute.xlu0 %2018
        %vm2020 = vcmask 916480
        %v2021 = vsel %vm2020, %v2017, %v2019
        %v2025 = vsel %vm2020, %v2019, %v2017
        %s2026 = scalar_lea.vmem %s2, 62
        %v2027 = vld [vmem:[%s2026] sm:$0x3]
        %v2029 = vlaneseq
        %v2030 = vshrl.u32 %v2029, 7
        %v2031 = vsub.s32 0, %v2030
        %v2032 = vrot.slane %v2027, %v2031
        %v2033 = vlaneseq
        %v2034 = vshrl.u32 %v2033, 7
        %v2035 = vsub.s32 1, %v2034
        %v2036 = vrot.slane %v2027, %v2035
        %v2039 = vmul.f32 %v2021, %v2032
        %v2040 = vmul.f32 %v2025, %v2036
        %2041 = vrot.lane.b32.xlu0 %v388, 112
        %v2042 = vpop.permute.xlu0 %2041
        %2043 = vrot.lane.b32.xlu0 %v389, 112
        %v2044 = vpop.permute.xlu0 %2043
        %v2045 = vsel %vm2020, %v2042, %v2044
        %v2049 = vsel %vm2020, %v2044, %v2042
        %s2050 = scalar_lea.vmem %s2, 160
        %v2051 = vld [vmem:[%s2050] sm:$0x3]
        %v2053 = vlaneseq
        %v2054 = vshrl.u32 %v2053, 7
        %v2055 = vsub.s32 0, %v2054
        %v2056 = vrot.slane %v2051, %v2055
        %v2057 = vlaneseq
        %v2058 = vshrl.u32 %v2057, 7
        %v2059 = vsub.s32 1, %v2058
        %v2060 = vrot.slane %v2051, %v2059
        %v2063 = vmul.f32 %v2045, %v2056
        %v2064 = vmul.f32 %v2049, %v2060
        %v2065 = vadd.f32 %v2039, %v2063
        %v2066 = vadd.f32 %v2040, %v2064
        %v2067 = vadd.f32 %v2014, %v2065
        %v2068 = vadd.f32 %v2015, %v2066
        %2069 = vrot.lane.b32.xlu0 %v386, 111
        %v2070 = vpop.permute.xlu0 %2069
        %2071 = vrot.lane.b32.xlu0 %v387, 111
        %v2072 = vpop.permute.xlu0 %2071
        %vm2073 = vcmask 908288
        %v2074 = vsel %vm2073, %v2070, %v2072
        %v2078 = vsel %vm2073, %v2072, %v2070
        %s2079 = scalar_lea.vmem %s2, 64
        %v2080 = vld [vmem:[%s2079] sm:$0x3]
        %v2082 = vlaneseq
        %v2083 = vshrl.u32 %v2082, 7
        %v2084 = vsub.s32 0, %v2083
        %v2085 = vrot.slane %v2080, %v2084
        %v2086 = vlaneseq
        %v2087 = vshrl.u32 %v2086, 7
        %v2088 = vsub.s32 1, %v2087
        %v2089 = vrot.slane %v2080, %v2088
        %v2092 = vmul.f32 %v2074, %v2085
        %v2093 = vmul.f32 %v2078, %v2089
        %2094 = vrot.lane.b32.xlu0 %v388, 111
        %v2095 = vpop.permute.xlu0 %2094
        %2096 = vrot.lane.b32.xlu0 %v389, 111
        %v2097 = vpop.permute.xlu0 %2096
        %v2098 = vsel %vm2073, %v2095, %v2097
        %v2102 = vsel %vm2073, %v2097, %v2095
        %s2103 = scalar_lea.vmem %s2, 162
        %v2104 = vld [vmem:[%s2103] sm:$0x3]
        %v2106 = vlaneseq
        %v2107 = vshrl.u32 %v2106, 7
        %v2108 = vsub.s32 0, %v2107
        %v2109 = vrot.slane %v2104, %v2108
        %v2110 = vlaneseq
        %v2111 = vshrl.u32 %v2110, 7
        %v2112 = vsub.s32 1, %v2111
        %v2113 = vrot.slane %v2104, %v2112
        %v2116 = vmul.f32 %v2098, %v2109
        %v2117 = vmul.f32 %v2102, %v2113
        %v2118 = vadd.f32 %v2092, %v2116
        %v2119 = vadd.f32 %v2093, %v2117
        %v2120 = vadd.f32 %v2067, %v2118
        %v2121 = vadd.f32 %v2068, %v2119
        %2122 = vrot.lane.b32.xlu0 %v386, 110
        %v2123 = vpop.permute.xlu0 %2122
        %2124 = vrot.lane.b32.xlu0 %v387, 110
        %v2125 = vpop.permute.xlu0 %2124
        %vm2126 = vcmask 900096
        %v2127 = vsel %vm2126, %v2123, %v2125
        %v2131 = vsel %vm2126, %v2125, %v2123
        %s2132 = scalar_lea.vmem %s2, 66
        %v2133 = vld [vmem:[%s2132] sm:$0x3]
        %v2135 = vlaneseq
        %v2136 = vshrl.u32 %v2135, 7
        %v2137 = vsub.s32 0, %v2136
        %v2138 = vrot.slane %v2133, %v2137
        %v2139 = vlaneseq
        %v2140 = vshrl.u32 %v2139, 7
        %v2141 = vsub.s32 1, %v2140
        %v2142 = vrot.slane %v2133, %v2141
        %v2145 = vmul.f32 %v2127, %v2138
        %v2146 = vmul.f32 %v2131, %v2142
        %2147 = vrot.lane.b32.xlu0 %v388, 110
        %v2148 = vpop.permute.xlu0 %2147
        %2149 = vrot.lane.b32.xlu0 %v389, 110
        %v2150 = vpop.permute.xlu0 %2149
        %v2151 = vsel %vm2126, %v2148, %v2150
        %v2155 = vsel %vm2126, %v2150, %v2148
        %s2156 = scalar_lea.vmem %s2, 164
        %v2157 = vld [vmem:[%s2156] sm:$0x3]
        %v2159 = vlaneseq
        %v2160 = vshrl.u32 %v2159, 7
        %v2161 = vsub.s32 0, %v2160
        %v2162 = vrot.slane %v2157, %v2161
        %v2163 = vlaneseq
        %v2164 = vshrl.u32 %v2163, 7
        %v2165 = vsub.s32 1, %v2164
        %v2166 = vrot.slane %v2157, %v2165
        %v2169 = vmul.f32 %v2151, %v2162
        %v2170 = vmul.f32 %v2155, %v2166
        %v2171 = vadd.f32 %v2145, %v2169
        %v2172 = vadd.f32 %v2146, %v2170
        %v2173 = vadd.f32 %v2120, %v2171
        %v2174 = vadd.f32 %v2121, %v2172
        %2175 = vrot.lane.b32.xlu0 %v386, 109
        %v2176 = vpop.permute.xlu0 %2175
        %2177 = vrot.lane.b32.xlu0 %v387, 109
        %v2178 = vpop.permute.xlu0 %2177
        %vm2179 = vcmask 891904
        %v2180 = vsel %vm2179, %v2176, %v2178
        %v2184 = vsel %vm2179, %v2178, %v2176
        %s2185 = scalar_lea.vmem %s2, 68
        %v2186 = vld [vmem:[%s2185] sm:$0x3]
        %v2188 = vlaneseq
        %v2189 = vshrl.u32 %v2188, 7
        %v2190 = vsub.s32 0, %v2189
        %v2191 = vrot.slane %v2186, %v2190
        %v2192 = vlaneseq
        %v2193 = vshrl.u32 %v2192, 7
        %v2194 = vsub.s32 1, %v2193
        %v2195 = vrot.slane %v2186, %v2194
        %v2198 = vmul.f32 %v2180, %v2191
        %v2199 = vmul.f32 %v2184, %v2195
        %2200 = vrot.lane.b32.xlu0 %v388, 109
        %v2201 = vpop.permute.xlu0 %2200
        %2202 = vrot.lane.b32.xlu0 %v389, 109
        %v2203 = vpop.permute.xlu0 %2202
        %v2204 = vsel %vm2179, %v2201, %v2203
        %v2208 = vsel %vm2179, %v2203, %v2201
        %s2209 = scalar_lea.vmem %s2, 166
        %v2210 = vld [vmem:[%s2209] sm:$0x3]
        %v2212 = vlaneseq
        %v2213 = vshrl.u32 %v2212, 7
        %v2214 = vsub.s32 0, %v2213
        %v2215 = vrot.slane %v2210, %v2214
        %v2216 = vlaneseq
        %v2217 = vshrl.u32 %v2216, 7
        %v2218 = vsub.s32 1, %v2217
        %v2219 = vrot.slane %v2210, %v2218
        %v2222 = vmul.f32 %v2204, %v2215
        %v2223 = vmul.f32 %v2208, %v2219
        %v2224 = vadd.f32 %v2198, %v2222
        %v2225 = vadd.f32 %v2199, %v2223
        %v2226 = vadd.f32 %v2173, %v2224
        %v2227 = vadd.f32 %v2174, %v2225
        %2228 = vrot.lane.b32.xlu0 %v386, 99
        %v2229 = vpop.permute.xlu0 %2228
        %2230 = vrot.lane.b32.xlu0 %v387, 99
        %v2231 = vpop.permute.xlu0 %2230
        %vm2232 = vcmask 809984
        %v2233 = vsel %vm2232, %v2229, %v2231
        %v2237 = vsel %vm2232, %v2231, %v2229
        %s2238 = scalar_lea.vmem %s2, 70
        %v2239 = vld [vmem:[%s2238] sm:$0x3]
        %v2241 = vlaneseq
        %v2242 = vshrl.u32 %v2241, 7
        %v2243 = vsub.s32 0, %v2242
        %v2244 = vrot.slane %v2239, %v2243
        %v2245 = vlaneseq
        %v2246 = vshrl.u32 %v2245, 7
        %v2247 = vsub.s32 1, %v2246
        %v2248 = vrot.slane %v2239, %v2247
        %v2251 = vmul.f32 %v2233, %v2244
        %v2252 = vmul.f32 %v2237, %v2248
        %2253 = vrot.lane.b32.xlu0 %v388, 99
        %v2254 = vpop.permute.xlu0 %2253
        %2255 = vrot.lane.b32.xlu0 %v389, 99
        %v2256 = vpop.permute.xlu0 %2255
        %v2257 = vsel %vm2232, %v2254, %v2256
        %v2261 = vsel %vm2232, %v2256, %v2254
        %s2262 = scalar_lea.vmem %s2, 168
        %v2263 = vld [vmem:[%s2262] sm:$0x3]
        %v2265 = vlaneseq
        %v2266 = vshrl.u32 %v2265, 7
        %v2267 = vsub.s32 0, %v2266
        %v2268 = vrot.slane %v2263, %v2267
        %v2269 = vlaneseq
        %v2270 = vshrl.u32 %v2269, 7
        %v2271 = vsub.s32 1, %v2270
        %v2272 = vrot.slane %v2263, %v2271
        %v2275 = vmul.f32 %v2257, %v2268
        %v2276 = vmul.f32 %v2261, %v2272
        %v2277 = vadd.f32 %v2251, %v2275
        %v2278 = vadd.f32 %v2252, %v2276
        %v2279 = vadd.f32 %v2226, %v2277
        %v2280 = vadd.f32 %v2227, %v2278
        %2281 = vrot.lane.b32.xlu0 %v386, 98
        %v2282 = vpop.permute.xlu0 %2281
        %2283 = vrot.lane.b32.xlu0 %v387, 98
        %v2284 = vpop.permute.xlu0 %2283
        %vm2285 = vcmask 801792
        %v2286 = vsel %vm2285, %v2282, %v2284
        %v2290 = vsel %vm2285, %v2284, %v2282
        %s2291 = scalar_lea.vmem %s2, 72
        %v2292 = vld [vmem:[%s2291] sm:$0x3]
        %v2294 = vlaneseq
        %v2295 = vshrl.u32 %v2294, 7
        %v2296 = vsub.s32 0, %v2295
        %v2297 = vrot.slane %v2292, %v2296
        %v2298 = vlaneseq
        %v2299 = vshrl.u32 %v2298, 7
        %v2300 = vsub.s32 1, %v2299
        %v2301 = vrot.slane %v2292, %v2300
        %v2304 = vmul.f32 %v2286, %v2297
        %v2305 = vmul.f32 %v2290, %v2301
        %2306 = vrot.lane.b32.xlu0 %v388, 98
        %v2307 = vpop.permute.xlu0 %2306
        %2308 = vrot.lane.b32.xlu0 %v389, 98
        %v2309 = vpop.permute.xlu0 %2308
        %v2310 = vsel %vm2285, %v2307, %v2309
        %v2314 = vsel %vm2285, %v2309, %v2307
        %s2315 = scalar_lea.vmem %s2, 170
        %v2316 = vld [vmem:[%s2315] sm:$0x3]
        %v2318 = vlaneseq
        %v2319 = vshrl.u32 %v2318, 7
        %v2320 = vsub.s32 0, %v2319
        %v2321 = vrot.slane %v2316, %v2320
        %v2322 = vlaneseq
        %v2323 = vshrl.u32 %v2322, 7
        %v2324 = vsub.s32 1, %v2323
        %v2325 = vrot.slane %v2316, %v2324
        %v2328 = vmul.f32 %v2310, %v2321
        %v2329 = vmul.f32 %v2314, %v2325
        %v2330 = vadd.f32 %v2304, %v2328
        %v2331 = vadd.f32 %v2305, %v2329
        %v2332 = vadd.f32 %v2279, %v2330
        %v2333 = vadd.f32 %v2280, %v2331
        %2334 = vrot.lane.b32.xlu0 %v386, 97
        %v2335 = vpop.permute.xlu0 %2334
        %2336 = vrot.lane.b32.xlu0 %v387, 97
        %v2337 = vpop.permute.xlu0 %2336
        %vm2338 = vcmask 793600
        %v2339 = vsel %vm2338, %v2335, %v2337
        %v2343 = vsel %vm2338, %v2337, %v2335
        %s2344 = scalar_lea.vmem %s2, 74
        %v2345 = vld [vmem:[%s2344] sm:$0x3]
        %v2347 = vlaneseq
        %v2348 = vshrl.u32 %v2347, 7
        %v2349 = vsub.s32 0, %v2348
        %v2350 = vrot.slane %v2345, %v2349
        %v2351 = vlaneseq
        %v2352 = vshrl.u32 %v2351, 7
        %v2353 = vsub.s32 1, %v2352
        %v2354 = vrot.slane %v2345, %v2353
        %v2357 = vmul.f32 %v2339, %v2350
        %v2358 = vmul.f32 %v2343, %v2354
        %2359 = vrot.lane.b32.xlu0 %v388, 97
        %v2360 = vpop.permute.xlu0 %2359
        %2361 = vrot.lane.b32.xlu0 %v389, 97
        %v2362 = vpop.permute.xlu0 %2361
        %v2363 = vsel %vm2338, %v2360, %v2362
        %v2367 = vsel %vm2338, %v2362, %v2360
        %s2368 = scalar_lea.vmem %s2, 172
        %v2369 = vld [vmem:[%s2368] sm:$0x3]
        %v2371 = vlaneseq
        %v2372 = vshrl.u32 %v2371, 7
        %v2373 = vsub.s32 0, %v2372
        %v2374 = vrot.slane %v2369, %v2373
        %v2375 = vlaneseq
        %v2376 = vshrl.u32 %v2375, 7
        %v2377 = vsub.s32 1, %v2376
        %v2378 = vrot.slane %v2369, %v2377
        %v2381 = vmul.f32 %v2363, %v2374
        %v2382 = vmul.f32 %v2367, %v2378
        %v2383 = vadd.f32 %v2357, %v2381
        %v2384 = vadd.f32 %v2358, %v2382
        %v2385 = vadd.f32 %v2332, %v2383
        %v2386 = vadd.f32 %v2333, %v2384
        %2387 = vrot.lane.b32.xlu0 %v386, 96
        %v2388 = vpop.permute.xlu0 %2387
        %2389 = vrot.lane.b32.xlu0 %v387, 96
        %v2390 = vpop.permute.xlu0 %2389
        %vm2391 = vcmask 785408
        %v2392 = vsel %vm2391, %v2388, %v2390
        %v2396 = vsel %vm2391, %v2390, %v2388
        %s2397 = scalar_lea.vmem %s2, 76
        %v2398 = vld [vmem:[%s2397] sm:$0x3]
        %v2400 = vlaneseq
        %v2401 = vshrl.u32 %v2400, 7
        %v2402 = vsub.s32 0, %v2401
        %v2403 = vrot.slane %v2398, %v2402
        %v2404 = vlaneseq
        %v2405 = vshrl.u32 %v2404, 7
        %v2406 = vsub.s32 1, %v2405
        %v2407 = vrot.slane %v2398, %v2406
        %v2410 = vmul.f32 %v2392, %v2403
        %v2411 = vmul.f32 %v2396, %v2407
        %2412 = vrot.lane.b32.xlu0 %v388, 96
        %v2413 = vpop.permute.xlu0 %2412
        %2414 = vrot.lane.b32.xlu0 %v389, 96
        %v2415 = vpop.permute.xlu0 %2414
        %v2416 = vsel %vm2391, %v2413, %v2415
        %v2420 = vsel %vm2391, %v2415, %v2413
        %s2421 = scalar_lea.vmem %s2, 174
        %v2422 = vld [vmem:[%s2421] sm:$0x3]
        %v2424 = vlaneseq
        %v2425 = vshrl.u32 %v2424, 7
        %v2426 = vsub.s32 0, %v2425
        %v2427 = vrot.slane %v2422, %v2426
        %v2428 = vlaneseq
        %v2429 = vshrl.u32 %v2428, 7
        %v2430 = vsub.s32 1, %v2429
        %v2431 = vrot.slane %v2422, %v2430
        %v2434 = vmul.f32 %v2416, %v2427
        %v2435 = vmul.f32 %v2420, %v2431
        %v2436 = vadd.f32 %v2410, %v2434
        %v2437 = vadd.f32 %v2411, %v2435
        %v2438 = vadd.f32 %v2385, %v2436
        %v2439 = vadd.f32 %v2386, %v2437
        %2440 = vrot.lane.b32.xlu0 %v386, 95
        %v2441 = vpop.permute.xlu0 %2440
        %2442 = vrot.lane.b32.xlu0 %v387, 95
        %v2443 = vpop.permute.xlu0 %2442
        %vm2444 = vcmask 777216
        %v2445 = vsel %vm2444, %v2441, %v2443
        %v2449 = vsel %vm2444, %v2443, %v2441
        %s2450 = scalar_lea.vmem %s2, 78
        %v2451 = vld [vmem:[%s2450] sm:$0x3]
        %v2453 = vlaneseq
        %v2454 = vshrl.u32 %v2453, 7
        %v2455 = vsub.s32 0, %v2454
        %v2456 = vrot.slane %v2451, %v2455
        %v2457 = vlaneseq
        %v2458 = vshrl.u32 %v2457, 7
        %v2459 = vsub.s32 1, %v2458
        %v2460 = vrot.slane %v2451, %v2459
        %v2463 = vmul.f32 %v2445, %v2456
        %v2464 = vmul.f32 %v2449, %v2460
        %2465 = vrot.lane.b32.xlu0 %v388, 95
        %v2466 = vpop.permute.xlu0 %2465
        %2467 = vrot.lane.b32.xlu0 %v389, 95
        %v2468 = vpop.permute.xlu0 %2467
        %v2469 = vsel %vm2444, %v2466, %v2468
        %v2473 = vsel %vm2444, %v2468, %v2466
        %s2474 = scalar_lea.vmem %s2, 176
        %v2475 = vld [vmem:[%s2474] sm:$0x3]
        %v2477 = vlaneseq
        %v2478 = vshrl.u32 %v2477, 7
        %v2479 = vsub.s32 0, %v2478
        %v2480 = vrot.slane %v2475, %v2479
        %v2481 = vlaneseq
        %v2482 = vshrl.u32 %v2481, 7
        %v2483 = vsub.s32 1, %v2482
        %v2484 = vrot.slane %v2475, %v2483
        %v2487 = vmul.f32 %v2469, %v2480
        %v2488 = vmul.f32 %v2473, %v2484
        %v2489 = vadd.f32 %v2463, %v2487
        %v2490 = vadd.f32 %v2464, %v2488
        %v2491 = vadd.f32 %v2438, %v2489
        %v2492 = vadd.f32 %v2439, %v2490
        %2493 = vrot.lane.b32.xlu0 %v386, 94
        %v2494 = vpop.permute.xlu0 %2493
        %2495 = vrot.lane.b32.xlu0 %v387, 94
        %v2496 = vpop.permute.xlu0 %2495
        %vm2497 = vcmask 769024
        %v2498 = vsel %vm2497, %v2494, %v2496
        %v2502 = vsel %vm2497, %v2496, %v2494
        %s2503 = scalar_lea.vmem %s2, 80
        %v2504 = vld [vmem:[%s2503] sm:$0x3]
        %v2506 = vlaneseq
        %v2507 = vshrl.u32 %v2506, 7
        %v2508 = vsub.s32 0, %v2507
        %v2509 = vrot.slane %v2504, %v2508
        %v2510 = vlaneseq
        %v2511 = vshrl.u32 %v2510, 7
        %v2512 = vsub.s32 1, %v2511
        %v2513 = vrot.slane %v2504, %v2512
        %v2516 = vmul.f32 %v2498, %v2509
        %v2517 = vmul.f32 %v2502, %v2513
        %2518 = vrot.lane.b32.xlu0 %v388, 94
        %v2519 = vpop.permute.xlu0 %2518
        %2520 = vrot.lane.b32.xlu0 %v389, 94
        %v2521 = vpop.permute.xlu0 %2520
        %v2522 = vsel %vm2497, %v2519, %v2521
        %v2526 = vsel %vm2497, %v2521, %v2519
        %s2527 = scalar_lea.vmem %s2, 178
        %v2528 = vld [vmem:[%s2527] sm:$0x3]
        %v2530 = vlaneseq
        %v2531 = vshrl.u32 %v2530, 7
        %v2532 = vsub.s32 0, %v2531
        %v2533 = vrot.slane %v2528, %v2532
        %v2534 = vlaneseq
        %v2535 = vshrl.u32 %v2534, 7
        %v2536 = vsub.s32 1, %v2535
        %v2537 = vrot.slane %v2528, %v2536
        %v2540 = vmul.f32 %v2522, %v2533
        %v2541 = vmul.f32 %v2526, %v2537
        %v2542 = vadd.f32 %v2516, %v2540
        %v2543 = vadd.f32 %v2517, %v2541
        %v2544 = vadd.f32 %v2491, %v2542
        %v2545 = vadd.f32 %v2492, %v2543
        %2546 = vrot.lane.b32.xlu0 %v386, 93
        %v2547 = vpop.permute.xlu0 %2546
        %2548 = vrot.lane.b32.xlu0 %v387, 93
        %v2549 = vpop.permute.xlu0 %2548
        %vm2550 = vcmask 760832
        %v2551 = vsel %vm2550, %v2547, %v2549
        %v2555 = vsel %vm2550, %v2549, %v2547
        %s2556 = scalar_lea.vmem %s2, 82
        %v2557 = vld [vmem:[%s2556] sm:$0x3]
        %v2559 = vlaneseq
        %v2560 = vshrl.u32 %v2559, 7
        %v2561 = vsub.s32 0, %v2560
        %v2562 = vrot.slane %v2557, %v2561
        %v2563 = vlaneseq
        %v2564 = vshrl.u32 %v2563, 7
        %v2565 = vsub.s32 1, %v2564
        %v2566 = vrot.slane %v2557, %v2565
        %v2569 = vmul.f32 %v2551, %v2562
        %v2570 = vmul.f32 %v2555, %v2566
        %2571 = vrot.lane.b32.xlu0 %v388, 93
        %v2572 = vpop.permute.xlu0 %2571
        %2573 = vrot.lane.b32.xlu0 %v389, 93
        %v2574 = vpop.permute.xlu0 %2573
        %v2575 = vsel %vm2550, %v2572, %v2574
        %v2579 = vsel %vm2550, %v2574, %v2572
        %s2580 = scalar_lea.vmem %s2, 180
        %v2581 = vld [vmem:[%s2580] sm:$0x3]
        %v2583 = vlaneseq
        %v2584 = vshrl.u32 %v2583, 7
        %v2585 = vsub.s32 0, %v2584
        %v2586 = vrot.slane %v2581, %v2585
        %v2587 = vlaneseq
        %v2588 = vshrl.u32 %v2587, 7
        %v2589 = vsub.s32 1, %v2588
        %v2590 = vrot.slane %v2581, %v2589
        %v2593 = vmul.f32 %v2575, %v2586
        %v2594 = vmul.f32 %v2579, %v2590
        %v2595 = vadd.f32 %v2569, %v2593
        %v2596 = vadd.f32 %v2570, %v2594
        %v2597 = vadd.f32 %v2544, %v2595
        %v2598 = vadd.f32 %v2545, %v2596
        %2599 = vrot.lane.b32.xlu0 %v386, 83
        %v2600 = vpop.permute.xlu0 %2599
        %2601 = vrot.lane.b32.xlu0 %v387, 83
        %v2602 = vpop.permute.xlu0 %2601
        %vm2603 = vcmask 678912
        %v2604 = vsel %vm2603, %v2600, %v2602
        %v2608 = vsel %vm2603, %v2602, %v2600
        %s2609 = scalar_lea.vmem %s2, 84
        %v2610 = vld [vmem:[%s2609] sm:$0x3]
        %v2612 = vlaneseq
        %v2613 = vshrl.u32 %v2612, 7
        %v2614 = vsub.s32 0, %v2613
        %v2615 = vrot.slane %v2610, %v2614
        %v2616 = vlaneseq
        %v2617 = vshrl.u32 %v2616, 7
        %v2618 = vsub.s32 1, %v2617
        %v2619 = vrot.slane %v2610, %v2618
        %v2622 = vmul.f32 %v2604, %v2615
        %v2623 = vmul.f32 %v2608, %v2619
        %2624 = vrot.lane.b32.xlu0 %v388, 83
        %v2625 = vpop.permute.xlu0 %2624
        %2626 = vrot.lane.b32.xlu0 %v389, 83
        %v2627 = vpop.permute.xlu0 %2626
        %v2628 = vsel %vm2603, %v2625, %v2627
        %v2632 = vsel %vm2603, %v2627, %v2625
        %s2633 = scalar_lea.vmem %s2, 182
        %v2634 = vld [vmem:[%s2633] sm:$0x3]
        %v2636 = vlaneseq
        %v2637 = vshrl.u32 %v2636, 7
        %v2638 = vsub.s32 0, %v2637
        %v2639 = vrot.slane %v2634, %v2638
        %v2640 = vlaneseq
        %v2641 = vshrl.u32 %v2640, 7
        %v2642 = vsub.s32 1, %v2641
        %v2643 = vrot.slane %v2634, %v2642
        %v2646 = vmul.f32 %v2628, %v2639
        %v2647 = vmul.f32 %v2632, %v2643
        %v2648 = vadd.f32 %v2622, %v2646
        %v2649 = vadd.f32 %v2623, %v2647
        %v2650 = vadd.f32 %v2597, %v2648
        %v2651 = vadd.f32 %v2598, %v2649
        %2652 = vrot.lane.b32.xlu0 %v386, 82
        %v2653 = vpop.permute.xlu0 %2652
        %2654 = vrot.lane.b32.xlu0 %v387, 82
        %v2655 = vpop.permute.xlu0 %2654
        %vm2656 = vcmask 670720
        %v2657 = vsel %vm2656, %v2653, %v2655
        %v2661 = vsel %vm2656, %v2655, %v2653
        %s2662 = scalar_lea.vmem %s2, 86
        %v2663 = vld [vmem:[%s2662] sm:$0x3]
        %v2665 = vlaneseq
        %v2666 = vshrl.u32 %v2665, 7
        %v2667 = vsub.s32 0, %v2666
        %v2668 = vrot.slane %v2663, %v2667
        %v2669 = vlaneseq
        %v2670 = vshrl.u32 %v2669, 7
        %v2671 = vsub.s32 1, %v2670
        %v2672 = vrot.slane %v2663, %v2671
        %v2675 = vmul.f32 %v2657, %v2668
        %v2676 = vmul.f32 %v2661, %v2672
        %2677 = vrot.lane.b32.xlu0 %v388, 82
        %v2678 = vpop.permute.xlu0 %2677
        %2679 = vrot.lane.b32.xlu0 %v389, 82
        %v2680 = vpop.permute.xlu0 %2679
        %v2681 = vsel %vm2656, %v2678, %v2680
        %v2685 = vsel %vm2656, %v2680, %v2678
        %s2686 = scalar_lea.vmem %s2, 184
        %v2687 = vld [vmem:[%s2686] sm:$0x3]
        %v2689 = vlaneseq
        %v2690 = vshrl.u32 %v2689, 7
        %v2691 = vsub.s32 0, %v2690
        %v2692 = vrot.slane %v2687, %v2691
        %v2693 = vlaneseq
        %v2694 = vshrl.u32 %v2693, 7
        %v2695 = vsub.s32 1, %v2694
        %v2696 = vrot.slane %v2687, %v2695
        %v2699 = vmul.f32 %v2681, %v2692
        %v2700 = vmul.f32 %v2685, %v2696
        %v2701 = vadd.f32 %v2675, %v2699
        %v2702 = vadd.f32 %v2676, %v2700
        %v2703 = vadd.f32 %v2650, %v2701
        %v2704 = vadd.f32 %v2651, %v2702
        %2705 = vrot.lane.b32.xlu0 %v386, 81
        %v2706 = vpop.permute.xlu0 %2705
        %2707 = vrot.lane.b32.xlu0 %v387, 81
        %v2708 = vpop.permute.xlu0 %2707
        %vm2709 = vcmask 662528
        %v2710 = vsel %vm2709, %v2706, %v2708
        %v2714 = vsel %vm2709, %v2708, %v2706
        %s2715 = scalar_lea.vmem %s2, 88
        %v2716 = vld [vmem:[%s2715] sm:$0x3]
        %v2718 = vlaneseq
        %v2719 = vshrl.u32 %v2718, 7
        %v2720 = vsub.s32 0, %v2719
        %v2721 = vrot.slane %v2716, %v2720
        %v2722 = vlaneseq
        %v2723 = vshrl.u32 %v2722, 7
        %v2724 = vsub.s32 1, %v2723
        %v2725 = vrot.slane %v2716, %v2724
        %v2728 = vmul.f32 %v2710, %v2721
        %v2729 = vmul.f32 %v2714, %v2725
        %2730 = vrot.lane.b32.xlu0 %v388, 81
        %v2731 = vpop.permute.xlu0 %2730
        %2732 = vrot.lane.b32.xlu0 %v389, 81
        %v2733 = vpop.permute.xlu0 %2732
        %v2734 = vsel %vm2709, %v2731, %v2733
        %v2738 = vsel %vm2709, %v2733, %v2731
        %s2739 = scalar_lea.vmem %s2, 186
        %v2740 = vld [vmem:[%s2739] sm:$0x3]
        %v2742 = vlaneseq
        %v2743 = vshrl.u32 %v2742, 7
        %v2744 = vsub.s32 0, %v2743
        %v2745 = vrot.slane %v2740, %v2744
        %v2746 = vlaneseq
        %v2747 = vshrl.u32 %v2746, 7
        %v2748 = vsub.s32 1, %v2747
        %v2749 = vrot.slane %v2740, %v2748
        %v2752 = vmul.f32 %v2734, %v2745
        %v2753 = vmul.f32 %v2738, %v2749
        %v2754 = vadd.f32 %v2728, %v2752
        %v2755 = vadd.f32 %v2729, %v2753
        %v2756 = vadd.f32 %v2703, %v2754
        %v2757 = vadd.f32 %v2704, %v2755
        %2758 = vrot.lane.b32.xlu0 %v386, 80
        %v2759 = vpop.permute.xlu0 %2758
        %2760 = vrot.lane.b32.xlu0 %v387, 80
        %v2761 = vpop.permute.xlu0 %2760
        %vm2762 = vcmask 654336
        %v2763 = vsel %vm2762, %v2759, %v2761
        %v2767 = vsel %vm2762, %v2761, %v2759
        %s2768 = scalar_lea.vmem %s2, 90
        %v2769 = vld [vmem:[%s2768] sm:$0x3]
        %v2771 = vlaneseq
        %v2772 = vshrl.u32 %v2771, 7
        %v2773 = vsub.s32 0, %v2772
        %v2774 = vrot.slane %v2769, %v2773
        %v2775 = vlaneseq
        %v2776 = vshrl.u32 %v2775, 7
        %v2777 = vsub.s32 1, %v2776
        %v2778 = vrot.slane %v2769, %v2777
        %v2781 = vmul.f32 %v2763, %v2774
        %v2782 = vmul.f32 %v2767, %v2778
        %2783 = vrot.lane.b32.xlu0 %v388, 80
        %v2784 = vpop.permute.xlu0 %2783
        %2785 = vrot.lane.b32.xlu0 %v389, 80
        %v2786 = vpop.permute.xlu0 %2785
        %v2787 = vsel %vm2762, %v2784, %v2786
        %v2791 = vsel %vm2762, %v2786, %v2784
        %s2792 = scalar_lea.vmem %s2, 188
        %v2793 = vld [vmem:[%s2792] sm:$0x3]
        %v2795 = vlaneseq
        %v2796 = vshrl.u32 %v2795, 7
        %v2797 = vsub.s32 0, %v2796
        %v2798 = vrot.slane %v2793, %v2797
        %v2799 = vlaneseq
        %v2800 = vshrl.u32 %v2799, 7
        %v2801 = vsub.s32 1, %v2800
        %v2802 = vrot.slane %v2793, %v2801
        %v2805 = vmul.f32 %v2787, %v2798
        %v2806 = vmul.f32 %v2791, %v2802
        %v2807 = vadd.f32 %v2781, %v2805
        %v2808 = vadd.f32 %v2782, %v2806
        %v2809 = vadd.f32 %v2756, %v2807
        %v2810 = vadd.f32 %v2757, %v2808
        %2811 = vrot.lane.b32.xlu0 %v386, 79
        %v2812 = vpop.permute.xlu0 %2811
        %2813 = vrot.lane.b32.xlu0 %v387, 79
        %v2814 = vpop.permute.xlu0 %2813
        %vm2815 = vcmask 646144
        %v2816 = vsel %vm2815, %v2812, %v2814
        %v2820 = vsel %vm2815, %v2814, %v2812
        %s2821 = scalar_lea.vmem %s2, 92
        %v2822 = vld [vmem:[%s2821] sm:$0x3]
        %v2824 = vlaneseq
        %v2825 = vshrl.u32 %v2824, 7
        %v2826 = vsub.s32 0, %v2825
        %v2827 = vrot.slane %v2822, %v2826
        %v2828 = vlaneseq
        %v2829 = vshrl.u32 %v2828, 7
        %v2830 = vsub.s32 1, %v2829
        %v2831 = vrot.slane %v2822, %v2830
        %v2834 = vmul.f32 %v2816, %v2827
        %v2835 = vmul.f32 %v2820, %v2831
        %2836 = vrot.lane.b32.xlu0 %v388, 79
        %v2837 = vpop.permute.xlu0 %2836
        %2838 = vrot.lane.b32.xlu0 %v389, 79
        %v2839 = vpop.permute.xlu0 %2838
        %v2840 = vsel %vm2815, %v2837, %v2839
        %v2844 = vsel %vm2815, %v2839, %v2837
        %s2845 = scalar_lea.vmem %s2, 190
        %v2846 = vld [vmem:[%s2845] sm:$0x3]
        %v2848 = vlaneseq
        %v2849 = vshrl.u32 %v2848, 7
        %v2850 = vsub.s32 0, %v2849
        %v2851 = vrot.slane %v2846, %v2850
        %v2852 = vlaneseq
        %v2853 = vshrl.u32 %v2852, 7
        %v2854 = vsub.s32 1, %v2853
        %v2855 = vrot.slane %v2846, %v2854
        %v2858 = vmul.f32 %v2840, %v2851
        %v2859 = vmul.f32 %v2844, %v2855
        %v2860 = vadd.f32 %v2834, %v2858
        %v2861 = vadd.f32 %v2835, %v2859
        %v2862 = vadd.f32 %v2809, %v2860
        %v2863 = vadd.f32 %v2810, %v2861
        %2864 = vrot.lane.b32.xlu0 %v386, 78
        %v2865 = vpop.permute.xlu0 %2864
        %2866 = vrot.lane.b32.xlu0 %v387, 78
        %v2867 = vpop.permute.xlu0 %2866
        %vm2868 = vcmask 637952
        %v2869 = vsel %vm2868, %v2865, %v2867
        %v2873 = vsel %vm2868, %v2867, %v2865
        %s2874 = scalar_lea.vmem %s2, 94
        %v2875 = vld [vmem:[%s2874] sm:$0x3]
        %v2877 = vlaneseq
        %v2878 = vshrl.u32 %v2877, 7
        %v2879 = vsub.s32 0, %v2878
        %v2880 = vrot.slane %v2875, %v2879
        %v2881 = vlaneseq
        %v2882 = vshrl.u32 %v2881, 7
        %v2883 = vsub.s32 1, %v2882
        %v2884 = vrot.slane %v2875, %v2883
        %v2887 = vmul.f32 %v2869, %v2880
        %v2888 = vmul.f32 %v2873, %v2884
        %2889 = vrot.lane.b32.xlu0 %v388, 78
        %v2890 = vpop.permute.xlu0 %2889
        %2891 = vrot.lane.b32.xlu0 %v389, 78
        %v2892 = vpop.permute.xlu0 %2891
        %v2893 = vsel %vm2868, %v2890, %v2892
        %v2897 = vsel %vm2868, %v2892, %v2890
        %s2898 = scalar_lea.vmem %s2, 192
        %v2899 = vld [vmem:[%s2898] sm:$0x3]
        %v2901 = vlaneseq
        %v2902 = vshrl.u32 %v2901, 7
        %v2903 = vsub.s32 0, %v2902
        %v2904 = vrot.slane %v2899, %v2903
        %v2905 = vlaneseq
        %v2906 = vshrl.u32 %v2905, 7
        %v2907 = vsub.s32 1, %v2906
        %v2908 = vrot.slane %v2899, %v2907
        %v2911 = vmul.f32 %v2893, %v2904
        %v2912 = vmul.f32 %v2897, %v2908
        %v2913 = vadd.f32 %v2887, %v2911
        %v2914 = vadd.f32 %v2888, %v2912
        %v2915 = vadd.f32 %v2862, %v2913
        %v2916 = vadd.f32 %v2863, %v2914
        %2917 = vrot.lane.b32.xlu0 %v386, 77
        %v2918 = vpop.permute.xlu0 %2917
        %2919 = vrot.lane.b32.xlu0 %v387, 77
        %v2920 = vpop.permute.xlu0 %2919
        %vm2921 = vcmask 629760
        %v2922 = vsel %vm2921, %v2918, %v2920
        %v2926 = vsel %vm2921, %v2920, %v2918
        %s2927 = scalar_lea.vmem %s2, 96
        %v2928 = vld [vmem:[%s2927] sm:$0x3]
        %v2930 = vlaneseq
        %v2931 = vshrl.u32 %v2930, 7
        %v2932 = vsub.s32 0, %v2931
        %v2933 = vrot.slane %v2928, %v2932
        %v2934 = vlaneseq
        %v2935 = vshrl.u32 %v2934, 7
        %v2936 = vsub.s32 1, %v2935
        %v2937 = vrot.slane %v2928, %v2936
        %v2940 = vmul.f32 %v2922, %v2933
        %v2941 = vmul.f32 %v2926, %v2937
        %2942 = vrot.lane.b32.xlu0 %v388, 77
        %v2943 = vpop.permute.xlu0 %2942
        %2944 = vrot.lane.b32.xlu0 %v389, 77
        %v2945 = vpop.permute.xlu0 %2944
        %v2946 = vsel %vm2921, %v2943, %v2945
        %v2950 = vsel %vm2921, %v2945, %v2943
        %s2951 = scalar_lea.vmem %s2, 194
        %v2952 = vld [vmem:[%s2951] sm:$0x3]
        %v2954 = vlaneseq
        %v2955 = vshrl.u32 %v2954, 7
        %v2956 = vsub.s32 0, %v2955
        %v2957 = vrot.slane %v2952, %v2956
        %v2958 = vlaneseq
        %v2959 = vshrl.u32 %v2958, 7
        %v2960 = vsub.s32 1, %v2959
        %v2961 = vrot.slane %v2952, %v2960
        %v2964 = vmul.f32 %v2946, %v2957
        %v2965 = vmul.f32 %v2950, %v2961
        %v2966 = vadd.f32 %v2940, %v2964
        %v2967 = vadd.f32 %v2941, %v2965
        %v2968 = vadd.f32 %v2915, %v2966
        %v2969 = vadd.f32 %v2916, %v2967
        %v2970 = vstv %s230
        %v2971 = vmul.f32 %v2968, %v2970
        %v2972 = vmul.f32 %v2969, %v2970
        %v2973 = vstv %s231
        %v2974 = vadd.f32 %v2971, %v2973
        %v2975 = vadd.f32 %v2972, %v2973
        %v2976 = vmax.f32 %v2974, 0.0
        %v2977 = vmax.f32 %v2975, 0.0
        %v2978 = vxor.u32 %v2976, 2147483648
        %v2979 = vxor.u32 %v2977, 2147483648
        %v2980 = vmul.f32 %v2978, 1.442695
        %v2981 = vpow.pop %v2980
        %v2982 = vmul.f32 %v2979, 1.442695
        %v2983 = vpow.pop %v2982
        %v2984 = vadd.f32 %v2981, 1.0
        %v2985 = vadd.f32 %v2983, 1.0
        %v2986 = vrcp.pop %v2984
        %v2987 = vmul.f32 1.0, %v2986
        %v2988 = vrcp.pop %v2985
        %v2989 = vmul.f32 1.0, %v2988
        %v2990 = vlaneseq
        %v2991 = vshrl.u32 %v2990, 7
        %v2992 = vsub.s32 0, %v2991
        %v2993 = vrot.slane %v2987, %v2992
        %v2994 = vlaneseq
        %v2995 = vshrl.u32 %v2994, 7
        %v2996 = vsub.s32 0, %v2995
        %v2997 = vrot.slane %v2989, %v2996
        %v2998 = vmul.f32 %v324, %v2993
        %v2999 = vmul.f32 %v325, %v2997
        %v3000 = vlaneseq
        %v3001 = vshrl.u32 %v3000, 7
        %v3002 = vsub.s32 1, %v3001
        %v3003 = vrot.slane %v2987, %v3002
        %v3004 = vlaneseq
        %v3005 = vshrl.u32 %v3004, 7
        %v3006 = vsub.s32 1, %v3005
        %v3007 = vrot.slane %v2989, %v3006
        %v3008 = vmul.f32 %v326, %v3003
        %v3009 = vmul.f32 %v327, %v3007
        %v3010 = vadd.f32 %v2998, %v3008
        %v3011 = vadd.f32 %v2999, %v3009
        %v3012 = vadd.f32 %v3010, %v225
        %v3013 = vadd.f32 %v3011, %v226
        %v3014 = vmax.f32 %v3012, 0.0
        %v3015 = vmax.f32 %v3013, 0.0
        %3016 = vst [vmem:[%s224] sm:$0xff] %v3014
        %3017 = vst [vmem:[%s224 + $0x8] sm:$0xff] %v3015
        %p3018 = scmp.lt.s32.totalorder %s17, 1
        %s3019 = scalar_select %p3018, %s17, 1
        %s3020 = smul.addr %s3019, 2
        %s3021 = smul.addr %s3020, 8
        %s3022 = scalar_lea.vmem %s4, %s3021
        // Predicated region
        $region45: #{fwd.1} parent=35 // pred_check
          %p3023 = pneg %p124
        $region46: #{fwd.1} parent=35 // pred_check_branch
          %3025 = sbr.rel (%p3023) target = $region48
        $region47: #{fwd.1} parent=35 // pred_region
          _
        $region48: #{fwd.1} parent=35 // pred_fallthru
          _
      $region36: #{fwd.1} parent=5 // pred_fallthru
        _
      %p3026 = scmp.le.s32.totalorder 2, %s12
      // Predicated region
      $region49: #{fwd.1} parent=5 // pred_check
        %p3027 = pneg %p3026
      $region50: #{fwd.1} parent=5 // pred_check_branch
        %3029 = sbr.rel (%p3027) target = $region52
      $region51: #{fwd.1} parent=5 // pred_region
        %s3030 = ssub.s32 %s12, 2
        // Predicated region
        $region53: #{fwd.1} parent=51 // pred_check
          %p3031 = pneg %p130
        $region54: #{fwd.1} parent=51 // pred_check_branch
          %3033 = sbr.rel (%p3031) target = $region56
        $region55: #{fwd.1} parent=51 // pred_region
          %p3034 = scmp.lt.s32.totalorder %s18, 1
          %s3035 = scalar_select %p3034, %s18, 1
          %s3036 = smul.addr %s3035, 2
          %s3037 = smul.addr %s3036, 8
          %s3038 = scalar_lea.vmem %s4, %s3037
        $region56: #{fwd.1} parent=51 // pred_fallthru
          _
      $region52: #{fwd.1} parent=5 // pred_fallthru
        _
    $region6: #{fwd.1} parent=1 // loop_footer
      %s16 = sadd.s32 1, %s12
    $region7: #{fwd.1} parent=1 // loop_footer_branch
      %11 = sbr.rel target = $region3
    $region8: #{fwd.1} parent=1 // loop_exit
      _
    %3039 = vsyncpa [#allocation3], 1
    %s3040 = scalar_lea.sflag [#allocation3], 1
    %3041 = vsyncpa %s3040, 1
    %3042 = vsyncpa [#allocation5], 1

</llo_original>
